<compile_context>
chip_gen: v7x
topology: tpu7x:2x2x1
jax: 0.10.0
libtpu: 0.0.40
codegen_flags: <defaults>
</compile_context>

<pallas_src>
import functools

import jax
import jax.numpy as jnp
from jax.experimental import pallas as pl
from jax.experimental.pallas import tpu as pltpu


def _round_up(x, m):
    return (x + m - 1) // m * m


def _pick_tile_b(B, max_tile=2048):
    """Batch tile: large (amortize per-step overhead), multiple of 128 (lane
    constraint on the (1, tile_b) output block), and >=2 grid steps when B
    allows so v7x's second TensorCore gets work."""
    if B <= 128:
        return B  # one block covering the whole (tiny) batch
    two_step = _round_up(pl.cdiv(B, 2), 128)
    return min(max_tile, two_step)


def _critic_kernel(x_ref, w1_ref, b1_ref, w2_ref, b2_ref, w3_ref, b3_ref, out_ref):
    # x_ref:   (TB, D_in)  state tile, streamed in its original f32
    # w1_ref:  (D_in, F1), b1_ref: (1, F1)
    # w2_ref:  (F1, F2),   b2_ref: (1, F2)
    # w3_ref:  (1, F2)     final-layer weight as a row (f32)
    # b3_ref:  (1, 1)      scalar bias in SMEM
    # out_ref: (1, TB)     lane-dense output row for this batch tile

    # Cast the streamed state to the matmul dtype *inside* the kernel (VPU work
    # that hides under the MXU) so HBM only ever streams the f32 state once.
    x = x_ref[...].astype(w1_ref.dtype)

    # fc1 + ReLU  (MXU matmul, f32 accumulate; bias/ReLU in f32 on the VPU)
    h1 = jnp.dot(x, w1_ref[...], preferred_element_type=jnp.float32) + b1_ref[...]
    h1 = jnp.maximum(h1, 0.0).astype(w2_ref.dtype)

    # fc2 + ReLU
    h2 = jnp.dot(h1, w2_ref[...], preferred_element_type=jnp.float32) + b2_ref[...]
    h2 = jnp.maximum(h2, 0.0)

    # fc3 (F2 -> 1): elementwise multiply + lane reduction (XLU), deliberately
    # NOT an N=1 matmul (which would burn an MXU pass at ~1/256 utilization).
    v = jnp.sum(h2 * w3_ref[...], axis=-1, keepdims=True) + b3_ref[0, 0]  # (TB, 1)

    # Lane-dense store: (TB, 1) -> (1, TB) relayout goes through the XLU,
    # which has slack here; output row gets unmasked full-lane stores.
    out_ref[...] = jnp.reshape(v, (1, v.shape[0])).astype(out_ref.dtype)


@functools.partial(jax.jit, static_argnames=("tile_b", "compute_dtype"))
def critic_forward(state, params, *, tile_b=None, compute_dtype=jnp.bfloat16):
    """state: (B, input_dims) f32  ->  value: (B, 1) f32."""
    w1, b1, w2, b2, w3, b3 = params
    B, D_in = state.shape
    F1 = w1.shape[1]
    F2 = w2.shape[1]

    if tile_b is None:
        tile_b = _pick_tile_b(B)

    # One-time casts of the resident matmul weights; biases / w3 / accumulation
    # stay f32 (also correct on v5e, whose VPU has no bf16).
    w1_c = w1.astype(compute_dtype)
    w2_c = w2.astype(compute_dtype)

    grid = (pl.cdiv(B, tile_b),)

    flops = 2 * B * (D_in * F1 + F1 * F2 + F2)
    bytes_accessed = (
        B * D_in * state.dtype.itemsize            # streamed state
        + D_in * F1 * w1_c.dtype.itemsize          # resident weights (fetched once)
        + F1 * F2 * w2_c.dtype.itemsize
        + (F1 + F2 + F2 + 1) * 4                   # b1, b2, w3, b3
        + B * 4                                    # output values
    )

    out_row = pl.pallas_call(
        _critic_kernel,
        out_shape=jax.ShapeDtypeStruct((1, B), jnp.float32),
        grid_spec=pltpu.PrefetchScalarGridSpec(
            num_scalar_prefetch=0,
            grid=grid,
            in_specs=[
                # state tile: last dim equals full array dim -> no lane padding needed
                pl.BlockSpec((tile_b, D_in), lambda i: (i, 0)),
                pl.BlockSpec((D_in, F1), lambda i: (0, 0)),        # w1 (resident)
                pl.BlockSpec((1, F1), lambda i: (0, 0)),            # b1
                pl.BlockSpec((F1, F2), lambda i: (0, 0)),           # w2 (resident)
                pl.BlockSpec((1, F2), lambda i: (0, 0)),            # b2
                pl.BlockSpec((1, F2), lambda i: (0, 0)),            # w3 (row form)
                pl.BlockSpec(memory_space=pltpu.MemorySpace.SMEM),  # b3 scalar
            ],
            out_specs=pl.BlockSpec((1, tile_b), lambda i: (0, i)),  # lane-dense row
        ),
        compiler_params=pltpu.CompilerParams(
            dimension_semantics=("parallel",),  # batch tiles split across TCs (v7x)
        ),
        cost_estimate=pl.CostEstimate(
            flops=flops, transcendentals=0, bytes_accessed=bytes_accessed
        ),
    )(state, w1_c, b1, w2_c, b2, w3, b3)

    # Back to the public (B, 1) contract.
    return out_row.reshape(B, 1)


def init_params(key, input_dims, fc1_dims=256, fc2_dims=256):
    """Init mimicking torch.nn.Linear default (U[-1/sqrt(fan_in), 1/sqrt(fan_in)]).

    w1/w2 are stored transposed vs. PyTorch, i.e. (in_features, out_features);
    w3 is the final layer's (1, fc2_dims) weight row.
    """
    ks = jax.random.split(key, 6)

    def uniform(k, shape, fan_in):
        bound = 1.0 / jnp.sqrt(float(fan_in))
        return jax.random.uniform(k, shape, jnp.float32, -bound, bound)

    w1 = uniform(ks[0], (input_dims, fc1_dims), input_dims)
    b1 = uniform(ks[1], (1, fc1_dims), input_dims)
    w2 = uniform(ks[2], (fc1_dims, fc2_dims), fc1_dims)
    b2 = uniform(ks[3], (1, fc2_dims), fc1_dims)
    w3 = uniform(ks[4], (1, fc2_dims), fc2_dims)
    b3 = uniform(ks[5], (1, 1), fc2_dims)
    return (w1, b1, w2, b2, w3, b3)


def reference_forward(state, params):
    w1, b1, w2, b2, w3, b3 = params
    h1 = jnp.maximum(state @ w1 + b1, 0.0)
    h2 = jnp.maximum(h1 @ w2 + b2, 0.0)
    return jnp.sum(h2 * w3, axis=-1, keepdims=True) + b3[0, 0]


if __name__ == "__main__":
    key = jax.random.PRNGKey(0)
    k_state, k_params = jax.random.split(key)

    batch = 300          # NOT a multiple of the tile -> exercises boundary masking
    input_dims = 32      # streamed at its natural width (no 32->128 padding)
    fc1_dims = 256
    fc2_dims = 256

    state = jax.random.normal(k_state, (batch, input_dims), jnp.float32)
    params = init_params(k_params, input_dims, fc1_dims, fc2_dims)

    ref = reference_forward(state, params)

    # Exact f32 path (tight tolerance vs. the pure-JAX reference).
    value_f32 = jax.block_until_ready(
        critic_forward(state, params, compute_dtype=jnp.float32)
    )
    assert value_f32.shape == (batch, 1), value_f32.shape
    err32 = float(jnp.max(jnp.abs(value_f32 - ref)))
    assert jnp.allclose(value_f32, ref, atol=1e-3, rtol=1e-3), f"f32 mismatch: {err32}"

    # Default bf16 matmul-operand path (f32 accumulate) -> looser tolerance.
    value_bf16 = jax.block_until_ready(critic_forward(state, params))
    assert value_bf16.shape == (batch, 1), value_bf16.shape
    errbf = float(jnp.max(jnp.abs(value_bf16 - ref)))
    assert jnp.allclose(value_bf16, ref, atol=1e-1, rtol=5e-2), f"bf16 mismatch: {errbf}"

    print("KERNEL_OK")
</pallas_src>

<mosaic_0001>
module attributes {stable_mosaic.version = 11 : i64} {
  func.func @_critic_kernel(%arg0: i32, %arg1: memref<256x32xf32, #tpu.memory_space<vmem>>, %arg2: memref<32x256xf32, #tpu.memory_space<vmem>>, %arg3: memref<1x256xf32, #tpu.memory_space<vmem>>, %arg4: memref<256x256xf32, #tpu.memory_space<vmem>>, %arg5: memref<1x256xf32, #tpu.memory_space<vmem>>, %arg6: memref<1x256xf32, #tpu.memory_space<vmem>>, %arg7: memref<1x1xf32, #tpu.memory_space<smem>>, %arg8: memref<1x256xf32, #tpu.memory_space<vmem>>) attributes {dimension_semantics = [#tpu.dimension_semantics<parallel>], iteration_bounds = array<i64: 2>, scalar_prefetch = 0 : i64, scratch_operands = 0 : i64, tpu.core_type = #tpu.core_type<tc>, window_params = [{transform_indices = @transform_0, window_bounds = array<i64: 256, 32>}, {pipeline_mode = #tpu.pipeline_mode<synchronous>, transform_indices = @transform_1, window_bounds = array<i64: 32, 256>}, {pipeline_mode = #tpu.pipeline_mode<synchronous>, transform_indices = @transform_2, window_bounds = array<i64: 1, 256>}, {pipeline_mode = #tpu.pipeline_mode<synchronous>, transform_indices = @transform_3, window_bounds = array<i64: 256, 256>}, {pipeline_mode = #tpu.pipeline_mode<synchronous>, transform_indices = @transform_4, window_bounds = array<i64: 1, 256>}, {pipeline_mode = #tpu.pipeline_mode<synchronous>, transform_indices = @transform_5, window_bounds = array<i64: 1, 256>}, {transform_indices = @transform_6, window_bounds = array<i64: 1, 1>}, {transform_indices = @transform_7, window_bounds = array<i64: 1, 256>}]} {
    %c0 = arith.constant 0 : index
    %c0_0 = arith.constant 0 : index
    %0 = vector.load %arg1[%c0, %c0_0] : memref<256x32xf32, #tpu.memory_space<vmem>>, vector<256x32xf32>
    %c0_1 = arith.constant 0 : index
    %c0_2 = arith.constant 0 : index
    %1 = vector.load %arg2[%c0_1, %c0_2] : memref<32x256xf32, #tpu.memory_space<vmem>>, vector<32x256xf32>
    %cst = arith.constant dense<0.000000e+00> : vector<256x256xf32>
    %2 = tpu.matmul %0, %1, %cst {dimension_numbers = #tpu.dot_dimension_numbers<[1], [0], [0], [1], [0, 0, 1, 1], [], []>} : vector<256x32xf32>, vector<32x256xf32>, vector<256x256xf32> -> vector<256x256xf32>
    %c0_3 = arith.constant 0 : index
    %c0_4 = arith.constant 0 : index
    %3 = vector.load %arg3[%c0_3, %c0_4] : memref<1x256xf32, #tpu.memory_space<vmem>>, vector<1x256xf32>
    %4 = vector.broadcast %3 : vector<1x256xf32> to vector<256x256xf32>
    %5 = arith.addf %2, %4 : vector<256x256xf32>
    %cst_5 = arith.constant 0.000000e+00 : f32
    %6 = vector.broadcast %cst_5 : f32 to vector<256x256xf32>
    %7 = arith.maximumf %5, %6 : vector<256x256xf32>
    %c0_6 = arith.constant 0 : index
    %c0_7 = arith.constant 0 : index
    %8 = vector.load %arg4[%c0_6, %c0_7] : memref<256x256xf32, #tpu.memory_space<vmem>>, vector<256x256xf32>
    %cst_8 = arith.constant dense<0.000000e+00> : vector<256x256xf32>
    %9 = tpu.matmul %7, %8, %cst_8 {dimension_numbers = #tpu.dot_dimension_numbers<[1], [0], [0], [1], [0, 0, 1, 1], [], []>} : vector<256x256xf32>, vector<256x256xf32>, vector<256x256xf32> -> vector<256x256xf32>
    %c0_9 = arith.constant 0 : index
    %c0_10 = arith.constant 0 : index
    %10 = vector.load %arg5[%c0_9, %c0_10] : memref<1x256xf32, #tpu.memory_space<vmem>>, vector<1x256xf32>
    %11 = vector.broadcast %10 : vector<1x256xf32> to vector<256x256xf32>
    %12 = arith.addf %9, %11 : vector<256x256xf32>
    %cst_11 = arith.constant 0.000000e+00 : f32
    %13 = vector.broadcast %cst_11 : f32 to vector<256x256xf32>
    %14 = arith.maximumf %12, %13 : vector<256x256xf32>
    %c0_12 = arith.constant 0 : index
    %c0_13 = arith.constant 0 : index
    %15 = vector.load %arg6[%c0_12, %c0_13] : memref<1x256xf32, #tpu.memory_space<vmem>>, vector<1x256xf32>
    %16 = vector.broadcast %15 : vector<1x256xf32> to vector<256x256xf32>
    %17 = arith.mulf %14, %16 : vector<256x256xf32>
    %cst_14 = arith.constant dense<0.000000e+00> : vector<256xf32>
    %18 = vector.multi_reduction <add>, %17, %cst_14 [1] : vector<256x256xf32> to vector<256xf32>
    %19 = vector.shape_cast %18 : vector<256xf32> to vector<256x1xf32>
    %c0_15 = arith.constant 0 : index
    %c0_16 = arith.constant 0 : index
    %20 = memref.load %arg7[%c0_15, %c0_16] : memref<1x1xf32, #tpu.memory_space<smem>>
    %21 = vector.broadcast %20 : f32 to vector<256x1xf32>
    %22 = arith.addf %19, %21 : vector<256x1xf32>
    %23 = vector.shape_cast %22 : vector<256x1xf32> to vector<1x256xf32>
    %c0_17 = arith.constant 0 : index
    %c0_18 = arith.constant 0 : index
    %24 = vector.load %arg8[%c0_17, %c0_18] : memref<1x256xf32, #tpu.memory_space<vmem>>, vector<1x256xf32>
    tpu.vector_store %arg8[%c0_17, %c0_18], %23 {strides = array<i32>} : memref<1x256xf32, #tpu.memory_space<vmem>>, vector<1x256xf32>,
    return
  }
  func.func @transform_0(%arg0: i32) -> (i32, i32) {
    %c0_i32 = arith.constant 0 : i32
    %c0_i32_0 = arith.constant 0 : i32
    return %arg0, %c0_i32 : i32, i32
  }
  func.func @transform_1(%arg0: i32) -> (i32, i32) {
    %c0_i32 = arith.constant 0 : i32
    %c0_i32_0 = arith.constant 0 : i32
    %c0_i32_1 = arith.constant 0 : i32
    return %c0_i32, %c0_i32_0 : i32, i32
  }
  func.func @transform_2(%arg0: i32) -> (i32, i32) {
    %c0_i32 = arith.constant 0 : i32
    %c0_i32_0 = arith.constant 0 : i32
    %c0_i32_1 = arith.constant 0 : i32
    return %c0_i32, %c0_i32_0 : i32, i32
  }
  func.func @transform_3(%arg0: i32) -> (i32, i32) {
    %c0_i32 = arith.constant 0 : i32
    %c0_i32_0 = arith.constant 0 : i32
    %c0_i32_1 = arith.constant 0 : i32
    return %c0_i32, %c0_i32_0 : i32, i32
  }
  func.func @transform_4(%arg0: i32) -> (i32, i32) {
    %c0_i32 = arith.constant 0 : i32
    %c0_i32_0 = arith.constant 0 : i32
    %c0_i32_1 = arith.constant 0 : i32
    return %c0_i32, %c0_i32_0 : i32, i32
  }
  func.func @transform_5(%arg0: i32) -> (i32, i32) {
    %c0_i32 = arith.constant 0 : i32
    %c0_i32_0 = arith.constant 0 : i32
    %c0_i32_1 = arith.constant 0 : i32
    return %c0_i32, %c0_i32_0 : i32, i32
  }
  func.func @transform_6(%arg0: i32) -> (i32, i32) {
    %c0_i32 = arith.constant 0 : i32
    %c0_i32_0 = arith.constant 0 : i32
    %c0_i32_1 = arith.constant 0 : i32
    return %c0_i32, %c0_i32_0 : i32, i32
  }
  func.func @transform_7(%arg0: i32) -> (i32, i32) {
    %c0_i32 = arith.constant 0 : i32
    %c0_i32_0 = arith.constant 0 : i32
    return %c0_i32, %arg0 : i32, i32
  }
}

</mosaic_0001>

<llo_original>
// kernel: critic_forward.1
$region0: #{critic_forward.1}
  #allocation0 [shape = 'u32[]', space=smem, size = 0x4, offset = 0x4, fixed_abs, tag = 'smem constant byte address 0x4 - core index']
  #allocation1 [shape = 'u32[144,128]{1,0:T(1,128)}', space=vmem, size = 0x12000, scoped, tag = 'internal scratch']
  #allocation2 [shape = 'f32[1,1]{1,0:T(1,128)S(6)}', space=smem, size = 0x200, scoped, tag = 'scoped memory for critic_forward.1']
  %s0 = inlined_call_operand.vmem [shape: f32[300,32], index: 0, kind: input, shape index: {}]
  %s1 = inlined_call_operand.vmem [shape: f32[32,256], index: 1, kind: input, shape index: {}]
  %s2 = inlined_call_operand.vmem [shape: f32[1,256], index: 2, kind: input, shape index: {}]
  %s3 = inlined_call_operand.hbm [shape: f32[256,256], index: 3, kind: input, shape index: {}]
  %s4 = inlined_call_operand.vmem [shape: f32[1,256], index: 4, kind: input, shape index: {}]
  %s5 = inlined_call_operand.vmem [shape: f32[1,256], index: 5, kind: input, shape index: {}]
  %s6 = inlined_call_operand.<no memory space> [shape: f32[1,1], index: 6, kind: input, shape index: {}]
  %s7 = inlined_call_operand.hbm [shape: f32[1,300], index: 7, kind: output, shape index: {}]
  %s8 = sld [smem:[#allocation0]]
  $region65: #{critic_forward.1} parent=0
    _
  %s10 = ssub.s32 1, %s8
  %s11 = scalar_select 0, %s10, %s8
  %12 = sst [smem:[#allocation2]] %s6
  $region1: #{critic_forward.1} parent=0
    #allocation3 [shape = 'u8[262144]{0}', space=vmem, size = 0x40000, scoped, tag = 'input window, operand 3, single buffered']
    #allocation4 [shape = 's32[2]{0}', space=sflag, size = 0x8, scoped, tag = 'scoped memory for critic_forward.1']
    #allocation5 [shape = 's32[2]{0}', space=sflag, size = 0x8, scoped, tag = 'scoped memory for critic_forward.1']
    #allocation6 [shape = 'u8[2048]{0}', space=vmem, size = 0x800, scoped, tag = 'output window, operand 0']
    %13 = vsyncpa [#allocation4], 0
    %14 = vsyncpa [#allocation5], 0
    %s15 = scalar_lea.sflag [#allocation5], 1
    %16 = vsyncpa %s15, 0
    loop: start=0, step=1, limit=4
    $region2: #{critic_forward.1} parent=1 // loop_pre_header
      _
    $region3: #{critic_forward.1} parent=1 // loop_header
      %s18 = sphi 0, %s22
      %p19 = scmp.ge.s32.totalorder %s18, 4
      %s28 = sphi 0, %s30
      %s31 = sphi 0, %s28
      %s32 = sphi 0, %s31
      %s48 = sphi 0, %s32
      %s52 = sphi 0, %s52
      %s54 = sphi 0, %s52
      %s55 = sphi 0, %s54
      %s69 = sphi 0, %s55
      %s73 = sphi 0, %s73
      %s75 = sphi 0, %s73
      %s76 = sphi 0, %s75
      %s90 = sphi 0, %s76
      %s94 = sphi 0, %s94
      %s96 = sphi 0, %s94
      %s97 = sphi 0, %s96
      %s111 = sphi 0, %s97
      %s115 = sphi 0, %s115
      %s117 = sphi 0, %s115
      %s118 = sphi 0, %s117
      %s132 = sphi 0, %s118
      %s136 = sphi 0, %s136
      %s138 = sphi 0, %s136
      %s139 = sphi 0, %s138
      %s153 = sphi 0, %s139
      %s157 = sphi 0, %s157
      %s159 = sphi 0, %s157
      %s160 = sphi 0, %s159
      %s174 = sphi 0, %s160
      %s180 = sphi 0, %s182
      %s183 = sphi 0, %s180
      %s184 = sphi 0, %s183
      %s200 = sphi 0, %s184
    $region4: #{critic_forward.1} parent=1 // loop_header_branch
      %21 = sbr.rel (%p19) target = $region8
    $region5: #{critic_forward.1} parent=1 // loop_body
      %s23 = ssub.s32 %s18, 1
      %s24 = ssub.s32 %s18, 2
      %s25 = sadd.s32 %s18, 1
      %s26 = ssub.s32 %s18, %s25
      %p27 = scmp.eq.s32.totalorder %s26, 0
      %s29 = sadd.s32 %s28, 1
      %s30 = scalar_select %p27, %s28, %s29
      %p33 = pneg %p27
      %p34 = scmp.eq.s32.totalorder %s18, 1
      %p35 = por %p33, %p34
      %p36 = scmp.ne.s32.totalorder %s28, %s31
      %p37 = scmp.eq.s32.totalorder %s18, 0
      %p38 = por %p36, %p37
      %p39 = scmp.ne.s32.totalorder %s28, %s31
      %p40 = scmp.eq.s32.totalorder %s23, 1
      %p41 = por %p39, %p40
      %p42 = scmp.ne.s32.totalorder %s31, %s32
      %p43 = scmp.eq.s32.totalorder %s23, 0
      %p44 = por %p42, %p43
      %p45 = scmp.ne.s32.totalorder %s31, %s32
      %p46 = scmp.eq.s32.totalorder %s24, 1
      %p47 = por %p45, %p46
      %p49 = scmp.ne.s32.totalorder %s32, %s48
      %p50 = scmp.eq.s32.totalorder %s24, 0
      %p51 = por %p49, %p50
      %s53 = sadd.s32 %s52, 1
      %p56 = scmp.eq.s32.totalorder %s18, 1
      %p57 = scmp.ne.s32.totalorder %s52, %s54
      %p58 = scmp.eq.s32.totalorder %s18, 0
      %p59 = por %p57, %p58
      %p60 = scmp.ne.s32.totalorder %s52, %s54
      %p61 = scmp.eq.s32.totalorder %s23, 1
      %p62 = por %p60, %p61
      %p63 = scmp.ne.s32.totalorder %s54, %s55
      %p64 = scmp.eq.s32.totalorder %s23, 0
      %p65 = por %p63, %p64
      %p66 = scmp.ne.s32.totalorder %s54, %s55
      %p67 = scmp.eq.s32.totalorder %s24, 1
      %p68 = por %p66, %p67
      %p70 = scmp.ne.s32.totalorder %s55, %s69
      %p71 = scmp.eq.s32.totalorder %s24, 0
      %p72 = por %p70, %p71
      %s74 = sadd.s32 %s73, 1
      %p77 = scmp.eq.s32.totalorder %s18, 1
      %p78 = scmp.ne.s32.totalorder %s73, %s75
      %p79 = scmp.eq.s32.totalorder %s18, 0
      %p80 = por %p78, %p79
      %p81 = scmp.ne.s32.totalorder %s73, %s75
      %p82 = scmp.eq.s32.totalorder %s23, 1
      %p83 = por %p81, %p82
      %p84 = scmp.ne.s32.totalorder %s75, %s76
      %p85 = scmp.eq.s32.totalorder %s23, 0
      %p86 = por %p84, %p85
      %p87 = scmp.ne.s32.totalorder %s75, %s76
      %p88 = scmp.eq.s32.totalorder %s24, 1
      %p89 = por %p87, %p88
      %p91 = scmp.ne.s32.totalorder %s76, %s90
      %p92 = scmp.eq.s32.totalorder %s24, 0
      %p93 = por %p91, %p92
      %s95 = sadd.s32 %s94, 1
      %p98 = scmp.eq.s32.totalorder %s18, 1
      %p99 = scmp.ne.s32.totalorder %s94, %s96
      %p100 = scmp.eq.s32.totalorder %s18, 0
      %p101 = por %p99, %p100
      %p102 = scmp.ne.s32.totalorder %s94, %s96
      %p103 = scmp.eq.s32.totalorder %s23, 1
      %p104 = por %p102, %p103
      %p105 = scmp.ne.s32.totalorder %s96, %s97
      %p106 = scmp.eq.s32.totalorder %s23, 0
      %p107 = por %p105, %p106
      %p108 = scmp.ne.s32.totalorder %s96, %s97
      %p109 = scmp.eq.s32.totalorder %s24, 1
      %p110 = por %p108, %p109
      %p112 = scmp.ne.s32.totalorder %s97, %s111
      %p113 = scmp.eq.s32.totalorder %s24, 0
      %p114 = por %p112, %p113
      %s116 = sadd.s32 %s115, 1
      %p119 = scmp.eq.s32.totalorder %s18, 1
      %p120 = scmp.ne.s32.totalorder %s115, %s117
      %p121 = scmp.eq.s32.totalorder %s18, 0
      %p122 = por %p120, %p121
      %p123 = scmp.ne.s32.totalorder %s115, %s117
      %p124 = scmp.eq.s32.totalorder %s23, 1
      %p125 = por %p123, %p124
      %p126 = scmp.ne.s32.totalorder %s117, %s118
      %p127 = scmp.eq.s32.totalorder %s23, 0
      %p128 = por %p126, %p127
      %p129 = scmp.ne.s32.totalorder %s117, %s118
      %p130 = scmp.eq.s32.totalorder %s24, 1
      %p131 = por %p129, %p130
      %p133 = scmp.ne.s32.totalorder %s118, %s132
      %p134 = scmp.eq.s32.totalorder %s24, 0
      %p135 = por %p133, %p134
      %s137 = sadd.s32 %s136, 1
      %p140 = scmp.eq.s32.totalorder %s18, 1
      %p141 = scmp.ne.s32.totalorder %s136, %s138
      %p142 = scmp.eq.s32.totalorder %s18, 0
      %p143 = por %p141, %p142
      %p144 = scmp.ne.s32.totalorder %s136, %s138
      %p145 = scmp.eq.s32.totalorder %s23, 1
      %p146 = por %p144, %p145
      %p147 = scmp.ne.s32.totalorder %s138, %s139
      %p148 = scmp.eq.s32.totalorder %s23, 0
      %p149 = por %p147, %p148
      %p150 = scmp.ne.s32.totalorder %s138, %s139
      %p151 = scmp.eq.s32.totalorder %s24, 1
      %p152 = por %p150, %p151
      %p154 = scmp.ne.s32.totalorder %s139, %s153
      %p155 = scmp.eq.s32.totalorder %s24, 0
      %p156 = por %p154, %p155
      %s158 = sadd.s32 %s157, 1
      %p161 = scmp.eq.s32.totalorder %s18, 1
      %p162 = scmp.ne.s32.totalorder %s157, %s159
      %p163 = scmp.eq.s32.totalorder %s18, 0
      %p164 = por %p162, %p163
      %p165 = scmp.ne.s32.totalorder %s157, %s159
      %p166 = scmp.eq.s32.totalorder %s23, 1
      %p167 = por %p165, %p166
      %p168 = scmp.ne.s32.totalorder %s159, %s160
      %p169 = scmp.eq.s32.totalorder %s23, 0
      %p170 = por %p168, %p169
      %p171 = scmp.ne.s32.totalorder %s159, %s160
      %p172 = scmp.eq.s32.totalorder %s24, 1
      %p173 = por %p171, %p172
      %p175 = scmp.ne.s32.totalorder %s160, %s174
      %p176 = scmp.eq.s32.totalorder %s24, 0
      %p177 = por %p175, %p176
      %s178 = ssub.s32 %s18, %s25
      %p179 = scmp.eq.s32.totalorder %s178, 0
      %s181 = sadd.s32 %s180, 1
      %s182 = scalar_select %p179, %s180, %s181
      %p185 = pneg %p179
      %p186 = scmp.eq.s32.totalorder %s18, 1
      %p187 = por %p185, %p186
      %p188 = scmp.ne.s32.totalorder %s180, %s183
      %p189 = scmp.eq.s32.totalorder %s18, 0
      %p190 = por %p188, %p189
      %p191 = scmp.ne.s32.totalorder %s180, %s183
      %p192 = scmp.eq.s32.totalorder %s23, 1
      %p193 = por %p191, %p192
      %p194 = scmp.ne.s32.totalorder %s183, %s184
      %p195 = scmp.eq.s32.totalorder %s23, 0
      %p196 = por %p194, %p195
      %p197 = scmp.ne.s32.totalorder %s183, %s184
      %p198 = scmp.eq.s32.totalorder %s24, 1
      %p199 = por %p197, %p198
      %p201 = scmp.ne.s32.totalorder %s184, %s200
      %p202 = scmp.eq.s32.totalorder %s24, 0
      %p203 = por %p201, %p202
      %p204 = scmp.le.s32.totalorder 1, %s18
      %p205 = scmp.lt.s32.totalorder %s18, 3
      %p206 = pnand %p204, %p205
      %p207 = pneg %p206
      // Predicated region
      $region9: #{critic_forward.1} parent=5 // pred_check
        _
      $region10: #{critic_forward.1} parent=5 // pred_check_branch
        %209 = sbr.rel (%p206) target = $region12
      $region11: #{critic_forward.1} parent=5 // pred_region
        %s210 = ssub.s32 %s18, 1
        // Predicated region
        $region13: #{critic_forward.1} parent=11 // pred_check
          %p211 = pneg %p65
        $region14: #{critic_forward.1} parent=11 // pred_check_branch
          %213 = sbr.rel (%p211) target = $region16
        $region15: #{critic_forward.1} parent=11 // pred_region
          _
        $region16: #{critic_forward.1} parent=11 // pred_fallthru
          _
        // Predicated region
        $region17: #{critic_forward.1} parent=11 // pred_check
          %p214 = pneg %p86
        $region18: #{critic_forward.1} parent=11 // pred_check_branch
          %216 = sbr.rel (%p214) target = $region20
        $region19: #{critic_forward.1} parent=11 // pred_region
          _
        $region20: #{critic_forward.1} parent=11 // pred_fallthru
          _
        // Predicated region
        $region21: #{critic_forward.1} parent=11 // pred_check
          %p217 = pneg %p107
        $region22: #{critic_forward.1} parent=11 // pred_check_branch
          %219 = sbr.rel (%p217) target = $region24
        $region23: #{critic_forward.1} parent=11 // pred_region
          %s221 = ssub.s32 8192, 8192
          %222 = vsyncadd [#allocation4], %s221
          %s223 = sshll.u32 [#allocation3], 4
          %s224 = int_to_ptr.vmem [resolvable:$true] %s223
          %229 = dma.hbm_to_vmem [thread:$0]  %s3, 8192, %s224, [#allocation4], 256, 256, 16
        $region24: #{critic_forward.1} parent=11 // pred_fallthru
          _
        // Predicated region
        $region25: #{critic_forward.1} parent=11 // pred_check
          %p230 = pneg %p128
        $region26: #{critic_forward.1} parent=11 // pred_check_branch
          %232 = sbr.rel (%p230) target = $region28
        $region27: #{critic_forward.1} parent=11 // pred_region
          _
        $region28: #{critic_forward.1} parent=11 // pred_fallthru
          _
        // Predicated region
        $region29: #{critic_forward.1} parent=11 // pred_check
          %p233 = pneg %p149
        $region30: #{critic_forward.1} parent=11 // pred_check_branch
          %235 = sbr.rel (%p233) target = $region32
        $region31: #{critic_forward.1} parent=11 // pred_region
          _
        $region32: #{critic_forward.1} parent=11 // pred_fallthru
          _
        // Predicated region
        $region33: #{critic_forward.1} parent=11 // pred_check
          %p236 = pneg %p170
        $region34: #{critic_forward.1} parent=11 // pred_check_branch
          %238 = sbr.rel (%p236) target = $region36
        $region35: #{critic_forward.1} parent=11 // pred_region
          _
        $region36: #{critic_forward.1} parent=11 // pred_fallthru
          _
      $region12: #{critic_forward.1} parent=5 // pred_fallthru
        _
      %p239 = scmp.lt.s32.totalorder %s18, 2
      // Predicated region
      $region37: #{critic_forward.1} parent=5 // pred_check
        %p240 = pneg %p239
      $region38: #{critic_forward.1} parent=5 // pred_check_branch
        %242 = sbr.rel (%p240) target = $region40
      $region39: #{critic_forward.1} parent=5 // pred_region
        // Predicated region
        $region41: #{critic_forward.1} parent=39 // pred_check
          %p243 = pneg %p38
        $region42: #{critic_forward.1} parent=39 // pred_check_branch
          %245 = sbr.rel (%p243) target = $region44
        $region43: #{critic_forward.1} parent=39 // pred_region
          %s246 = smul.u32 32, %s18
          %s247 = ssub.s32 38, %s246
          %p248 = scmp.lt.s32.totalorder %s247, 32
          %s249 = scalar_select %p248, %s247, 32
          %s250 = smul.u32 128, %s249
          %p251 = scmp.lt.s32.totalorder %s246, 37
          %s252 = scalar_select %p251, %s246, 37
          %s253 = smul.addr %s252, 8
          %s254 = scalar_lea.vmem %s0, %s253
          %s255 = smul.u32 32, %s18
          %s256 = ssub.s32 38, %s255
          %p257 = scmp.lt.s32.totalorder %s256, 32
          %s258 = scalar_select %p257, %s256, 32
          %s259 = smul.u32 128, %s258
        $region44: #{critic_forward.1} parent=39 // pred_fallthru
          _
      $region40: #{critic_forward.1} parent=5 // pred_fallthru
        _
      %p260 = scmp.le.s32.totalorder 1, %s18
      %p261 = scmp.lt.s32.totalorder %s18, 3
      %p262 = pnand %p260, %p261
      %p263 = pneg %p262
      // Predicated region
      $region45: #{critic_forward.1} parent=5 // pred_check
        _
      $region46: #{critic_forward.1} parent=5 // pred_check_branch
        %265 = sbr.rel (%p262) target = $region48
      $region47: #{critic_forward.1} parent=5 // pred_region
        %s266 = ssub.s32 %s18, 1
        // Predicated region
        $region49: #{critic_forward.1} parent=47 // pred_check
          %p267 = pneg %p107
        $region50: #{critic_forward.1} parent=47 // pred_check_branch
          %269 = sbr.rel (%p267) target = $region52
        $region51: #{critic_forward.1} parent=47 // pred_region
          %270 = dma.done [#allocation4], 8192
        $region52: #{critic_forward.1} parent=47 // pred_fallthru
          _
        %s271 = smul.u32 32, %s23
        %s272 = ssub.s32 38, %s271
        %p273 = scmp.lt.s32.totalorder %s272, 32
        %s274 = scalar_select %p273, %s272, 32
        %s275 = smul.u32 128, %s274
        %p276 = scmp.lt.s32.totalorder %s271, 37
        %s277 = scalar_select %p276, %s271, 37
        %s278 = smul.addr %s277, 8
        %s279 = scalar_lea.vmem %s0, %s278
        %p280 = pneg %p44
        %p281 = pneg %p41
        %p282 = pneg %p65
        %p283 = pneg %p62
        %p284 = pneg %p86
        %p285 = pneg %p83
        %p286 = pneg %p107
        %p287 = pneg %p104
        %p288 = pneg %p128
        %p289 = pneg %p125
        %p290 = pneg %p149
        %p291 = pneg %p146
        %p292 = pneg %p170
        %p293 = pneg %p167
        %p294 = pneg %p196
        %p295 = pneg %p193
        %s296 = sand.u32 %s183, 1
        %s297 = scalar_lea.sflag [#allocation5], %s296
        %s298 = sand.u32 %s183, 1
        %s299 = smul.addr %s298, 2
        %s300 = scalar_lea.vmem [#allocation6], %s299
        %s301 = smul.u32 32, %s23
        %s302 = ssub.s32 38, %s301
        %p303 = scmp.lt.s32.totalorder %s302, 32
        %s304 = scalar_select %p303, %s302, 32
        %s305 = smul.u32 128, %s304
        %p306 = scmp.lt.s32.totalorder %s301, 37
        %s307 = scalar_select %p306, %s301, 37
        %s308 = smul.addr %s307, 8
        %s309 = scalar_lea.vmem %s0, %s308
        %s310 = smul.u32 32, %s23
        %s311 = ssub.s32 38, %s310
        %p312 = scmp.lt.s32.totalorder %s311, 32
        %s313 = scalar_select %p312, %s311, 32
        %s314 = smul.u32 128, %s313
        %s315 = smul.u32 2, %s23
        %s316 = ssub.s32 3, %s315
        %p317 = scmp.lt.s32.totalorder %s316, 2
        %s318 = scalar_select %p317, %s316, 2
        %s319 = smul.u32 16, %s318
        %v320 = vld [vmem:[%s309] sm:$0xff]
        %v321 = vld [vmem:[%s309 + $0x8] sm:$0xff]
        %v322 = vld [vmem:[%s309 + $0x10] sm:$0xff]
        %v323 = vld [vmem:[%s309 + $0x18] sm:$0xff]
        %v324 = vld [vmem:[%s309 + $0x20] sm:$0xff]
        %v325 = vld [vmem:[%s309 + $0x28] sm:$0xff]
        %v326 = vld [vmem:[%s309 + $0x30] sm:$0xff]
        %v327 = vld [vmem:[%s309 + $0x38] sm:$0xff]
        %v328 = vld [vmem:[%s309 + $0x40] sm:$0xff]
        %v329 = vld [vmem:[%s309 + $0x48] sm:$0xff]
        %v330 = vld [vmem:[%s309 + $0x50] sm:$0xff]
        %v331 = vld [vmem:[%s309 + $0x58] sm:$0xff]
        %v332 = vld [vmem:[%s309 + $0x60] sm:$0xff]
        %v333 = vld [vmem:[%s309 + $0x68] sm:$0xff]
        %v334 = vld [vmem:[%s309 + $0x70] sm:$0xff]
        %v335 = vld [vmem:[%s309 + $0x78] sm:$0xff]
        %v336 = vld [vmem:[%s309 + $0x80] sm:$0xff]
        %v337 = vld [vmem:[%s309 + $0x88] sm:$0xff]
        %v338 = vld [vmem:[%s309 + $0x90] sm:$0xff]
        %v339 = vld [vmem:[%s309 + $0x98] sm:$0xff]
        %v340 = vld [vmem:[%s309 + $0xa0] sm:$0xff]
        %v341 = vld [vmem:[%s309 + $0xa8] sm:$0xff]
        %v342 = vld [vmem:[%s309 + $0xb0] sm:$0xff]
        %v343 = vld [vmem:[%s309 + $0xb8] sm:$0xff]
        %v344 = vld [vmem:[%s309 + $0xc0] sm:$0xff]
        %v345 = vld [vmem:[%s309 + $0xc8] sm:$0xff]
        %v346 = vld [vmem:[%s309 + $0xd0] sm:$0xff]
        %v347 = vld [vmem:[%s309 + $0xd8] sm:$0xff]
        %v348 = vld [vmem:[%s309 + $0xe0] sm:$0xff]
        %v349 = vld [vmem:[%s309 + $0xe8] sm:$0xff]
        %v350 = vld [vmem:[%s309 + $0xf0] sm:$0xff]
        %v351 = vld [vmem:[%s309 + $0xf8] sm:$0xff]
        %v352 = vld [vmem:[%s1] sm:$0xff]
        %v353 = vld [vmem:[%s1 + $0x8] sm:$0xff]
        %v354 = vld [vmem:[%s1 + $0x10] sm:$0xff]
        %v355 = vld [vmem:[%s1 + $0x18] sm:$0xff]
        %v356 = vld [vmem:[%s1 + $0x20] sm:$0xff]
        %v357 = vld [vmem:[%s1 + $0x28] sm:$0xff]
        %v358 = vld [vmem:[%s1 + $0x30] sm:$0xff]
        %v359 = vld [vmem:[%s1 + $0x38] sm:$0xff]
        %v360 = vld [vmem:[%s2] sm:$0x3]
        %v362 = vlaneseq
        %v363 = vshrl.u32 %v362, 7
        %v364 = vsub.s32 0, %v363
        %v365 = vrot.slane %v360, %v364
        %v366 = vlaneseq
        %v367 = vshrl.u32 %v366, 7
        %v368 = vsub.s32 1, %v367
        %v369 = vrot.slane %v360, %v368
        %vm372 = vcmask 261120
        %v374 = vsel %vm372, %v320, 0
        %v377 = vsel %vm372, %v321, 0
        %v380 = vsel %vm372, %v322, 0
        %v383 = vsel %vm372, %v323, 0
        %v386 = vsel %vm372, %v324, 0
        %v389 = vsel %vm372, %v325, 0
        %v392 = vsel %vm372, %v326, 0
        %v395 = vsel %vm372, %v327, 0
        %v398 = vsel %vm372, %v328, 0
        %v401 = vsel %vm372, %v329, 0
        %v404 = vsel %vm372, %v330, 0
        %v407 = vsel %vm372, %v331, 0
        %v410 = vsel %vm372, %v332, 0
        %v413 = vsel %vm372, %v333, 0
        %v416 = vsel %vm372, %v334, 0
        %v419 = vsel %vm372, %v335, 0
        %v422 = vsel %vm372, %v336, 0
        %v425 = vsel %vm372, %v337, 0
        %v428 = vsel %vm372, %v338, 0
        %v431 = vsel %vm372, %v339, 0
        %v434 = vsel %vm372, %v340, 0
        %v437 = vsel %vm372, %v341, 0
        %v440 = vsel %vm372, %v342, 0
        %v443 = vsel %vm372, %v343, 0
        %v446 = vsel %vm372, %v344, 0
        %v449 = vsel %vm372, %v345, 0
        %v452 = vsel %vm372, %v346, 0
        %v455 = vsel %vm372, %v347, 0
        %v458 = vsel %vm372, %v348, 0
        %v461 = vsel %vm372, %v349, 0
        %v464 = vsel %vm372, %v350, 0
        %v467 = vsel %vm372, %v351, 0
        %469 = vmatprep.subr.mxu0 %v353
        %470 = vmatpush1.msra.mxu0 %v352
        %471 = vmatprep.subr.mxu0 %v355
        %472 = vmatpush1.msra.mxu0 %v354
        %473 = vmatprep.subr.mxu0 %v357
        %474 = vmatpush1.msra.mxu0 %v356
        %475 = vmatprep.subr.mxu0 %v359
        %476 = vmatpush1.msra.mxu0 %v358
        %477 = vmatprep.subr.mxu0 0.0
        %478 = vmatpush1.msra.mxu0 0.0
        %479 = vmatprep.subr.mxu0 0.0
        %480 = vmatpush1.msra.mxu0 0.0
        %481 = vmatprep.subr.mxu0 0.0
        %482 = vmatpush1.msra.mxu0 0.0
        %483 = vmatprep.subr.mxu0 0.0
        %484 = vmatpush1.msra.mxu0 0.0
        %485 = vmatprep.subr.mxu0 0.0
        %486 = vmatpush1.msra.mxu0 0.0
        %487 = vmatprep.subr.mxu0 0.0
        %488 = vmatpush1.msra.mxu0 0.0
        %489 = vmatprep.subr.mxu0 0.0
        %490 = vmatpush1.msra.mxu0 0.0
        %491 = vmatprep.subr.mxu0 0.0
        %492 = vmatpush1.msra.mxu0 0.0
        %493 = vmatprep.subr.mxu0 0.0
        %494 = vmatpush1.msra.mxu0 0.0
        %495 = vmatprep.subr.mxu0 0.0
        %496 = vmatpush1.msra.mxu0 0.0
        %497 = vmatprep.subr.mxu0 0.0
        %498 = vmatpush1.msra.mxu0 0.0
        %499 = vmatprep.subr.mxu0 0.0
        %500 = vmatpush1.msra.mxu0 0.0
        %501 = vmatprep.subr.mxu0 0.0
        %502 = vmatpush1.msra.mxu0 0.0
        %503 = vmatprep.subr.mxu0 0.0
        %504 = vmatpush1.msra.mxu0 0.0
        %505 = vmatprep.subr.mxu0 0.0
        %506 = vmatpush1.msra.mxu0 0.0
        %507 = vmatprep.subr.mxu0 0.0
        %508 = vmatpush1.msra.mxu0 0.0
        %509 = vmatprep.subr.mxu0 0.0
        %510 = vmatpush1.msra.mxu0 0.0
        %511 = vmatprep.subr.mxu0 0.0
        %512 = vmatpush1.msra.mxu0 0.0
        %513 = vmatprep.subr.mxu0 0.0
        %514 = vmatpush1.msra.mxu0 0.0
        %515 = vmatprep.subr.mxu0 0.0
        %516 = vmatpush1.msra.mxu0 0.0
        %517 = vmatprep.subr.mxu0 0.0
        %518 = vmatpush1.msra.mxu0 0.0
        %519 = vmatprep.subr.mxu0 0.0
        %520 = vmatpush1.msra.mxu0 0.0
        %521 = vmatprep.subr.mxu0 0.0
        %522 = vmatpush1.msra.mxu0 0.0
        %523 = vmatprep.subr.mxu0 0.0
        %524 = vmatpush1.msra.mxu0 0.0
        %525 = vmatprep.subr.mxu0 0.0
        %526 = vmatpush1.msra.mxu0 0.0
        %527 = vmatprep.subr.mxu0 0.0
        %528 = vmatpush1.msra.mxu0 0.0
        %529 = vmatprep.subr.mxu0 0.0
        %530 = vmatpush1.msra.mxu0 0.0
        %531 = vmatprep.subr.mxu0 0.0
        %532 = vmatpush1.msra.mxu0 0.0
        %533 = vmatprep.mubr.f32.mxu0 0.0
        %534 = vmatmul.mubr.f32.gmra.mrb[0].mxu0 %v374
        %v535 = vpop.f32.mrb[0].mxu0
        %v536 = vadd.f32 %v365, %v535
        %v537 = vpop.f32.mrb[0].mxu0
        %v538 = vadd.f32 %v369, %v537
        %539 = vmatprep.mubr.f32.mxu0 0.0
        %540 = vmatmul.mubr.f32.gmra.mrb[0].mxu0 %v377
        %v541 = vpop.f32.mrb[0].mxu0
        %v542 = vadd.f32 %v365, %v541
        %v543 = vpop.f32.mrb[0].mxu0
        %v544 = vadd.f32 %v369, %v543
        %545 = vmatprep.mubr.f32.mxu0 0.0
        %546 = vmatmul.mubr.f32.gmra.mrb[0].mxu0 %v380
        %v547 = vpop.f32.mrb[0].mxu0
        %v548 = vadd.f32 %v365, %v547
        %v549 = vpop.f32.mrb[0].mxu0
        %v550 = vadd.f32 %v369, %v549
        %551 = vmatprep.mubr.f32.mxu0 0.0
        %552 = vmatmul.mubr.f32.gmra.mrb[0].mxu0 %v383
        %v553 = vpop.f32.mrb[0].mxu0
        %v554 = vadd.f32 %v365, %v553
        %v555 = vpop.f32.mrb[0].mxu0
        %v556 = vadd.f32 %v369, %v555
        %557 = vmatprep.mubr.f32.mxu0 0.0
        %558 = vmatmul.mubr.f32.gmra.mrb[0].mxu0 %v386
        %v559 = vpop.f32.mrb[0].mxu0
        %v560 = vadd.f32 %v365, %v559
        %v561 = vpop.f32.mrb[0].mxu0
        %v562 = vadd.f32 %v369, %v561
        %563 = vmatprep.mubr.f32.mxu0 0.0
        %564 = vmatmul.mubr.f32.gmra.mrb[0].mxu0 %v389
        %v565 = vpop.f32.mrb[0].mxu0
        %v566 = vadd.f32 %v365, %v565
        %v567 = vpop.f32.mrb[0].mxu0
        %v568 = vadd.f32 %v369, %v567
        %569 = vmatprep.mubr.f32.mxu0 0.0
        %570 = vmatmul.mubr.f32.gmra.mrb[0].mxu0 %v392
        %v571 = vpop.f32.mrb[0].mxu0
        %v572 = vadd.f32 %v365, %v571
        %v573 = vpop.f32.mrb[0].mxu0
        %v574 = vadd.f32 %v369, %v573
        %575 = vmatprep.mubr.f32.mxu0 0.0
        %576 = vmatmul.mubr.f32.gmra.mrb[0].mxu0 %v395
        %v577 = vpop.f32.mrb[0].mxu0
        %v578 = vadd.f32 %v365, %v577
        %v579 = vpop.f32.mrb[0].mxu0
        %v580 = vadd.f32 %v369, %v579
        %581 = vmatprep.mubr.f32.mxu0 0.0
        %582 = vmatmul.mubr.f32.gmra.mrb[0].mxu0 %v398
        %v583 = vpop.f32.mrb[0].mxu0
        %v584 = vadd.f32 %v365, %v583
        %v585 = vpop.f32.mrb[0].mxu0
        %v586 = vadd.f32 %v369, %v585
        %587 = vmatprep.mubr.f32.mxu0 0.0
        %588 = vmatmul.mubr.f32.gmra.mrb[0].mxu0 %v401
        %v589 = vpop.f32.mrb[0].mxu0
        %v590 = vadd.f32 %v365, %v589
        %v591 = vpop.f32.mrb[0].mxu0
        %v592 = vadd.f32 %v369, %v591
        %593 = vmatprep.mubr.f32.mxu0 0.0
        %594 = vmatmul.mubr.f32.gmra.mrb[0].mxu0 %v404
        %v595 = vpop.f32.mrb[0].mxu0
        %v596 = vadd.f32 %v365, %v595
        %v597 = vpop.f32.mrb[0].mxu0
        %v598 = vadd.f32 %v369, %v597
        %599 = vmatprep.mubr.f32.mxu0 0.0
        %600 = vmatmul.mubr.f32.gmra.mrb[0].mxu0 %v407
        %v601 = vpop.f32.mrb[0].mxu0
        %v602 = vadd.f32 %v365, %v601
        %v603 = vpop.f32.mrb[0].mxu0
        %v604 = vadd.f32 %v369, %v603
        %605 = vmatprep.mubr.f32.mxu0 0.0
        %606 = vmatmul.mubr.f32.gmra.mrb[0].mxu0 %v410
        %v607 = vpop.f32.mrb[0].mxu0
        %v608 = vadd.f32 %v365, %v607
        %v609 = vpop.f32.mrb[0].mxu0
        %v610 = vadd.f32 %v369, %v609
        %611 = vmatprep.mubr.f32.mxu0 0.0
        %612 = vmatmul.mubr.f32.gmra.mrb[0].mxu0 %v413
        %v613 = vpop.f32.mrb[0].mxu0
        %v614 = vadd.f32 %v365, %v613
        %v615 = vpop.f32.mrb[0].mxu0
        %v616 = vadd.f32 %v369, %v615
        %617 = vmatprep.mubr.f32.mxu0 0.0
        %618 = vmatmul.mubr.f32.gmra.mrb[0].mxu0 %v416
        %v619 = vpop.f32.mrb[0].mxu0
        %v620 = vadd.f32 %v365, %v619
        %v621 = vpop.f32.mrb[0].mxu0
        %v622 = vadd.f32 %v369, %v621
        %623 = vmatprep.mubr.f32.mxu0 0.0
        %624 = vmatmul.mubr.f32.gmra.mrb[0].mxu0 %v419
        %v625 = vpop.f32.mrb[0].mxu0
        %v626 = vadd.f32 %v365, %v625
        %v627 = vpop.f32.mrb[0].mxu0
        %v628 = vadd.f32 %v369, %v627
        %629 = vmatprep.mubr.f32.mxu0 0.0
        %630 = vmatmul.mubr.f32.gmra.mrb[0].mxu0 %v422
        %v631 = vpop.f32.mrb[0].mxu0
        %v632 = vadd.f32 %v365, %v631
        %v633 = vpop.f32.mrb[0].mxu0
        %v634 = vadd.f32 %v369, %v633
        %635 = vmatprep.mubr.f32.mxu0 0.0
        %636 = vmatmul.mubr.f32.gmra.mrb[0].mxu0 %v425
        %v637 = vpop.f32.mrb[0].mxu0
        %v638 = vadd.f32 %v365, %v637
        %v639 = vpop.f32.mrb[0].mxu0
        %v640 = vadd.f32 %v369, %v639
        %641 = vmatprep.mubr.f32.mxu0 0.0
        %642 = vmatmul.mubr.f32.gmra.mrb[0].mxu0 %v428
        %v643 = vpop.f32.mrb[0].mxu0
        %v644 = vadd.f32 %v365, %v643
        %v645 = vpop.f32.mrb[0].mxu0
        %v646 = vadd.f32 %v369, %v645
        %647 = vmatprep.mubr.f32.mxu0 0.0
        %648 = vmatmul.mubr.f32.gmra.mrb[0].mxu0 %v431
        %v649 = vpop.f32.mrb[0].mxu0
        %v650 = vadd.f32 %v365, %v649
        %v651 = vpop.f32.mrb[0].mxu0
        %v652 = vadd.f32 %v369, %v651
        %653 = vmatprep.mubr.f32.mxu0 0.0
        %654 = vmatmul.mubr.f32.gmra.mrb[0].mxu0 %v434
        %v655 = vpop.f32.mrb[0].mxu0
        %v656 = vadd.f32 %v365, %v655
        %v657 = vpop.f32.mrb[0].mxu0
        %v658 = vadd.f32 %v369, %v657
        %659 = vmatprep.mubr.f32.mxu0 0.0
        %660 = vmatmul.mubr.f32.gmra.mrb[0].mxu0 %v437
        %v661 = vpop.f32.mrb[0].mxu0
        %v662 = vadd.f32 %v365, %v661
        %v663 = vpop.f32.mrb[0].mxu0
        %v664 = vadd.f32 %v369, %v663
        %665 = vmatprep.mubr.f32.mxu0 0.0
        %666 = vmatmul.mubr.f32.gmra.mrb[0].mxu0 %v440
        %v667 = vpop.f32.mrb[0].mxu0
        %v668 = vadd.f32 %v365, %v667
        %v669 = vpop.f32.mrb[0].mxu0
        %v670 = vadd.f32 %v369, %v669
        %671 = vmatprep.mubr.f32.mxu0 0.0
        %672 = vmatmul.mubr.f32.gmra.mrb[0].mxu0 %v443
        %v673 = vpop.f32.mrb[0].mxu0
        %v674 = vadd.f32 %v365, %v673
        %v675 = vpop.f32.mrb[0].mxu0
        %v676 = vadd.f32 %v369, %v675
        %677 = vmatprep.mubr.f32.mxu0 0.0
        %678 = vmatmul.mubr.f32.gmra.mrb[0].mxu0 %v446
        %v679 = vpop.f32.mrb[0].mxu0
        %v680 = vadd.f32 %v365, %v679
        %v681 = vpop.f32.mrb[0].mxu0
        %v682 = vadd.f32 %v369, %v681
        %683 = vmatprep.mubr.f32.mxu0 0.0
        %684 = vmatmul.mubr.f32.gmra.mrb[0].mxu0 %v449
        %v685 = vpop.f32.mrb[0].mxu0
        %v686 = vadd.f32 %v365, %v685
        %v687 = vpop.f32.mrb[0].mxu0
        %v688 = vadd.f32 %v369, %v687
        %689 = vmatprep.mubr.f32.mxu0 0.0
        %690 = vmatmul.mubr.f32.gmra.mrb[0].mxu0 %v452
        %v691 = vpop.f32.mrb[0].mxu0
        %v692 = vadd.f32 %v365, %v691
        %v693 = vpop.f32.mrb[0].mxu0
        %v694 = vadd.f32 %v369, %v693
        %695 = vmatprep.mubr.f32.mxu0 0.0
        %696 = vmatmul.mubr.f32.gmra.mrb[0].mxu0 %v455
        %v697 = vpop.f32.mrb[0].mxu0
        %v698 = vadd.f32 %v365, %v697
        %v699 = vpop.f32.mrb[0].mxu0
        %v700 = vadd.f32 %v369, %v699
        %701 = vmatprep.mubr.f32.mxu0 0.0
        %702 = vmatmul.mubr.f32.gmra.mrb[0].mxu0 %v458
        %v703 = vpop.f32.mrb[0].mxu0
        %v704 = vadd.f32 %v365, %v703
        %v705 = vpop.f32.mrb[0].mxu0
        %v706 = vadd.f32 %v369, %v705
        %707 = vmatprep.mubr.f32.mxu0 0.0
        %708 = vmatmul.mubr.f32.gmra.mrb[0].mxu0 %v461
        %v709 = vpop.f32.mrb[0].mxu0
        %v710 = vadd.f32 %v365, %v709
        %v711 = vpop.f32.mrb[0].mxu0
        %v712 = vadd.f32 %v369, %v711
        %713 = vmatprep.mubr.f32.mxu0 0.0
        %714 = vmatmul.mubr.f32.gmra.mrb[0].mxu0 %v464
        %v715 = vpop.f32.mrb[0].mxu0
        %v716 = vadd.f32 %v365, %v715
        %v717 = vpop.f32.mrb[0].mxu0
        %v718 = vadd.f32 %v369, %v717
        %719 = vmatprep.mubr.f32.mxu0 0.0
        %720 = vmatmul.mubr.f32.gmra.mrb[0].mxu0 %v467
        %v721 = vpop.f32.mrb[0].mxu0
        %v722 = vadd.f32 %v365, %v721
        %v723 = vpop.f32.mrb[0].mxu0
        %v724 = vadd.f32 %v369, %v723
        %725 = vdwg.mxu0
        %v726 = vmax.f32 %v536, 0.0
        %v727 = vmax.f32 %v538, 0.0
        %v728 = vmax.f32 %v542, 0.0
        %v729 = vmax.f32 %v544, 0.0
        %v730 = vmax.f32 %v548, 0.0
        %v731 = vmax.f32 %v550, 0.0
        %v732 = vmax.f32 %v554, 0.0
        %v733 = vmax.f32 %v556, 0.0
        %v734 = vmax.f32 %v560, 0.0
        %v735 = vmax.f32 %v562, 0.0
        %v736 = vmax.f32 %v566, 0.0
        %v737 = vmax.f32 %v568, 0.0
        %v738 = vmax.f32 %v572, 0.0
        %v739 = vmax.f32 %v574, 0.0
        %v740 = vmax.f32 %v578, 0.0
        %v741 = vmax.f32 %v580, 0.0
        %v742 = vmax.f32 %v584, 0.0
        %v743 = vmax.f32 %v586, 0.0
        %v744 = vmax.f32 %v590, 0.0
        %v745 = vmax.f32 %v592, 0.0
        %v746 = vmax.f32 %v596, 0.0
        %v747 = vmax.f32 %v598, 0.0
        %v748 = vmax.f32 %v602, 0.0
        %v749 = vmax.f32 %v604, 0.0
        %v750 = vmax.f32 %v608, 0.0
        %v751 = vmax.f32 %v610, 0.0
        %v752 = vmax.f32 %v614, 0.0
        %v753 = vmax.f32 %v616, 0.0
        %v754 = vmax.f32 %v620, 0.0
        %v755 = vmax.f32 %v622, 0.0
        %v756 = vmax.f32 %v626, 0.0
        %v757 = vmax.f32 %v628, 0.0
        %v758 = vmax.f32 %v632, 0.0
        %v759 = vmax.f32 %v634, 0.0
        %v760 = vmax.f32 %v638, 0.0
        %v761 = vmax.f32 %v640, 0.0
        %v762 = vmax.f32 %v644, 0.0
        %v763 = vmax.f32 %v646, 0.0
        %v764 = vmax.f32 %v650, 0.0
        %v765 = vmax.f32 %v652, 0.0
        %v766 = vmax.f32 %v656, 0.0
        %v767 = vmax.f32 %v658, 0.0
        %v768 = vmax.f32 %v662, 0.0
        %v769 = vmax.f32 %v664, 0.0
        %v770 = vmax.f32 %v668, 0.0
        %v771 = vmax.f32 %v670, 0.0
        %v772 = vmax.f32 %v674, 0.0
        %v773 = vmax.f32 %v676, 0.0
        %v774 = vmax.f32 %v680, 0.0
        %v775 = vmax.f32 %v682, 0.0
        %v776 = vmax.f32 %v686, 0.0
        %v777 = vmax.f32 %v688, 0.0
        %v778 = vmax.f32 %v692, 0.0
        %v779 = vmax.f32 %v694, 0.0
        %v780 = vmax.f32 %v698, 0.0
        %v781 = vmax.f32 %v700, 0.0
        %v782 = vmax.f32 %v704, 0.0
        %v783 = vmax.f32 %v706, 0.0
        %v784 = vmax.f32 %v710, 0.0
        %v785 = vmax.f32 %v712, 0.0
        %v786 = vmax.f32 %v716, 0.0
        %v787 = vmax.f32 %v718, 0.0
        %v788 = vmax.f32 %v722, 0.0
        %v789 = vmax.f32 %v724, 0.0
        %v790 = vld [vmem:[#allocation3] sm:$0xff]
        %v791 = vld [vmem:[#allocation3 + $0x8] sm:$0xff]
        %v792 = vld [vmem:[#allocation3 + $0x10] sm:$0xff]
        %v793 = vld [vmem:[#allocation3 + $0x18] sm:$0xff]
        %v794 = vld [vmem:[#allocation3 + $0x20] sm:$0xff]
        %v795 = vld [vmem:[#allocation3 + $0x28] sm:$0xff]
        %v796 = vld [vmem:[#allocation3 + $0x30] sm:$0xff]
        %v797 = vld [vmem:[#allocation3 + $0x38] sm:$0xff]
        %v798 = vld [vmem:[#allocation3 + $0x40] sm:$0xff]
        %v799 = vld [vmem:[#allocation3 + $0x48] sm:$0xff]
        %v800 = vld [vmem:[#allocation3 + $0x50] sm:$0xff]
        %v801 = vld [vmem:[#allocation3 + $0x58] sm:$0xff]
        %v802 = vld [vmem:[#allocation3 + $0x60] sm:$0xff]
        %v803 = vld [vmem:[#allocation3 + $0x68] sm:$0xff]
        %v804 = vld [vmem:[#allocation3 + $0x70] sm:$0xff]
        %v805 = vld [vmem:[#allocation3 + $0x78] sm:$0xff]
        %v806 = vld [vmem:[#allocation3 + $0x80] sm:$0xff]
        %v807 = vld [vmem:[#allocation3 + $0x88] sm:$0xff]
        %v808 = vld [vmem:[#allocation3 + $0x90] sm:$0xff]
        %v809 = vld [vmem:[#allocation3 + $0x98] sm:$0xff]
        %v810 = vld [vmem:[#allocation3 + $0xa0] sm:$0xff]
        %v811 = vld [vmem:[#allocation3 + $0xa8] sm:$0xff]
        %v812 = vld [vmem:[#allocation3 + $0xb0] sm:$0xff]
        %v813 = vld [vmem:[#allocation3 + $0xb8] sm:$0xff]
        %v814 = vld [vmem:[#allocation3 + $0xc0] sm:$0xff]
        %v815 = vld [vmem:[#allocation3 + $0xc8] sm:$0xff]
        %v816 = vld [vmem:[#allocation3 + $0xd0] sm:$0xff]
        %v817 = vld [vmem:[#allocation3 + $0xd8] sm:$0xff]
        %v818 = vld [vmem:[#allocation3 + $0xe0] sm:$0xff]
        %v819 = vld [vmem:[#allocation3 + $0xe8] sm:$0xff]
        %v820 = vld [vmem:[#allocation3 + $0xf0] sm:$0xff]
        %v821 = vld [vmem:[#allocation3 + $0xf8] sm:$0xff]
        %v822 = vld [vmem:[#allocation3 + $0x100] sm:$0xff]
        %v823 = vld [vmem:[#allocation3 + $0x108] sm:$0xff]
        %v824 = vld [vmem:[#allocation3 + $0x110] sm:$0xff]
        %v825 = vld [vmem:[#allocation3 + $0x118] sm:$0xff]
        %v826 = vld [vmem:[#allocation3 + $0x120] sm:$0xff]
        %v827 = vld [vmem:[#allocation3 + $0x128] sm:$0xff]
        %v828 = vld [vmem:[#allocation3 + $0x130] sm:$0xff]
        %v829 = vld [vmem:[#allocation3 + $0x138] sm:$0xff]
        %v830 = vld [vmem:[#allocation3 + $0x140] sm:$0xff]
        %v831 = vld [vmem:[#allocation3 + $0x148] sm:$0xff]
        %v832 = vld [vmem:[#allocation3 + $0x150] sm:$0xff]
        %v833 = vld [vmem:[#allocation3 + $0x158] sm:$0xff]
        %v834 = vld [vmem:[#allocation3 + $0x160] sm:$0xff]
        %v835 = vld [vmem:[#allocation3 + $0x168] sm:$0xff]
        %v836 = vld [vmem:[#allocation3 + $0x170] sm:$0xff]
        %v837 = vld [vmem:[#allocation3 + $0x178] sm:$0xff]
        %v838 = vld [vmem:[#allocation3 + $0x180] sm:$0xff]
        %v839 = vld [vmem:[#allocation3 + $0x188] sm:$0xff]
        %v840 = vld [vmem:[#allocation3 + $0x190] sm:$0xff]
        %v841 = vld [vmem:[#allocation3 + $0x198] sm:$0xff]
        %v842 = vld [vmem:[#allocation3 + $0x1a0] sm:$0xff]
        %v843 = vld [vmem:[#allocation3 + $0x1a8] sm:$0xff]
        %v844 = vld [vmem:[#allocation3 + $0x1b0] sm:$0xff]
        %v845 = vld [vmem:[#allocation3 + $0x1b8] sm:$0xff]
        %v846 = vld [vmem:[#allocation3 + $0x1c0] sm:$0xff]
        %v847 = vld [vmem:[#allocation3 + $0x1c8] sm:$0xff]
        %v848 = vld [vmem:[#allocation3 + $0x1d0] sm:$0xff]
        %v849 = vld [vmem:[#allocation3 + $0x1d8] sm:$0xff]
        %v850 = vld [vmem:[#allocation3 + $0x1e0] sm:$0xff]
        %v851 = vld [vmem:[#allocation3 + $0x1e8] sm:$0xff]
        %v852 = vld [vmem:[#allocation3 + $0x1f0] sm:$0xff]
        %v853 = vld [vmem:[#allocation3 + $0x1f8] sm:$0xff]
        %v854 = vld [vmem:[%s4] sm:$0x3]
        %v856 = vlaneseq
        %v857 = vshrl.u32 %v856, 7
        %v858 = vsub.s32 0, %v857
        %v859 = vrot.slane %v854, %v858
        %v860 = vlaneseq
        %v861 = vshrl.u32 %v860, 7
        %v862 = vsub.s32 1, %v861
        %v863 = vrot.slane %v854, %v862
        %866 = vmatprep.subr.mxu0 %v791
        %867 = vmatpush1.msra.mxu0 %v790
        %868 = vmatprep.subr.mxu0 %v793
        %869 = vmatpush1.msra.mxu0 %v792
        %870 = vmatprep.subr.mxu0 %v795
        %871 = vmatpush1.msra.mxu0 %v794
        %872 = vmatprep.subr.mxu0 %v797
        %873 = vmatpush1.msra.mxu0 %v796
        %874 = vmatprep.subr.mxu0 %v799
        %875 = vmatpush1.msra.mxu0 %v798
        %876 = vmatprep.subr.mxu0 %v801
        %877 = vmatpush1.msra.mxu0 %v800
        %878 = vmatprep.subr.mxu0 %v803
        %879 = vmatpush1.msra.mxu0 %v802
        %880 = vmatprep.subr.mxu0 %v805
        %881 = vmatpush1.msra.mxu0 %v804
        %882 = vmatprep.subr.mxu0 %v807
        %883 = vmatpush1.msra.mxu0 %v806
        %884 = vmatprep.subr.mxu0 %v809
        %885 = vmatpush1.msra.mxu0 %v808
        %886 = vmatprep.subr.mxu0 %v811
        %887 = vmatpush1.msra.mxu0 %v810
        %888 = vmatprep.subr.mxu0 %v813
        %889 = vmatpush1.msra.mxu0 %v812
        %890 = vmatprep.subr.mxu0 %v815
        %891 = vmatpush1.msra.mxu0 %v814
        %892 = vmatprep.subr.mxu0 %v817
        %893 = vmatpush1.msra.mxu0 %v816
        %894 = vmatprep.subr.mxu0 %v819
        %895 = vmatpush1.msra.mxu0 %v818
        %896 = vmatprep.subr.mxu0 %v821
        %897 = vmatpush1.msra.mxu0 %v820
        %898 = vmatprep.subr.mxu0 %v823
        %899 = vmatpush1.msra.mxu0 %v822
        %900 = vmatprep.subr.mxu0 %v825
        %901 = vmatpush1.msra.mxu0 %v824
        %902 = vmatprep.subr.mxu0 %v827
        %903 = vmatpush1.msra.mxu0 %v826
        %904 = vmatprep.subr.mxu0 %v829
        %905 = vmatpush1.msra.mxu0 %v828
        %906 = vmatprep.subr.mxu0 %v831
        %907 = vmatpush1.msra.mxu0 %v830
        %908 = vmatprep.subr.mxu0 %v833
        %909 = vmatpush1.msra.mxu0 %v832
        %910 = vmatprep.subr.mxu0 %v835
        %911 = vmatpush1.msra.mxu0 %v834
        %912 = vmatprep.subr.mxu0 %v837
        %913 = vmatpush1.msra.mxu0 %v836
        %914 = vmatprep.subr.mxu0 %v839
        %915 = vmatpush1.msra.mxu0 %v838
        %916 = vmatprep.subr.mxu0 %v841
        %917 = vmatpush1.msra.mxu0 %v840
        %918 = vmatprep.subr.mxu0 %v843
        %919 = vmatpush1.msra.mxu0 %v842
        %920 = vmatprep.subr.mxu0 %v845
        %921 = vmatpush1.msra.mxu0 %v844
        %922 = vmatprep.subr.mxu0 %v847
        %923 = vmatpush1.msra.mxu0 %v846
        %924 = vmatprep.subr.mxu0 %v849
        %925 = vmatpush1.msra.mxu0 %v848
        %926 = vmatprep.subr.mxu0 %v851
        %927 = vmatpush1.msra.mxu0 %v850
        %928 = vmatprep.subr.mxu0 %v853
        %929 = vmatpush1.msra.mxu0 %v852
        %930 = vmatprep.mubr.f32.mxu0 %v727
        %931 = vmatmul.mubr.f32.gmra.mrb[0].mxu0 %v726
        %v932 = vpop.f32.mrb[0].mxu0
        %v933 = vadd.f32 %v859, %v932
        %v934 = vpop.f32.mrb[0].mxu0
        %v935 = vadd.f32 %v863, %v934
        %936 = vmatprep.mubr.f32.mxu0 %v729
        %937 = vmatmul.mubr.f32.gmra.mrb[0].mxu0 %v728
        %v938 = vpop.f32.mrb[0].mxu0
        %v939 = vadd.f32 %v859, %v938
        %v940 = vpop.f32.mrb[0].mxu0
        %v941 = vadd.f32 %v863, %v940
        %942 = vmatprep.mubr.f32.mxu0 %v731
        %943 = vmatmul.mubr.f32.gmra.mrb[0].mxu0 %v730
        %v944 = vpop.f32.mrb[0].mxu0
        %v945 = vadd.f32 %v859, %v944
        %v946 = vpop.f32.mrb[0].mxu0
        %v947 = vadd.f32 %v863, %v946
        %948 = vmatprep.mubr.f32.mxu0 %v733
        %949 = vmatmul.mubr.f32.gmra.mrb[0].mxu0 %v732
        %v950 = vpop.f32.mrb[0].mxu0
        %v951 = vadd.f32 %v859, %v950
        %v952 = vpop.f32.mrb[0].mxu0
        %v953 = vadd.f32 %v863, %v952
        %954 = vmatprep.mubr.f32.mxu0 %v735
        %955 = vmatmul.mubr.f32.gmra.mrb[0].mxu0 %v734
        %v956 = vpop.f32.mrb[0].mxu0
        %v957 = vadd.f32 %v859, %v956
        %v958 = vpop.f32.mrb[0].mxu0
        %v959 = vadd.f32 %v863, %v958
        %960 = vmatprep.mubr.f32.mxu0 %v737
        %961 = vmatmul.mubr.f32.gmra.mrb[0].mxu0 %v736
        %v962 = vpop.f32.mrb[0].mxu0
        %v963 = vadd.f32 %v859, %v962
        %v964 = vpop.f32.mrb[0].mxu0
        %v965 = vadd.f32 %v863, %v964
        %966 = vmatprep.mubr.f32.mxu0 %v739
        %967 = vmatmul.mubr.f32.gmra.mrb[0].mxu0 %v738
        %v968 = vpop.f32.mrb[0].mxu0
        %v969 = vadd.f32 %v859, %v968
        %v970 = vpop.f32.mrb[0].mxu0
        %v971 = vadd.f32 %v863, %v970
        %972 = vmatprep.mubr.f32.mxu0 %v741
        %973 = vmatmul.mubr.f32.gmra.mrb[0].mxu0 %v740
        %v974 = vpop.f32.mrb[0].mxu0
        %v975 = vadd.f32 %v859, %v974
        %v976 = vpop.f32.mrb[0].mxu0
        %v977 = vadd.f32 %v863, %v976
        %978 = vmatprep.mubr.f32.mxu0 %v743
        %979 = vmatmul.mubr.f32.gmra.mrb[0].mxu0 %v742
        %v980 = vpop.f32.mrb[0].mxu0
        %v981 = vadd.f32 %v859, %v980
        %v982 = vpop.f32.mrb[0].mxu0
        %v983 = vadd.f32 %v863, %v982
        %984 = vmatprep.mubr.f32.mxu0 %v745
        %985 = vmatmul.mubr.f32.gmra.mrb[0].mxu0 %v744
        %v986 = vpop.f32.mrb[0].mxu0
        %v987 = vadd.f32 %v859, %v986
        %v988 = vpop.f32.mrb[0].mxu0
        %v989 = vadd.f32 %v863, %v988
        %990 = vmatprep.mubr.f32.mxu0 %v747
        %991 = vmatmul.mubr.f32.gmra.mrb[0].mxu0 %v746
        %v992 = vpop.f32.mrb[0].mxu0
        %v993 = vadd.f32 %v859, %v992
        %v994 = vpop.f32.mrb[0].mxu0
        %v995 = vadd.f32 %v863, %v994
        %996 = vmatprep.mubr.f32.mxu0 %v749
        %997 = vmatmul.mubr.f32.gmra.mrb[0].mxu0 %v748
        %v998 = vpop.f32.mrb[0].mxu0
        %v999 = vadd.f32 %v859, %v998
        %v1000 = vpop.f32.mrb[0].mxu0
        %v1001 = vadd.f32 %v863, %v1000
        %1002 = vmatprep.mubr.f32.mxu0 %v751
        %1003 = vmatmul.mubr.f32.gmra.mrb[0].mxu0 %v750
        %v1004 = vpop.f32.mrb[0].mxu0
        %v1005 = vadd.f32 %v859, %v1004
        %v1006 = vpop.f32.mrb[0].mxu0
        %v1007 = vadd.f32 %v863, %v1006
        %1008 = vmatprep.mubr.f32.mxu0 %v753
        %1009 = vmatmul.mubr.f32.gmra.mrb[0].mxu0 %v752
        %v1010 = vpop.f32.mrb[0].mxu0
        %v1011 = vadd.f32 %v859, %v1010
        %v1012 = vpop.f32.mrb[0].mxu0
        %v1013 = vadd.f32 %v863, %v1012
        %1014 = vmatprep.mubr.f32.mxu0 %v755
        %1015 = vmatmul.mubr.f32.gmra.mrb[0].mxu0 %v754
        %v1016 = vpop.f32.mrb[0].mxu0
        %v1017 = vadd.f32 %v859, %v1016
        %v1018 = vpop.f32.mrb[0].mxu0
        %v1019 = vadd.f32 %v863, %v1018
        %1020 = vmatprep.mubr.f32.mxu0 %v757
        %1021 = vmatmul.mubr.f32.gmra.mrb[0].mxu0 %v756
        %v1022 = vpop.f32.mrb[0].mxu0
        %v1023 = vadd.f32 %v859, %v1022
        %v1024 = vpop.f32.mrb[0].mxu0
        %v1025 = vadd.f32 %v863, %v1024
        %1026 = vmatprep.mubr.f32.mxu0 %v759
        %1027 = vmatmul.mubr.f32.gmra.mrb[0].mxu0 %v758
        %v1028 = vpop.f32.mrb[0].mxu0
        %v1029 = vadd.f32 %v859, %v1028
        %v1030 = vpop.f32.mrb[0].mxu0
        %v1031 = vadd.f32 %v863, %v1030
        %1032 = vmatprep.mubr.f32.mxu0 %v761
        %1033 = vmatmul.mubr.f32.gmra.mrb[0].mxu0 %v760
        %v1034 = vpop.f32.mrb[0].mxu0
        %v1035 = vadd.f32 %v859, %v1034
        %v1036 = vpop.f32.mrb[0].mxu0
        %v1037 = vadd.f32 %v863, %v1036
        %1038 = vmatprep.mubr.f32.mxu0 %v763
        %1039 = vmatmul.mubr.f32.gmra.mrb[0].mxu0 %v762
        %v1040 = vpop.f32.mrb[0].mxu0
        %v1041 = vadd.f32 %v859, %v1040
        %v1042 = vpop.f32.mrb[0].mxu0
        %v1043 = vadd.f32 %v863, %v1042
        %1044 = vmatprep.mubr.f32.mxu0 %v765
        %1045 = vmatmul.mubr.f32.gmra.mrb[0].mxu0 %v764
        %v1046 = vpop.f32.mrb[0].mxu0
        %v1047 = vadd.f32 %v859, %v1046
        %v1048 = vpop.f32.mrb[0].mxu0
        %v1049 = vadd.f32 %v863, %v1048
        %1050 = vmatprep.mubr.f32.mxu0 %v767
        %1051 = vmatmul.mubr.f32.gmra.mrb[0].mxu0 %v766
        %v1052 = vpop.f32.mrb[0].mxu0
        %v1053 = vadd.f32 %v859, %v1052
        %v1054 = vpop.f32.mrb[0].mxu0
        %v1055 = vadd.f32 %v863, %v1054
        %1056 = vmatprep.mubr.f32.mxu0 %v769
        %1057 = vmatmul.mubr.f32.gmra.mrb[0].mxu0 %v768
        %v1058 = vpop.f32.mrb[0].mxu0
        %v1059 = vadd.f32 %v859, %v1058
        %v1060 = vpop.f32.mrb[0].mxu0
        %v1061 = vadd.f32 %v863, %v1060
        %1062 = vmatprep.mubr.f32.mxu0 %v771
        %1063 = vmatmul.mubr.f32.gmra.mrb[0].mxu0 %v770
        %v1064 = vpop.f32.mrb[0].mxu0
        %v1065 = vadd.f32 %v859, %v1064
        %v1066 = vpop.f32.mrb[0].mxu0
        %v1067 = vadd.f32 %v863, %v1066
        %1068 = vmatprep.mubr.f32.mxu0 %v773
        %1069 = vmatmul.mubr.f32.gmra.mrb[0].mxu0 %v772
        %v1070 = vpop.f32.mrb[0].mxu0
        %v1071 = vadd.f32 %v859, %v1070
        %v1072 = vpop.f32.mrb[0].mxu0
        %v1073 = vadd.f32 %v863, %v1072
        %1074 = vmatprep.mubr.f32.mxu0 %v775
        %1075 = vmatmul.mubr.f32.gmra.mrb[0].mxu0 %v774
        %v1076 = vpop.f32.mrb[0].mxu0
        %v1077 = vadd.f32 %v859, %v1076
        %v1078 = vpop.f32.mrb[0].mxu0
        %v1079 = vadd.f32 %v863, %v1078
        %1080 = vmatprep.mubr.f32.mxu0 %v777
        %1081 = vmatmul.mubr.f32.gmra.mrb[0].mxu0 %v776
        %v1082 = vpop.f32.mrb[0].mxu0
        %v1083 = vadd.f32 %v859, %v1082
        %v1084 = vpop.f32.mrb[0].mxu0
        %v1085 = vadd.f32 %v863, %v1084
        %1086 = vmatprep.mubr.f32.mxu0 %v779
        %1087 = vmatmul.mubr.f32.gmra.mrb[0].mxu0 %v778
        %v1088 = vpop.f32.mrb[0].mxu0
        %v1089 = vadd.f32 %v859, %v1088
        %v1090 = vpop.f32.mrb[0].mxu0
        %v1091 = vadd.f32 %v863, %v1090
        %1092 = vmatprep.mubr.f32.mxu0 %v781
        %1093 = vmatmul.mubr.f32.gmra.mrb[0].mxu0 %v780
        %v1094 = vpop.f32.mrb[0].mxu0
        %v1095 = vadd.f32 %v859, %v1094
        %v1096 = vpop.f32.mrb[0].mxu0
        %v1097 = vadd.f32 %v863, %v1096
        %1098 = vmatprep.mubr.f32.mxu0 %v783
        %1099 = vmatmul.mubr.f32.gmra.mrb[0].mxu0 %v782
        %v1100 = vpop.f32.mrb[0].mxu0
        %v1101 = vadd.f32 %v859, %v1100
        %v1102 = vpop.f32.mrb[0].mxu0
        %v1103 = vadd.f32 %v863, %v1102
        %1104 = vmatprep.mubr.f32.mxu0 %v785
        %1105 = vmatmul.mubr.f32.gmra.mrb[0].mxu0 %v784
        %v1106 = vpop.f32.mrb[0].mxu0
        %v1107 = vadd.f32 %v859, %v1106
        %v1108 = vpop.f32.mrb[0].mxu0
        %v1109 = vadd.f32 %v863, %v1108
        %1110 = vmatprep.mubr.f32.mxu0 %v787
        %1111 = vmatmul.mubr.f32.gmra.mrb[0].mxu0 %v786
        %v1112 = vpop.f32.mrb[0].mxu0
        %v1113 = vadd.f32 %v859, %v1112
        %v1114 = vpop.f32.mrb[0].mxu0
        %v1115 = vadd.f32 %v863, %v1114
        %1116 = vmatprep.mubr.f32.mxu0 %v789
        %1117 = vmatmul.mubr.f32.gmra.mrb[0].mxu0 %v788
        %v1118 = vpop.f32.mrb[0].mxu0
        %v1119 = vadd.f32 %v859, %v1118
        %v1120 = vpop.f32.mrb[0].mxu0
        %v1121 = vadd.f32 %v863, %v1120
        %1122 = vdwg.mxu0
        %v1123 = vmax.f32 %v933, 0.0
        %v1124 = vmax.f32 %v935, 0.0
        %v1125 = vmax.f32 %v939, 0.0
        %v1126 = vmax.f32 %v941, 0.0
        %v1127 = vmax.f32 %v945, 0.0
        %v1128 = vmax.f32 %v947, 0.0
        %v1129 = vmax.f32 %v951, 0.0
        %v1130 = vmax.f32 %v953, 0.0
        %v1131 = vmax.f32 %v957, 0.0
        %v1132 = vmax.f32 %v959, 0.0
        %v1133 = vmax.f32 %v963, 0.0
        %v1134 = vmax.f32 %v965, 0.0
        %v1135 = vmax.f32 %v969, 0.0
        %v1136 = vmax.f32 %v971, 0.0
        %v1137 = vmax.f32 %v975, 0.0
        %v1138 = vmax.f32 %v977, 0.0
        %v1139 = vmax.f32 %v981, 0.0
        %v1140 = vmax.f32 %v983, 0.0
        %v1141 = vmax.f32 %v987, 0.0
        %v1142 = vmax.f32 %v989, 0.0
        %v1143 = vmax.f32 %v993, 0.0
        %v1144 = vmax.f32 %v995, 0.0
        %v1145 = vmax.f32 %v999, 0.0
        %v1146 = vmax.f32 %v1001, 0.0
        %v1147 = vmax.f32 %v1005, 0.0
        %v1148 = vmax.f32 %v1007, 0.0
        %v1149 = vmax.f32 %v1011, 0.0
        %v1150 = vmax.f32 %v1013, 0.0
        %v1151 = vmax.f32 %v1017, 0.0
        %v1152 = vmax.f32 %v1019, 0.0
        %v1153 = vmax.f32 %v1023, 0.0
        %v1154 = vmax.f32 %v1025, 0.0
        %v1155 = vmax.f32 %v1029, 0.0
        %v1156 = vmax.f32 %v1031, 0.0
        %v1157 = vmax.f32 %v1035, 0.0
        %v1158 = vmax.f32 %v1037, 0.0
        %v1159 = vmax.f32 %v1041, 0.0
        %v1160 = vmax.f32 %v1043, 0.0
        %v1161 = vmax.f32 %v1047, 0.0
        %v1162 = vmax.f32 %v1049, 0.0
        %v1163 = vmax.f32 %v1053, 0.0
        %v1164 = vmax.f32 %v1055, 0.0
        %v1165 = vmax.f32 %v1059, 0.0
        %v1166 = vmax.f32 %v1061, 0.0
        %v1167 = vmax.f32 %v1065, 0.0
        %v1168 = vmax.f32 %v1067, 0.0
        %v1169 = vmax.f32 %v1071, 0.0
        %v1170 = vmax.f32 %v1073, 0.0
        %v1171 = vmax.f32 %v1077, 0.0
        %v1172 = vmax.f32 %v1079, 0.0
        %v1173 = vmax.f32 %v1083, 0.0
        %v1174 = vmax.f32 %v1085, 0.0
        %v1175 = vmax.f32 %v1089, 0.0
        %v1176 = vmax.f32 %v1091, 0.0
        %v1177 = vmax.f32 %v1095, 0.0
        %v1178 = vmax.f32 %v1097, 0.0
        %v1179 = vmax.f32 %v1101, 0.0
        %v1180 = vmax.f32 %v1103, 0.0
        %v1181 = vmax.f32 %v1107, 0.0
        %v1182 = vmax.f32 %v1109, 0.0
        %v1183 = vmax.f32 %v1113, 0.0
        %v1184 = vmax.f32 %v1115, 0.0
        %v1185 = vmax.f32 %v1119, 0.0
        %v1186 = vmax.f32 %v1121, 0.0
        %v1187 = vld [vmem:[%s5] sm:$0x3]
        %v1189 = vlaneseq
        %v1190 = vshrl.u32 %v1189, 7
        %v1191 = vsub.s32 0, %v1190
        %v1192 = vrot.slane %v1187, %v1191
        %v1193 = vlaneseq
        %v1194 = vshrl.u32 %v1193, 7
        %v1195 = vsub.s32 1, %v1194
        %v1196 = vrot.slane %v1187, %v1195
        %v1199 = vmul.f32 %v1123, %v1192
        %v1200 = vmul.f32 %v1124, %v1196
        %v1201 = vmul.f32 %v1125, %v1192
        %v1202 = vmul.f32 %v1126, %v1196
        %v1203 = vmul.f32 %v1127, %v1192
        %v1204 = vmul.f32 %v1128, %v1196
        %v1205 = vmul.f32 %v1129, %v1192
        %v1206 = vmul.f32 %v1130, %v1196
        %v1207 = vmul.f32 %v1131, %v1192
        %v1208 = vmul.f32 %v1132, %v1196
        %v1209 = vmul.f32 %v1133, %v1192
        %v1210 = vmul.f32 %v1134, %v1196
        %v1211 = vmul.f32 %v1135, %v1192
        %v1212 = vmul.f32 %v1136, %v1196
        %v1213 = vmul.f32 %v1137, %v1192
        %v1214 = vmul.f32 %v1138, %v1196
        %v1215 = vmul.f32 %v1139, %v1192
        %v1216 = vmul.f32 %v1140, %v1196
        %v1217 = vmul.f32 %v1141, %v1192
        %v1218 = vmul.f32 %v1142, %v1196
        %v1219 = vmul.f32 %v1143, %v1192
        %v1220 = vmul.f32 %v1144, %v1196
        %v1221 = vmul.f32 %v1145, %v1192
        %v1222 = vmul.f32 %v1146, %v1196
        %v1223 = vmul.f32 %v1147, %v1192
        %v1224 = vmul.f32 %v1148, %v1196
        %v1225 = vmul.f32 %v1149, %v1192
        %v1226 = vmul.f32 %v1150, %v1196
        %v1227 = vmul.f32 %v1151, %v1192
        %v1228 = vmul.f32 %v1152, %v1196
        %v1229 = vmul.f32 %v1153, %v1192
        %v1230 = vmul.f32 %v1154, %v1196
        %v1231 = vmul.f32 %v1155, %v1192
        %v1232 = vmul.f32 %v1156, %v1196
        %v1233 = vmul.f32 %v1157, %v1192
        %v1234 = vmul.f32 %v1158, %v1196
        %v1235 = vmul.f32 %v1159, %v1192
        %v1236 = vmul.f32 %v1160, %v1196
        %v1237 = vmul.f32 %v1161, %v1192
        %v1238 = vmul.f32 %v1162, %v1196
        %v1239 = vmul.f32 %v1163, %v1192
        %v1240 = vmul.f32 %v1164, %v1196
        %v1241 = vmul.f32 %v1165, %v1192
        %v1242 = vmul.f32 %v1166, %v1196
        %v1243 = vmul.f32 %v1167, %v1192
        %v1244 = vmul.f32 %v1168, %v1196
        %v1245 = vmul.f32 %v1169, %v1192
        %v1246 = vmul.f32 %v1170, %v1196
        %v1247 = vmul.f32 %v1171, %v1192
        %v1248 = vmul.f32 %v1172, %v1196
        %v1249 = vmul.f32 %v1173, %v1192
        %v1250 = vmul.f32 %v1174, %v1196
        %v1251 = vmul.f32 %v1175, %v1192
        %v1252 = vmul.f32 %v1176, %v1196
        %v1253 = vmul.f32 %v1177, %v1192
        %v1254 = vmul.f32 %v1178, %v1196
        %v1255 = vmul.f32 %v1179, %v1192
        %v1256 = vmul.f32 %v1180, %v1196
        %v1257 = vmul.f32 %v1181, %v1192
        %v1258 = vmul.f32 %v1182, %v1196
        %v1259 = vmul.f32 %v1183, %v1192
        %v1260 = vmul.f32 %v1184, %v1196
        %v1261 = vmul.f32 %v1185, %v1192
        %v1262 = vmul.f32 %v1186, %v1196
        %v1263 = vadd.f32 %v1199, %v1200
        %1264 = vadd.xlane.f32.xlu0 %v1263
        %v1265 = vpop.xlane.xlu0 %1264
        %v1266 = vadd.f32 %v1201, %v1202
        %1267 = vadd.xlane.f32.xlu0 %v1266
        %v1268 = vpop.xlane.xlu0 %1267
        %v1269 = vadd.f32 %v1203, %v1204
        %1270 = vadd.xlane.f32.xlu0 %v1269
        %v1271 = vpop.xlane.xlu0 %1270
        %v1272 = vadd.f32 %v1205, %v1206
        %1273 = vadd.xlane.f32.xlu0 %v1272
        %v1274 = vpop.xlane.xlu0 %1273
        %v1275 = vadd.f32 %v1207, %v1208
        %1276 = vadd.xlane.f32.xlu0 %v1275
        %v1277 = vpop.xlane.xlu0 %1276
        %v1278 = vadd.f32 %v1209, %v1210
        %1279 = vadd.xlane.f32.xlu0 %v1278
        %v1280 = vpop.xlane.xlu0 %1279
        %v1281 = vadd.f32 %v1211, %v1212
        %1282 = vadd.xlane.f32.xlu0 %v1281
        %v1283 = vpop.xlane.xlu0 %1282
        %v1284 = vadd.f32 %v1213, %v1214
        %1285 = vadd.xlane.f32.xlu0 %v1284
        %v1286 = vpop.xlane.xlu0 %1285
        %v1287 = vadd.f32 %v1215, %v1216
        %1288 = vadd.xlane.f32.xlu0 %v1287
        %v1289 = vpop.xlane.xlu0 %1288
        %v1290 = vadd.f32 %v1217, %v1218
        %1291 = vadd.xlane.f32.xlu0 %v1290
        %v1292 = vpop.xlane.xlu0 %1291
        %v1293 = vadd.f32 %v1219, %v1220
        %1294 = vadd.xlane.f32.xlu0 %v1293
        %v1295 = vpop.xlane.xlu0 %1294
        %v1296 = vadd.f32 %v1221, %v1222
        %1297 = vadd.xlane.f32.xlu0 %v1296
        %v1298 = vpop.xlane.xlu0 %1297
        %v1299 = vadd.f32 %v1223, %v1224
        %1300 = vadd.xlane.f32.xlu0 %v1299
        %v1301 = vpop.xlane.xlu0 %1300
        %v1302 = vadd.f32 %v1225, %v1226
        %1303 = vadd.xlane.f32.xlu0 %v1302
        %v1304 = vpop.xlane.xlu0 %1303
        %v1305 = vadd.f32 %v1227, %v1228
        %1306 = vadd.xlane.f32.xlu0 %v1305
        %v1307 = vpop.xlane.xlu0 %1306
        %v1308 = vadd.f32 %v1229, %v1230
        %1309 = vadd.xlane.f32.xlu0 %v1308
        %v1310 = vpop.xlane.xlu0 %1309
        %v1311 = vadd.f32 %v1231, %v1232
        %1312 = vadd.xlane.f32.xlu0 %v1311
        %v1313 = vpop.xlane.xlu0 %1312
        %v1314 = vadd.f32 %v1233, %v1234
        %1315 = vadd.xlane.f32.xlu0 %v1314
        %v1316 = vpop.xlane.xlu0 %1315
        %v1317 = vadd.f32 %v1235, %v1236
        %1318 = vadd.xlane.f32.xlu0 %v1317
        %v1319 = vpop.xlane.xlu0 %1318
        %v1320 = vadd.f32 %v1237, %v1238
        %1321 = vadd.xlane.f32.xlu0 %v1320
        %v1322 = vpop.xlane.xlu0 %1321
        %v1323 = vadd.f32 %v1239, %v1240
        %1324 = vadd.xlane.f32.xlu0 %v1323
        %v1325 = vpop.xlane.xlu0 %1324
        %v1326 = vadd.f32 %v1241, %v1242
        %1327 = vadd.xlane.f32.xlu0 %v1326
        %v1328 = vpop.xlane.xlu0 %1327
        %v1329 = vadd.f32 %v1243, %v1244
        %1330 = vadd.xlane.f32.xlu0 %v1329
        %v1331 = vpop.xlane.xlu0 %1330
        %v1332 = vadd.f32 %v1245, %v1246
        %1333 = vadd.xlane.f32.xlu0 %v1332
        %v1334 = vpop.xlane.xlu0 %1333
        %v1335 = vadd.f32 %v1247, %v1248
        %1336 = vadd.xlane.f32.xlu0 %v1335
        %v1337 = vpop.xlane.xlu0 %1336
        %v1338 = vadd.f32 %v1249, %v1250
        %1339 = vadd.xlane.f32.xlu0 %v1338
        %v1340 = vpop.xlane.xlu0 %1339
        %v1341 = vadd.f32 %v1251, %v1252
        %1342 = vadd.xlane.f32.xlu0 %v1341
        %v1343 = vpop.xlane.xlu0 %1342
        %v1344 = vadd.f32 %v1253, %v1254
        %1345 = vadd.xlane.f32.xlu0 %v1344
        %v1346 = vpop.xlane.xlu0 %1345
        %v1347 = vadd.f32 %v1255, %v1256
        %1348 = vadd.xlane.f32.xlu0 %v1347
        %v1349 = vpop.xlane.xlu0 %1348
        %v1350 = vadd.f32 %v1257, %v1258
        %1351 = vadd.xlane.f32.xlu0 %v1350
        %v1352 = vpop.xlane.xlu0 %1351
        %v1353 = vadd.f32 %v1259, %v1260
        %1354 = vadd.xlane.f32.xlu0 %v1353
        %v1355 = vpop.xlane.xlu0 %1354
        %v1356 = vadd.f32 %v1261, %v1262
        %1357 = vadd.xlane.f32.xlu0 %v1356
        %v1358 = vpop.xlane.xlu0 %1357
        %s1359 = sld [smem:[#allocation2]]
        %v1360 = vstv %s1359
        %v1361 = vadd.f32 %v1265, %v1360
        %v1362 = vadd.f32 %v1268, %v1360
        %v1363 = vadd.f32 %v1271, %v1360
        %v1364 = vadd.f32 %v1274, %v1360
        %v1365 = vadd.f32 %v1277, %v1360
        %v1366 = vadd.f32 %v1280, %v1360
        %v1367 = vadd.f32 %v1283, %v1360
        %v1368 = vadd.f32 %v1286, %v1360
        %v1369 = vadd.f32 %v1289, %v1360
        %v1370 = vadd.f32 %v1292, %v1360
        %v1371 = vadd.f32 %v1295, %v1360
        %v1372 = vadd.f32 %v1298, %v1360
        %v1373 = vadd.f32 %v1301, %v1360
        %v1374 = vadd.f32 %v1304, %v1360
        %v1375 = vadd.f32 %v1307, %v1360
        %v1376 = vadd.f32 %v1310, %v1360
        %v1377 = vadd.f32 %v1313, %v1360
        %v1378 = vadd.f32 %v1316, %v1360
        %v1379 = vadd.f32 %v1319, %v1360
        %v1380 = vadd.f32 %v1322, %v1360
        %v1381 = vadd.f32 %v1325, %v1360
        %v1382 = vadd.f32 %v1328, %v1360
        %v1383 = vadd.f32 %v1331, %v1360
        %v1384 = vadd.f32 %v1334, %v1360
        %v1385 = vadd.f32 %v1337, %v1360
        %v1386 = vadd.f32 %v1340, %v1360
        %v1387 = vadd.f32 %v1343, %v1360
        %v1388 = vadd.f32 %v1346, %v1360
        %v1389 = vadd.f32 %v1349, %v1360
        %v1390 = vadd.f32 %v1352, %v1360
        %v1391 = vadd.f32 %v1355, %v1360
        %v1392 = vadd.f32 %v1358, %v1360
        %v1425 = vlaneseq
        %v1426 = vshrl.u32 %v1425, 7
        %v1427 = vsub.s32 0, %v1426
        %v1428 = vrot.slane %v1361, %v1427
        %v1429 = vlaneseq
        %v1430 = vshrl.u32 %v1429, 7
        %v1431 = vsub.s32 1, %v1430
        %v1432 = vrot.slane %v1361, %v1431
        %v1433 = vlaneseq
        %v1434 = vshrl.u32 %v1433, 7
        %v1435 = vsub.s32 2, %v1434
        %v1436 = vrot.slane %v1361, %v1435
        %v1437 = vlaneseq
        %v1438 = vshrl.u32 %v1437, 7
        %v1439 = vsub.s32 3, %v1438
        %v1440 = vrot.slane %v1361, %v1439
        %v1441 = vlaneseq
        %v1442 = vshrl.u32 %v1441, 7
        %v1443 = vsub.s32 4, %v1442
        %v1444 = vrot.slane %v1361, %v1443
        %v1445 = vlaneseq
        %v1446 = vshrl.u32 %v1445, 7
        %v1447 = vsub.s32 5, %v1446
        %v1448 = vrot.slane %v1361, %v1447
        %v1449 = vlaneseq
        %v1450 = vshrl.u32 %v1449, 7
        %v1451 = vsub.s32 6, %v1450
        %v1452 = vrot.slane %v1361, %v1451
        %v1453 = vlaneseq
        %v1454 = vshrl.u32 %v1453, 7
        %v1455 = vsub.s32 7, %v1454
        %v1456 = vrot.slane %v1361, %v1455
        %v1457 = vlaneseq
        %v1458 = vshrl.u32 %v1457, 7
        %v1459 = vsub.s32 0, %v1458
        %v1460 = vrot.slane %v1362, %v1459
        %v1461 = vlaneseq
        %v1462 = vshrl.u32 %v1461, 7
        %v1463 = vsub.s32 1, %v1462
        %v1464 = vrot.slane %v1362, %v1463
        %v1465 = vlaneseq
        %v1466 = vshrl.u32 %v1465, 7
        %v1467 = vsub.s32 2, %v1466
        %v1468 = vrot.slane %v1362, %v1467
        %v1469 = vlaneseq
        %v1470 = vshrl.u32 %v1469, 7
        %v1471 = vsub.s32 3, %v1470
        %v1472 = vrot.slane %v1362, %v1471
        %v1473 = vlaneseq
        %v1474 = vshrl.u32 %v1473, 7
        %v1475 = vsub.s32 4, %v1474
        %v1476 = vrot.slane %v1362, %v1475
        %v1477 = vlaneseq
        %v1478 = vshrl.u32 %v1477, 7
        %v1479 = vsub.s32 5, %v1478
        %v1480 = vrot.slane %v1362, %v1479
        %v1481 = vlaneseq
        %v1482 = vshrl.u32 %v1481, 7
        %v1483 = vsub.s32 6, %v1482
        %v1484 = vrot.slane %v1362, %v1483
        %v1485 = vlaneseq
        %v1486 = vshrl.u32 %v1485, 7
        %v1487 = vsub.s32 7, %v1486
        %v1488 = vrot.slane %v1362, %v1487
        %v1489 = vlaneseq
        %v1490 = vshrl.u32 %v1489, 7
        %v1491 = vsub.s32 0, %v1490
        %v1492 = vrot.slane %v1363, %v1491
        %v1493 = vlaneseq
        %v1494 = vshrl.u32 %v1493, 7
        %v1495 = vsub.s32 1, %v1494
        %v1496 = vrot.slane %v1363, %v1495
        %v1497 = vlaneseq
        %v1498 = vshrl.u32 %v1497, 7
        %v1499 = vsub.s32 2, %v1498
        %v1500 = vrot.slane %v1363, %v1499
        %v1501 = vlaneseq
        %v1502 = vshrl.u32 %v1501, 7
        %v1503 = vsub.s32 3, %v1502
        %v1504 = vrot.slane %v1363, %v1503
        %v1505 = vlaneseq
        %v1506 = vshrl.u32 %v1505, 7
        %v1507 = vsub.s32 4, %v1506
        %v1508 = vrot.slane %v1363, %v1507
        %v1509 = vlaneseq
        %v1510 = vshrl.u32 %v1509, 7
        %v1511 = vsub.s32 5, %v1510
        %v1512 = vrot.slane %v1363, %v1511
        %v1513 = vlaneseq
        %v1514 = vshrl.u32 %v1513, 7
        %v1515 = vsub.s32 6, %v1514
        %v1516 = vrot.slane %v1363, %v1515
        %v1517 = vlaneseq
        %v1518 = vshrl.u32 %v1517, 7
        %v1519 = vsub.s32 7, %v1518
        %v1520 = vrot.slane %v1363, %v1519
        %v1521 = vlaneseq
        %v1522 = vshrl.u32 %v1521, 7
        %v1523 = vsub.s32 0, %v1522
        %v1524 = vrot.slane %v1364, %v1523
        %v1525 = vlaneseq
        %v1526 = vshrl.u32 %v1525, 7
        %v1527 = vsub.s32 1, %v1526
        %v1528 = vrot.slane %v1364, %v1527
        %v1529 = vlaneseq
        %v1530 = vshrl.u32 %v1529, 7
        %v1531 = vsub.s32 2, %v1530
        %v1532 = vrot.slane %v1364, %v1531
        %v1533 = vlaneseq
        %v1534 = vshrl.u32 %v1533, 7
        %v1535 = vsub.s32 3, %v1534
        %v1536 = vrot.slane %v1364, %v1535
        %v1537 = vlaneseq
        %v1538 = vshrl.u32 %v1537, 7
        %v1539 = vsub.s32 4, %v1538
        %v1540 = vrot.slane %v1364, %v1539
        %v1541 = vlaneseq
        %v1542 = vshrl.u32 %v1541, 7
        %v1543 = vsub.s32 5, %v1542
        %v1544 = vrot.slane %v1364, %v1543
        %v1545 = vlaneseq
        %v1546 = vshrl.u32 %v1545, 7
        %v1547 = vsub.s32 6, %v1546
        %v1548 = vrot.slane %v1364, %v1547
        %v1549 = vlaneseq
        %v1550 = vshrl.u32 %v1549, 7
        %v1551 = vsub.s32 7, %v1550
        %v1552 = vrot.slane %v1364, %v1551
        %v1553 = vlaneseq
        %v1554 = vshrl.u32 %v1553, 7
        %v1555 = vsub.s32 0, %v1554
        %v1556 = vrot.slane %v1365, %v1555
        %v1557 = vlaneseq
        %v1558 = vshrl.u32 %v1557, 7
        %v1559 = vsub.s32 1, %v1558
        %v1560 = vrot.slane %v1365, %v1559
        %v1561 = vlaneseq
        %v1562 = vshrl.u32 %v1561, 7
        %v1563 = vsub.s32 2, %v1562
        %v1564 = vrot.slane %v1365, %v1563
        %v1565 = vlaneseq
        %v1566 = vshrl.u32 %v1565, 7
        %v1567 = vsub.s32 3, %v1566
        %v1568 = vrot.slane %v1365, %v1567
        %v1569 = vlaneseq
        %v1570 = vshrl.u32 %v1569, 7
        %v1571 = vsub.s32 4, %v1570
        %v1572 = vrot.slane %v1365, %v1571
        %v1573 = vlaneseq
        %v1574 = vshrl.u32 %v1573, 7
        %v1575 = vsub.s32 5, %v1574
        %v1576 = vrot.slane %v1365, %v1575
        %v1577 = vlaneseq
        %v1578 = vshrl.u32 %v1577, 7
        %v1579 = vsub.s32 6, %v1578
        %v1580 = vrot.slane %v1365, %v1579
        %v1581 = vlaneseq
        %v1582 = vshrl.u32 %v1581, 7
        %v1583 = vsub.s32 7, %v1582
        %v1584 = vrot.slane %v1365, %v1583
        %v1585 = vlaneseq
        %v1586 = vshrl.u32 %v1585, 7
        %v1587 = vsub.s32 0, %v1586
        %v1588 = vrot.slane %v1366, %v1587
        %v1589 = vlaneseq
        %v1590 = vshrl.u32 %v1589, 7
        %v1591 = vsub.s32 1, %v1590
        %v1592 = vrot.slane %v1366, %v1591
        %v1593 = vlaneseq
        %v1594 = vshrl.u32 %v1593, 7
        %v1595 = vsub.s32 2, %v1594
        %v1596 = vrot.slane %v1366, %v1595
        %v1597 = vlaneseq
        %v1598 = vshrl.u32 %v1597, 7
        %v1599 = vsub.s32 3, %v1598
        %v1600 = vrot.slane %v1366, %v1599
        %v1601 = vlaneseq
        %v1602 = vshrl.u32 %v1601, 7
        %v1603 = vsub.s32 4, %v1602
        %v1604 = vrot.slane %v1366, %v1603
        %v1605 = vlaneseq
        %v1606 = vshrl.u32 %v1605, 7
        %v1607 = vsub.s32 5, %v1606
        %v1608 = vrot.slane %v1366, %v1607
        %v1609 = vlaneseq
        %v1610 = vshrl.u32 %v1609, 7
        %v1611 = vsub.s32 6, %v1610
        %v1612 = vrot.slane %v1366, %v1611
        %v1613 = vlaneseq
        %v1614 = vshrl.u32 %v1613, 7
        %v1615 = vsub.s32 7, %v1614
        %v1616 = vrot.slane %v1366, %v1615
        %v1617 = vlaneseq
        %v1618 = vshrl.u32 %v1617, 7
        %v1619 = vsub.s32 0, %v1618
        %v1620 = vrot.slane %v1367, %v1619
        %v1621 = vlaneseq
        %v1622 = vshrl.u32 %v1621, 7
        %v1623 = vsub.s32 1, %v1622
        %v1624 = vrot.slane %v1367, %v1623
        %v1625 = vlaneseq
        %v1626 = vshrl.u32 %v1625, 7
        %v1627 = vsub.s32 2, %v1626
        %v1628 = vrot.slane %v1367, %v1627
        %v1629 = vlaneseq
        %v1630 = vshrl.u32 %v1629, 7
        %v1631 = vsub.s32 3, %v1630
        %v1632 = vrot.slane %v1367, %v1631
        %v1633 = vlaneseq
        %v1634 = vshrl.u32 %v1633, 7
        %v1635 = vsub.s32 4, %v1634
        %v1636 = vrot.slane %v1367, %v1635
        %v1637 = vlaneseq
        %v1638 = vshrl.u32 %v1637, 7
        %v1639 = vsub.s32 5, %v1638
        %v1640 = vrot.slane %v1367, %v1639
        %v1641 = vlaneseq
        %v1642 = vshrl.u32 %v1641, 7
        %v1643 = vsub.s32 6, %v1642
        %v1644 = vrot.slane %v1367, %v1643
        %v1645 = vlaneseq
        %v1646 = vshrl.u32 %v1645, 7
        %v1647 = vsub.s32 7, %v1646
        %v1648 = vrot.slane %v1367, %v1647
        %v1649 = vlaneseq
        %v1650 = vshrl.u32 %v1649, 7
        %v1651 = vsub.s32 0, %v1650
        %v1652 = vrot.slane %v1368, %v1651
        %v1653 = vlaneseq
        %v1654 = vshrl.u32 %v1653, 7
        %v1655 = vsub.s32 1, %v1654
        %v1656 = vrot.slane %v1368, %v1655
        %v1657 = vlaneseq
        %v1658 = vshrl.u32 %v1657, 7
        %v1659 = vsub.s32 2, %v1658
        %v1660 = vrot.slane %v1368, %v1659
        %v1661 = vlaneseq
        %v1662 = vshrl.u32 %v1661, 7
        %v1663 = vsub.s32 3, %v1662
        %v1664 = vrot.slane %v1368, %v1663
        %v1665 = vlaneseq
        %v1666 = vshrl.u32 %v1665, 7
        %v1667 = vsub.s32 4, %v1666
        %v1668 = vrot.slane %v1368, %v1667
        %v1669 = vlaneseq
        %v1670 = vshrl.u32 %v1669, 7
        %v1671 = vsub.s32 5, %v1670
        %v1672 = vrot.slane %v1368, %v1671
        %v1673 = vlaneseq
        %v1674 = vshrl.u32 %v1673, 7
        %v1675 = vsub.s32 6, %v1674
        %v1676 = vrot.slane %v1368, %v1675
        %v1677 = vlaneseq
        %v1678 = vshrl.u32 %v1677, 7
        %v1679 = vsub.s32 7, %v1678
        %v1680 = vrot.slane %v1368, %v1679
        %v1681 = vlaneseq
        %v1682 = vshrl.u32 %v1681, 7
        %v1683 = vsub.s32 0, %v1682
        %v1684 = vrot.slane %v1369, %v1683
        %v1685 = vlaneseq
        %v1686 = vshrl.u32 %v1685, 7
        %v1687 = vsub.s32 1, %v1686
        %v1688 = vrot.slane %v1369, %v1687
        %v1689 = vlaneseq
        %v1690 = vshrl.u32 %v1689, 7
        %v1691 = vsub.s32 2, %v1690
        %v1692 = vrot.slane %v1369, %v1691
        %v1693 = vlaneseq
        %v1694 = vshrl.u32 %v1693, 7
        %v1695 = vsub.s32 3, %v1694
        %v1696 = vrot.slane %v1369, %v1695
        %v1697 = vlaneseq
        %v1698 = vshrl.u32 %v1697, 7
        %v1699 = vsub.s32 4, %v1698
        %v1700 = vrot.slane %v1369, %v1699
        %v1701 = vlaneseq
        %v1702 = vshrl.u32 %v1701, 7
        %v1703 = vsub.s32 5, %v1702
        %v1704 = vrot.slane %v1369, %v1703
        %v1705 = vlaneseq
        %v1706 = vshrl.u32 %v1705, 7
        %v1707 = vsub.s32 6, %v1706
        %v1708 = vrot.slane %v1369, %v1707
        %v1709 = vlaneseq
        %v1710 = vshrl.u32 %v1709, 7
        %v1711 = vsub.s32 7, %v1710
        %v1712 = vrot.slane %v1369, %v1711
        %v1713 = vlaneseq
        %v1714 = vshrl.u32 %v1713, 7
        %v1715 = vsub.s32 0, %v1714
        %v1716 = vrot.slane %v1370, %v1715
        %v1717 = vlaneseq
        %v1718 = vshrl.u32 %v1717, 7
        %v1719 = vsub.s32 1, %v1718
        %v1720 = vrot.slane %v1370, %v1719
        %v1721 = vlaneseq
        %v1722 = vshrl.u32 %v1721, 7
        %v1723 = vsub.s32 2, %v1722
        %v1724 = vrot.slane %v1370, %v1723
        %v1725 = vlaneseq
        %v1726 = vshrl.u32 %v1725, 7
        %v1727 = vsub.s32 3, %v1726
        %v1728 = vrot.slane %v1370, %v1727
        %v1729 = vlaneseq
        %v1730 = vshrl.u32 %v1729, 7
        %v1731 = vsub.s32 4, %v1730
        %v1732 = vrot.slane %v1370, %v1731
        %v1733 = vlaneseq
        %v1734 = vshrl.u32 %v1733, 7
        %v1735 = vsub.s32 5, %v1734
        %v1736 = vrot.slane %v1370, %v1735
        %v1737 = vlaneseq
        %v1738 = vshrl.u32 %v1737, 7
        %v1739 = vsub.s32 6, %v1738
        %v1740 = vrot.slane %v1370, %v1739
        %v1741 = vlaneseq
        %v1742 = vshrl.u32 %v1741, 7
        %v1743 = vsub.s32 7, %v1742
        %v1744 = vrot.slane %v1370, %v1743
        %v1745 = vlaneseq
        %v1746 = vshrl.u32 %v1745, 7
        %v1747 = vsub.s32 0, %v1746
        %v1748 = vrot.slane %v1371, %v1747
        %v1749 = vlaneseq
        %v1750 = vshrl.u32 %v1749, 7
        %v1751 = vsub.s32 1, %v1750
        %v1752 = vrot.slane %v1371, %v1751
        %v1753 = vlaneseq
        %v1754 = vshrl.u32 %v1753, 7
        %v1755 = vsub.s32 2, %v1754
        %v1756 = vrot.slane %v1371, %v1755
        %v1757 = vlaneseq
        %v1758 = vshrl.u32 %v1757, 7
        %v1759 = vsub.s32 3, %v1758
        %v1760 = vrot.slane %v1371, %v1759
        %v1761 = vlaneseq
        %v1762 = vshrl.u32 %v1761, 7
        %v1763 = vsub.s32 4, %v1762
        %v1764 = vrot.slane %v1371, %v1763
        %v1765 = vlaneseq
        %v1766 = vshrl.u32 %v1765, 7
        %v1767 = vsub.s32 5, %v1766
        %v1768 = vrot.slane %v1371, %v1767
        %v1769 = vlaneseq
        %v1770 = vshrl.u32 %v1769, 7
        %v1771 = vsub.s32 6, %v1770
        %v1772 = vrot.slane %v1371, %v1771
        %v1773 = vlaneseq
        %v1774 = vshrl.u32 %v1773, 7
        %v1775 = vsub.s32 7, %v1774
        %v1776 = vrot.slane %v1371, %v1775
        %v1777 = vlaneseq
        %v1778 = vshrl.u32 %v1777, 7
        %v1779 = vsub.s32 0, %v1778
        %v1780 = vrot.slane %v1372, %v1779
        %v1781 = vlaneseq
        %v1782 = vshrl.u32 %v1781, 7
        %v1783 = vsub.s32 1, %v1782
        %v1784 = vrot.slane %v1372, %v1783
        %v1785 = vlaneseq
        %v1786 = vshrl.u32 %v1785, 7
        %v1787 = vsub.s32 2, %v1786
        %v1788 = vrot.slane %v1372, %v1787
        %v1789 = vlaneseq
        %v1790 = vshrl.u32 %v1789, 7
        %v1791 = vsub.s32 3, %v1790
        %v1792 = vrot.slane %v1372, %v1791
        %v1793 = vlaneseq
        %v1794 = vshrl.u32 %v1793, 7
        %v1795 = vsub.s32 4, %v1794
        %v1796 = vrot.slane %v1372, %v1795
        %v1797 = vlaneseq
        %v1798 = vshrl.u32 %v1797, 7
        %v1799 = vsub.s32 5, %v1798
        %v1800 = vrot.slane %v1372, %v1799
        %v1801 = vlaneseq
        %v1802 = vshrl.u32 %v1801, 7
        %v1803 = vsub.s32 6, %v1802
        %v1804 = vrot.slane %v1372, %v1803
        %v1805 = vlaneseq
        %v1806 = vshrl.u32 %v1805, 7
        %v1807 = vsub.s32 7, %v1806
        %v1808 = vrot.slane %v1372, %v1807
        %v1809 = vlaneseq
        %v1810 = vshrl.u32 %v1809, 7
        %v1811 = vsub.s32 0, %v1810
        %v1812 = vrot.slane %v1373, %v1811
        %v1813 = vlaneseq
        %v1814 = vshrl.u32 %v1813, 7
        %v1815 = vsub.s32 1, %v1814
        %v1816 = vrot.slane %v1373, %v1815
        %v1817 = vlaneseq
        %v1818 = vshrl.u32 %v1817, 7
        %v1819 = vsub.s32 2, %v1818
        %v1820 = vrot.slane %v1373, %v1819
        %v1821 = vlaneseq
        %v1822 = vshrl.u32 %v1821, 7
        %v1823 = vsub.s32 3, %v1822
        %v1824 = vrot.slane %v1373, %v1823
        %v1825 = vlaneseq
        %v1826 = vshrl.u32 %v1825, 7
        %v1827 = vsub.s32 4, %v1826
        %v1828 = vrot.slane %v1373, %v1827
        %v1829 = vlaneseq
        %v1830 = vshrl.u32 %v1829, 7
        %v1831 = vsub.s32 5, %v1830
        %v1832 = vrot.slane %v1373, %v1831
        %v1833 = vlaneseq
        %v1834 = vshrl.u32 %v1833, 7
        %v1835 = vsub.s32 6, %v1834
        %v1836 = vrot.slane %v1373, %v1835
        %v1837 = vlaneseq
        %v1838 = vshrl.u32 %v1837, 7
        %v1839 = vsub.s32 7, %v1838
        %v1840 = vrot.slane %v1373, %v1839
        %v1841 = vlaneseq
        %v1842 = vshrl.u32 %v1841, 7
        %v1843 = vsub.s32 0, %v1842
        %v1844 = vrot.slane %v1374, %v1843
        %v1845 = vlaneseq
        %v1846 = vshrl.u32 %v1845, 7
        %v1847 = vsub.s32 1, %v1846
        %v1848 = vrot.slane %v1374, %v1847
        %v1849 = vlaneseq
        %v1850 = vshrl.u32 %v1849, 7
        %v1851 = vsub.s32 2, %v1850
        %v1852 = vrot.slane %v1374, %v1851
        %v1853 = vlaneseq
        %v1854 = vshrl.u32 %v1853, 7
        %v1855 = vsub.s32 3, %v1854
        %v1856 = vrot.slane %v1374, %v1855
        %v1857 = vlaneseq
        %v1858 = vshrl.u32 %v1857, 7
        %v1859 = vsub.s32 4, %v1858
        %v1860 = vrot.slane %v1374, %v1859
        %v1861 = vlaneseq
        %v1862 = vshrl.u32 %v1861, 7
        %v1863 = vsub.s32 5, %v1862
        %v1864 = vrot.slane %v1374, %v1863
        %v1865 = vlaneseq
        %v1866 = vshrl.u32 %v1865, 7
        %v1867 = vsub.s32 6, %v1866
        %v1868 = vrot.slane %v1374, %v1867
        %v1869 = vlaneseq
        %v1870 = vshrl.u32 %v1869, 7
        %v1871 = vsub.s32 7, %v1870
        %v1872 = vrot.slane %v1374, %v1871
        %v1873 = vlaneseq
        %v1874 = vshrl.u32 %v1873, 7
        %v1875 = vsub.s32 0, %v1874
        %v1876 = vrot.slane %v1375, %v1875
        %v1877 = vlaneseq
        %v1878 = vshrl.u32 %v1877, 7
        %v1879 = vsub.s32 1, %v1878
        %v1880 = vrot.slane %v1375, %v1879
        %v1881 = vlaneseq
        %v1882 = vshrl.u32 %v1881, 7
        %v1883 = vsub.s32 2, %v1882
        %v1884 = vrot.slane %v1375, %v1883
        %v1885 = vlaneseq
        %v1886 = vshrl.u32 %v1885, 7
        %v1887 = vsub.s32 3, %v1886
        %v1888 = vrot.slane %v1375, %v1887
        %v1889 = vlaneseq
        %v1890 = vshrl.u32 %v1889, 7
        %v1891 = vsub.s32 4, %v1890
        %v1892 = vrot.slane %v1375, %v1891
        %v1893 = vlaneseq
        %v1894 = vshrl.u32 %v1893, 7
        %v1895 = vsub.s32 5, %v1894
        %v1896 = vrot.slane %v1375, %v1895
        %v1897 = vlaneseq
        %v1898 = vshrl.u32 %v1897, 7
        %v1899 = vsub.s32 6, %v1898
        %v1900 = vrot.slane %v1375, %v1899
        %v1901 = vlaneseq
        %v1902 = vshrl.u32 %v1901, 7
        %v1903 = vsub.s32 7, %v1902
        %v1904 = vrot.slane %v1375, %v1903
        %v1905 = vlaneseq
        %v1906 = vshrl.u32 %v1905, 7
        %v1907 = vsub.s32 0, %v1906
        %v1908 = vrot.slane %v1376, %v1907
        %v1909 = vlaneseq
        %v1910 = vshrl.u32 %v1909, 7
        %v1911 = vsub.s32 1, %v1910
        %v1912 = vrot.slane %v1376, %v1911
        %v1913 = vlaneseq
        %v1914 = vshrl.u32 %v1913, 7
        %v1915 = vsub.s32 2, %v1914
        %v1916 = vrot.slane %v1376, %v1915
        %v1917 = vlaneseq
        %v1918 = vshrl.u32 %v1917, 7
        %v1919 = vsub.s32 3, %v1918
        %v1920 = vrot.slane %v1376, %v1919
        %v1921 = vlaneseq
        %v1922 = vshrl.u32 %v1921, 7
        %v1923 = vsub.s32 4, %v1922
        %v1924 = vrot.slane %v1376, %v1923
        %v1925 = vlaneseq
        %v1926 = vshrl.u32 %v1925, 7
        %v1927 = vsub.s32 5, %v1926
        %v1928 = vrot.slane %v1376, %v1927
        %v1929 = vlaneseq
        %v1930 = vshrl.u32 %v1929, 7
        %v1931 = vsub.s32 6, %v1930
        %v1932 = vrot.slane %v1376, %v1931
        %v1933 = vlaneseq
        %v1934 = vshrl.u32 %v1933, 7
        %v1935 = vsub.s32 7, %v1934
        %v1936 = vrot.slane %v1376, %v1935
        %v1937 = vlaneseq
        %v1938 = vshrl.u32 %v1937, 7
        %v1939 = vsub.s32 0, %v1938
        %v1940 = vrot.slane %v1377, %v1939
        %v1941 = vlaneseq
        %v1942 = vshrl.u32 %v1941, 7
        %v1943 = vsub.s32 1, %v1942
        %v1944 = vrot.slane %v1377, %v1943
        %v1945 = vlaneseq
        %v1946 = vshrl.u32 %v1945, 7
        %v1947 = vsub.s32 2, %v1946
        %v1948 = vrot.slane %v1377, %v1947
        %v1949 = vlaneseq
        %v1950 = vshrl.u32 %v1949, 7
        %v1951 = vsub.s32 3, %v1950
        %v1952 = vrot.slane %v1377, %v1951
        %v1953 = vlaneseq
        %v1954 = vshrl.u32 %v1953, 7
        %v1955 = vsub.s32 4, %v1954
        %v1956 = vrot.slane %v1377, %v1955
        %v1957 = vlaneseq
        %v1958 = vshrl.u32 %v1957, 7
        %v1959 = vsub.s32 5, %v1958
        %v1960 = vrot.slane %v1377, %v1959
        %v1961 = vlaneseq
        %v1962 = vshrl.u32 %v1961, 7
        %v1963 = vsub.s32 6, %v1962
        %v1964 = vrot.slane %v1377, %v1963
        %v1965 = vlaneseq
        %v1966 = vshrl.u32 %v1965, 7
        %v1967 = vsub.s32 7, %v1966
        %v1968 = vrot.slane %v1377, %v1967
        %v1969 = vlaneseq
        %v1970 = vshrl.u32 %v1969, 7
        %v1971 = vsub.s32 0, %v1970
        %v1972 = vrot.slane %v1378, %v1971
        %v1973 = vlaneseq
        %v1974 = vshrl.u32 %v1973, 7
        %v1975 = vsub.s32 1, %v1974
        %v1976 = vrot.slane %v1378, %v1975
        %v1977 = vlaneseq
        %v1978 = vshrl.u32 %v1977, 7
        %v1979 = vsub.s32 2, %v1978
        %v1980 = vrot.slane %v1378, %v1979
        %v1981 = vlaneseq
        %v1982 = vshrl.u32 %v1981, 7
        %v1983 = vsub.s32 3, %v1982
        %v1984 = vrot.slane %v1378, %v1983
        %v1985 = vlaneseq
        %v1986 = vshrl.u32 %v1985, 7
        %v1987 = vsub.s32 4, %v1986
        %v1988 = vrot.slane %v1378, %v1987
        %v1989 = vlaneseq
        %v1990 = vshrl.u32 %v1989, 7
        %v1991 = vsub.s32 5, %v1990
        %v1992 = vrot.slane %v1378, %v1991
        %v1993 = vlaneseq
        %v1994 = vshrl.u32 %v1993, 7
        %v1995 = vsub.s32 6, %v1994
        %v1996 = vrot.slane %v1378, %v1995
        %v1997 = vlaneseq
        %v1998 = vshrl.u32 %v1997, 7
        %v1999 = vsub.s32 7, %v1998
        %v2000 = vrot.slane %v1378, %v1999
        %v2001 = vlaneseq
        %v2002 = vshrl.u32 %v2001, 7
        %v2003 = vsub.s32 0, %v2002
        %v2004 = vrot.slane %v1379, %v2003
        %v2005 = vlaneseq
        %v2006 = vshrl.u32 %v2005, 7
        %v2007 = vsub.s32 1, %v2006
        %v2008 = vrot.slane %v1379, %v2007
        %v2009 = vlaneseq
        %v2010 = vshrl.u32 %v2009, 7
        %v2011 = vsub.s32 2, %v2010
        %v2012 = vrot.slane %v1379, %v2011
        %v2013 = vlaneseq
        %v2014 = vshrl.u32 %v2013, 7
        %v2015 = vsub.s32 3, %v2014
        %v2016 = vrot.slane %v1379, %v2015
        %v2017 = vlaneseq
        %v2018 = vshrl.u32 %v2017, 7
        %v2019 = vsub.s32 4, %v2018
        %v2020 = vrot.slane %v1379, %v2019
        %v2021 = vlaneseq
        %v2022 = vshrl.u32 %v2021, 7
        %v2023 = vsub.s32 5, %v2022
        %v2024 = vrot.slane %v1379, %v2023
        %v2025 = vlaneseq
        %v2026 = vshrl.u32 %v2025, 7
        %v2027 = vsub.s32 6, %v2026
        %v2028 = vrot.slane %v1379, %v2027
        %v2029 = vlaneseq
        %v2030 = vshrl.u32 %v2029, 7
        %v2031 = vsub.s32 7, %v2030
        %v2032 = vrot.slane %v1379, %v2031
        %v2033 = vlaneseq
        %v2034 = vshrl.u32 %v2033, 7
        %v2035 = vsub.s32 0, %v2034
        %v2036 = vrot.slane %v1380, %v2035
        %v2037 = vlaneseq
        %v2038 = vshrl.u32 %v2037, 7
        %v2039 = vsub.s32 1, %v2038
        %v2040 = vrot.slane %v1380, %v2039
        %v2041 = vlaneseq
        %v2042 = vshrl.u32 %v2041, 7
        %v2043 = vsub.s32 2, %v2042
        %v2044 = vrot.slane %v1380, %v2043
        %v2045 = vlaneseq
        %v2046 = vshrl.u32 %v2045, 7
        %v2047 = vsub.s32 3, %v2046
        %v2048 = vrot.slane %v1380, %v2047
        %v2049 = vlaneseq
        %v2050 = vshrl.u32 %v2049, 7
        %v2051 = vsub.s32 4, %v2050
        %v2052 = vrot.slane %v1380, %v2051
        %v2053 = vlaneseq
        %v2054 = vshrl.u32 %v2053, 7
        %v2055 = vsub.s32 5, %v2054
        %v2056 = vrot.slane %v1380, %v2055
        %v2057 = vlaneseq
        %v2058 = vshrl.u32 %v2057, 7
        %v2059 = vsub.s32 6, %v2058
        %v2060 = vrot.slane %v1380, %v2059
        %v2061 = vlaneseq
        %v2062 = vshrl.u32 %v2061, 7
        %v2063 = vsub.s32 7, %v2062
        %v2064 = vrot.slane %v1380, %v2063
        %v2065 = vlaneseq
        %v2066 = vshrl.u32 %v2065, 7
        %v2067 = vsub.s32 0, %v2066
        %v2068 = vrot.slane %v1381, %v2067
        %v2069 = vlaneseq
        %v2070 = vshrl.u32 %v2069, 7
        %v2071 = vsub.s32 1, %v2070
        %v2072 = vrot.slane %v1381, %v2071
        %v2073 = vlaneseq
        %v2074 = vshrl.u32 %v2073, 7
        %v2075 = vsub.s32 2, %v2074
        %v2076 = vrot.slane %v1381, %v2075
        %v2077 = vlaneseq
        %v2078 = vshrl.u32 %v2077, 7
        %v2079 = vsub.s32 3, %v2078
        %v2080 = vrot.slane %v1381, %v2079
        %v2081 = vlaneseq
        %v2082 = vshrl.u32 %v2081, 7
        %v2083 = vsub.s32 4, %v2082
        %v2084 = vrot.slane %v1381, %v2083
        %v2085 = vlaneseq
        %v2086 = vshrl.u32 %v2085, 7
        %v2087 = vsub.s32 5, %v2086
        %v2088 = vrot.slane %v1381, %v2087
        %v2089 = vlaneseq
        %v2090 = vshrl.u32 %v2089, 7
        %v2091 = vsub.s32 6, %v2090
        %v2092 = vrot.slane %v1381, %v2091
        %v2093 = vlaneseq
        %v2094 = vshrl.u32 %v2093, 7
        %v2095 = vsub.s32 7, %v2094
        %v2096 = vrot.slane %v1381, %v2095
        %v2097 = vlaneseq
        %v2098 = vshrl.u32 %v2097, 7
        %v2099 = vsub.s32 0, %v2098
        %v2100 = vrot.slane %v1382, %v2099
        %v2101 = vlaneseq
        %v2102 = vshrl.u32 %v2101, 7
        %v2103 = vsub.s32 1, %v2102
        %v2104 = vrot.slane %v1382, %v2103
        %v2105 = vlaneseq
        %v2106 = vshrl.u32 %v2105, 7
        %v2107 = vsub.s32 2, %v2106
        %v2108 = vrot.slane %v1382, %v2107
        %v2109 = vlaneseq
        %v2110 = vshrl.u32 %v2109, 7
        %v2111 = vsub.s32 3, %v2110
        %v2112 = vrot.slane %v1382, %v2111
        %v2113 = vlaneseq
        %v2114 = vshrl.u32 %v2113, 7
        %v2115 = vsub.s32 4, %v2114
        %v2116 = vrot.slane %v1382, %v2115
        %v2117 = vlaneseq
        %v2118 = vshrl.u32 %v2117, 7
        %v2119 = vsub.s32 5, %v2118
        %v2120 = vrot.slane %v1382, %v2119
        %v2121 = vlaneseq
        %v2122 = vshrl.u32 %v2121, 7
        %v2123 = vsub.s32 6, %v2122
        %v2124 = vrot.slane %v1382, %v2123
        %v2125 = vlaneseq
        %v2126 = vshrl.u32 %v2125, 7
        %v2127 = vsub.s32 7, %v2126
        %v2128 = vrot.slane %v1382, %v2127
        %v2129 = vlaneseq
        %v2130 = vshrl.u32 %v2129, 7
        %v2131 = vsub.s32 0, %v2130
        %v2132 = vrot.slane %v1383, %v2131
        %v2133 = vlaneseq
        %v2134 = vshrl.u32 %v2133, 7
        %v2135 = vsub.s32 1, %v2134
        %v2136 = vrot.slane %v1383, %v2135
        %v2137 = vlaneseq
        %v2138 = vshrl.u32 %v2137, 7
        %v2139 = vsub.s32 2, %v2138
        %v2140 = vrot.slane %v1383, %v2139
        %v2141 = vlaneseq
        %v2142 = vshrl.u32 %v2141, 7
        %v2143 = vsub.s32 3, %v2142
        %v2144 = vrot.slane %v1383, %v2143
        %v2145 = vlaneseq
        %v2146 = vshrl.u32 %v2145, 7
        %v2147 = vsub.s32 4, %v2146
        %v2148 = vrot.slane %v1383, %v2147
        %v2149 = vlaneseq
        %v2150 = vshrl.u32 %v2149, 7
        %v2151 = vsub.s32 5, %v2150
        %v2152 = vrot.slane %v1383, %v2151
        %v2153 = vlaneseq
        %v2154 = vshrl.u32 %v2153, 7
        %v2155 = vsub.s32 6, %v2154
        %v2156 = vrot.slane %v1383, %v2155
        %v2157 = vlaneseq
        %v2158 = vshrl.u32 %v2157, 7
        %v2159 = vsub.s32 7, %v2158
        %v2160 = vrot.slane %v1383, %v2159
        %v2161 = vlaneseq
        %v2162 = vshrl.u32 %v2161, 7
        %v2163 = vsub.s32 0, %v2162
        %v2164 = vrot.slane %v1384, %v2163
        %v2165 = vlaneseq
        %v2166 = vshrl.u32 %v2165, 7
        %v2167 = vsub.s32 1, %v2166
        %v2168 = vrot.slane %v1384, %v2167
        %v2169 = vlaneseq
        %v2170 = vshrl.u32 %v2169, 7
        %v2171 = vsub.s32 2, %v2170
        %v2172 = vrot.slane %v1384, %v2171
        %v2173 = vlaneseq
        %v2174 = vshrl.u32 %v2173, 7
        %v2175 = vsub.s32 3, %v2174
        %v2176 = vrot.slane %v1384, %v2175
        %v2177 = vlaneseq
        %v2178 = vshrl.u32 %v2177, 7
        %v2179 = vsub.s32 4, %v2178
        %v2180 = vrot.slane %v1384, %v2179
        %v2181 = vlaneseq
        %v2182 = vshrl.u32 %v2181, 7
        %v2183 = vsub.s32 5, %v2182
        %v2184 = vrot.slane %v1384, %v2183
        %v2185 = vlaneseq
        %v2186 = vshrl.u32 %v2185, 7
        %v2187 = vsub.s32 6, %v2186
        %v2188 = vrot.slane %v1384, %v2187
        %v2189 = vlaneseq
        %v2190 = vshrl.u32 %v2189, 7
        %v2191 = vsub.s32 7, %v2190
        %v2192 = vrot.slane %v1384, %v2191
        %v2193 = vlaneseq
        %v2194 = vshrl.u32 %v2193, 7
        %v2195 = vsub.s32 0, %v2194
        %v2196 = vrot.slane %v1385, %v2195
        %v2197 = vlaneseq
        %v2198 = vshrl.u32 %v2197, 7
        %v2199 = vsub.s32 1, %v2198
        %v2200 = vrot.slane %v1385, %v2199
        %v2201 = vlaneseq
        %v2202 = vshrl.u32 %v2201, 7
        %v2203 = vsub.s32 2, %v2202
        %v2204 = vrot.slane %v1385, %v2203
        %v2205 = vlaneseq
        %v2206 = vshrl.u32 %v2205, 7
        %v2207 = vsub.s32 3, %v2206
        %v2208 = vrot.slane %v1385, %v2207
        %v2209 = vlaneseq
        %v2210 = vshrl.u32 %v2209, 7
        %v2211 = vsub.s32 4, %v2210
        %v2212 = vrot.slane %v1385, %v2211
        %v2213 = vlaneseq
        %v2214 = vshrl.u32 %v2213, 7
        %v2215 = vsub.s32 5, %v2214
        %v2216 = vrot.slane %v1385, %v2215
        %v2217 = vlaneseq
        %v2218 = vshrl.u32 %v2217, 7
        %v2219 = vsub.s32 6, %v2218
        %v2220 = vrot.slane %v1385, %v2219
        %v2221 = vlaneseq
        %v2222 = vshrl.u32 %v2221, 7
        %v2223 = vsub.s32 7, %v2222
        %v2224 = vrot.slane %v1385, %v2223
        %v2225 = vlaneseq
        %v2226 = vshrl.u32 %v2225, 7
        %v2227 = vsub.s32 0, %v2226
        %v2228 = vrot.slane %v1386, %v2227
        %v2229 = vlaneseq
        %v2230 = vshrl.u32 %v2229, 7
        %v2231 = vsub.s32 1, %v2230
        %v2232 = vrot.slane %v1386, %v2231
        %v2233 = vlaneseq
        %v2234 = vshrl.u32 %v2233, 7
        %v2235 = vsub.s32 2, %v2234
        %v2236 = vrot.slane %v1386, %v2235
        %v2237 = vlaneseq
        %v2238 = vshrl.u32 %v2237, 7
        %v2239 = vsub.s32 3, %v2238
        %v2240 = vrot.slane %v1386, %v2239
        %v2241 = vlaneseq
        %v2242 = vshrl.u32 %v2241, 7
        %v2243 = vsub.s32 4, %v2242
        %v2244 = vrot.slane %v1386, %v2243
        %v2245 = vlaneseq
        %v2246 = vshrl.u32 %v2245, 7
        %v2247 = vsub.s32 5, %v2246
        %v2248 = vrot.slane %v1386, %v2247
        %v2249 = vlaneseq
        %v2250 = vshrl.u32 %v2249, 7
        %v2251 = vsub.s32 6, %v2250
        %v2252 = vrot.slane %v1386, %v2251
        %v2253 = vlaneseq
        %v2254 = vshrl.u32 %v2253, 7
        %v2255 = vsub.s32 7, %v2254
        %v2256 = vrot.slane %v1386, %v2255
        %v2257 = vlaneseq
        %v2258 = vshrl.u32 %v2257, 7
        %v2259 = vsub.s32 0, %v2258
        %v2260 = vrot.slane %v1387, %v2259
        %v2261 = vlaneseq
        %v2262 = vshrl.u32 %v2261, 7
        %v2263 = vsub.s32 1, %v2262
        %v2264 = vrot.slane %v1387, %v2263
        %v2265 = vlaneseq
        %v2266 = vshrl.u32 %v2265, 7
        %v2267 = vsub.s32 2, %v2266
        %v2268 = vrot.slane %v1387, %v2267
        %v2269 = vlaneseq
        %v2270 = vshrl.u32 %v2269, 7
        %v2271 = vsub.s32 3, %v2270
        %v2272 = vrot.slane %v1387, %v2271
        %v2273 = vlaneseq
        %v2274 = vshrl.u32 %v2273, 7
        %v2275 = vsub.s32 4, %v2274
        %v2276 = vrot.slane %v1387, %v2275
        %v2277 = vlaneseq
        %v2278 = vshrl.u32 %v2277, 7
        %v2279 = vsub.s32 5, %v2278
        %v2280 = vrot.slane %v1387, %v2279
        %v2281 = vlaneseq
        %v2282 = vshrl.u32 %v2281, 7
        %v2283 = vsub.s32 6, %v2282
        %v2284 = vrot.slane %v1387, %v2283
        %v2285 = vlaneseq
        %v2286 = vshrl.u32 %v2285, 7
        %v2287 = vsub.s32 7, %v2286
        %v2288 = vrot.slane %v1387, %v2287
        %v2289 = vlaneseq
        %v2290 = vshrl.u32 %v2289, 7
        %v2291 = vsub.s32 0, %v2290
        %v2292 = vrot.slane %v1388, %v2291
        %v2293 = vlaneseq
        %v2294 = vshrl.u32 %v2293, 7
        %v2295 = vsub.s32 1, %v2294
        %v2296 = vrot.slane %v1388, %v2295
        %v2297 = vlaneseq
        %v2298 = vshrl.u32 %v2297, 7
        %v2299 = vsub.s32 2, %v2298
        %v2300 = vrot.slane %v1388, %v2299
        %v2301 = vlaneseq
        %v2302 = vshrl.u32 %v2301, 7
        %v2303 = vsub.s32 3, %v2302
        %v2304 = vrot.slane %v1388, %v2303
        %v2305 = vlaneseq
        %v2306 = vshrl.u32 %v2305, 7
        %v2307 = vsub.s32 4, %v2306
        %v2308 = vrot.slane %v1388, %v2307
        %v2309 = vlaneseq
        %v2310 = vshrl.u32 %v2309, 7
        %v2311 = vsub.s32 5, %v2310
        %v2312 = vrot.slane %v1388, %v2311
        %v2313 = vlaneseq
        %v2314 = vshrl.u32 %v2313, 7
        %v2315 = vsub.s32 6, %v2314
        %v2316 = vrot.slane %v1388, %v2315
        %v2317 = vlaneseq
        %v2318 = vshrl.u32 %v2317, 7
        %v2319 = vsub.s32 7, %v2318
        %v2320 = vrot.slane %v1388, %v2319
        %v2321 = vlaneseq
        %v2322 = vshrl.u32 %v2321, 7
        %v2323 = vsub.s32 0, %v2322
        %v2324 = vrot.slane %v1389, %v2323
        %v2325 = vlaneseq
        %v2326 = vshrl.u32 %v2325, 7
        %v2327 = vsub.s32 1, %v2326
        %v2328 = vrot.slane %v1389, %v2327
        %v2329 = vlaneseq
        %v2330 = vshrl.u32 %v2329, 7
        %v2331 = vsub.s32 2, %v2330
        %v2332 = vrot.slane %v1389, %v2331
        %v2333 = vlaneseq
        %v2334 = vshrl.u32 %v2333, 7
        %v2335 = vsub.s32 3, %v2334
        %v2336 = vrot.slane %v1389, %v2335
        %v2337 = vlaneseq
        %v2338 = vshrl.u32 %v2337, 7
        %v2339 = vsub.s32 4, %v2338
        %v2340 = vrot.slane %v1389, %v2339
        %v2341 = vlaneseq
        %v2342 = vshrl.u32 %v2341, 7
        %v2343 = vsub.s32 5, %v2342
        %v2344 = vrot.slane %v1389, %v2343
        %v2345 = vlaneseq
        %v2346 = vshrl.u32 %v2345, 7
        %v2347 = vsub.s32 6, %v2346
        %v2348 = vrot.slane %v1389, %v2347
        %v2349 = vlaneseq
        %v2350 = vshrl.u32 %v2349, 7
        %v2351 = vsub.s32 7, %v2350
        %v2352 = vrot.slane %v1389, %v2351
        %v2353 = vlaneseq
        %v2354 = vshrl.u32 %v2353, 7
        %v2355 = vsub.s32 0, %v2354
        %v2356 = vrot.slane %v1390, %v2355
        %v2357 = vlaneseq
        %v2358 = vshrl.u32 %v2357, 7
        %v2359 = vsub.s32 1, %v2358
        %v2360 = vrot.slane %v1390, %v2359
        %v2361 = vlaneseq
        %v2362 = vshrl.u32 %v2361, 7
        %v2363 = vsub.s32 2, %v2362
        %v2364 = vrot.slane %v1390, %v2363
        %v2365 = vlaneseq
        %v2366 = vshrl.u32 %v2365, 7
        %v2367 = vsub.s32 3, %v2366
        %v2368 = vrot.slane %v1390, %v2367
        %v2369 = vlaneseq
        %v2370 = vshrl.u32 %v2369, 7
        %v2371 = vsub.s32 4, %v2370
        %v2372 = vrot.slane %v1390, %v2371
        %v2373 = vlaneseq
        %v2374 = vshrl.u32 %v2373, 7
        %v2375 = vsub.s32 5, %v2374
        %v2376 = vrot.slane %v1390, %v2375
        %v2377 = vlaneseq
        %v2378 = vshrl.u32 %v2377, 7
        %v2379 = vsub.s32 6, %v2378
        %v2380 = vrot.slane %v1390, %v2379
        %v2381 = vlaneseq
        %v2382 = vshrl.u32 %v2381, 7
        %v2383 = vsub.s32 7, %v2382
        %v2384 = vrot.slane %v1390, %v2383
        %v2385 = vlaneseq
        %v2386 = vshrl.u32 %v2385, 7
        %v2387 = vsub.s32 0, %v2386
        %v2388 = vrot.slane %v1391, %v2387
        %v2389 = vlaneseq
        %v2390 = vshrl.u32 %v2389, 7
        %v2391 = vsub.s32 1, %v2390
        %v2392 = vrot.slane %v1391, %v2391
        %v2393 = vlaneseq
        %v2394 = vshrl.u32 %v2393, 7
        %v2395 = vsub.s32 2, %v2394
        %v2396 = vrot.slane %v1391, %v2395
        %v2397 = vlaneseq
        %v2398 = vshrl.u32 %v2397, 7
        %v2399 = vsub.s32 3, %v2398
        %v2400 = vrot.slane %v1391, %v2399
        %v2401 = vlaneseq
        %v2402 = vshrl.u32 %v2401, 7
        %v2403 = vsub.s32 4, %v2402
        %v2404 = vrot.slane %v1391, %v2403
        %v2405 = vlaneseq
        %v2406 = vshrl.u32 %v2405, 7
        %v2407 = vsub.s32 5, %v2406
        %v2408 = vrot.slane %v1391, %v2407
        %v2409 = vlaneseq
        %v2410 = vshrl.u32 %v2409, 7
        %v2411 = vsub.s32 6, %v2410
        %v2412 = vrot.slane %v1391, %v2411
        %v2413 = vlaneseq
        %v2414 = vshrl.u32 %v2413, 7
        %v2415 = vsub.s32 7, %v2414
        %v2416 = vrot.slane %v1391, %v2415
        %v2417 = vlaneseq
        %v2418 = vshrl.u32 %v2417, 7
        %v2419 = vsub.s32 0, %v2418
        %v2420 = vrot.slane %v1392, %v2419
        %v2421 = vlaneseq
        %v2422 = vshrl.u32 %v2421, 7
        %v2423 = vsub.s32 1, %v2422
        %v2424 = vrot.slane %v1392, %v2423
        %v2425 = vlaneseq
        %v2426 = vshrl.u32 %v2425, 7
        %v2427 = vsub.s32 2, %v2426
        %v2428 = vrot.slane %v1392, %v2427
        %v2429 = vlaneseq
        %v2430 = vshrl.u32 %v2429, 7
        %v2431 = vsub.s32 3, %v2430
        %v2432 = vrot.slane %v1392, %v2431
        %v2433 = vlaneseq
        %v2434 = vshrl.u32 %v2433, 7
        %v2435 = vsub.s32 4, %v2434
        %v2436 = vrot.slane %v1392, %v2435
        %v2437 = vlaneseq
        %v2438 = vshrl.u32 %v2437, 7
        %v2439 = vsub.s32 5, %v2438
        %v2440 = vrot.slane %v1392, %v2439
        %v2441 = vlaneseq
        %v2442 = vshrl.u32 %v2441, 7
        %v2443 = vsub.s32 6, %v2442
        %v2444 = vrot.slane %v1392, %v2443
        %v2445 = vlaneseq
        %v2446 = vshrl.u32 %v2445, 7
        %v2447 = vsub.s32 7, %v2446
        %v2448 = vrot.slane %v1392, %v2447
        %v2449 = vcombine.low %v1428, %v1432
        %v2450 = vcombine.low %v1436, %v1440
        %v2451 = vcombine.low %v1444, %v1448
        %v2452 = vcombine.low %v1452, %v1456
        %v2454 = vunpack.c.l.s4 1966171168
        %v2455 = vunpack.c.0.s8 %v2454
        %v2456 = vlaneseq
        %v2457 = vshrl.u32 %v2456, 7
        %v2458 = vsub.s32 %v2455, %v2457
        %v2459 = vrot.slane %v2449, %v2458
        %v2461 = vunpack.c.l.s4 1966171168
        %v2462 = vunpack.c.0.s8 %v2461
        %v2463 = vlaneseq
        %v2464 = vshrl.u32 %v2463, 7
        %v2465 = vsub.s32 %v2462, %v2464
        %v2466 = vrot.slane %v2450, %v2465
        %v2468 = vunpack.c.l.s4 1966171168
        %v2469 = vunpack.c.0.s8 %v2468
        %v2470 = vlaneseq
        %v2471 = vshrl.u32 %v2470, 7
        %v2472 = vsub.s32 %v2469, %v2471
        %v2473 = vrot.slane %v2451, %v2472
        %v2475 = vunpack.c.l.s4 1966171168
        %v2476 = vunpack.c.0.s8 %v2475
        %v2477 = vlaneseq
        %v2478 = vshrl.u32 %v2477, 7
        %v2479 = vsub.s32 %v2476, %v2478
        %v2480 = vrot.slane %v2452, %v2479
        %v2481 = vcombine.low %v2459, %v2466
        %v2482 = vcombine.low %v2473, %v2480
        %v2484 = vunpack.c.l.s4 1966171168
        %v2485 = vunpack.c.0.s8 %v2484
        %v2486 = vlaneseq
        %v2487 = vshrl.u32 %v2486, 7
        %v2488 = vsub.s32 %v2485, %v2487
        %v2489 = vrot.slane %v2481, %v2488
        %v2491 = vunpack.c.l.s4 1966171168
        %v2492 = vunpack.c.0.s8 %v2491
        %v2493 = vlaneseq
        %v2494 = vshrl.u32 %v2493, 7
        %v2495 = vsub.s32 %v2492, %v2494
        %v2496 = vrot.slane %v2482, %v2495
        %v2497 = vcombine.low %v2489, %v2496
        %v2498 = vcombine.low %v1460, %v1464
        %v2499 = vcombine.low %v1468, %v1472
        %v2500 = vcombine.low %v1476, %v1480
        %v2501 = vcombine.low %v1484, %v1488
        %v2503 = vunpack.c.l.s4 1966171168
        %v2504 = vunpack.c.0.s8 %v2503
        %v2505 = vlaneseq
        %v2506 = vshrl.u32 %v2505, 7
        %v2507 = vsub.s32 %v2504, %v2506
        %v2508 = vrot.slane %v2498, %v2507
        %v2510 = vunpack.c.l.s4 1966171168
        %v2511 = vunpack.c.0.s8 %v2510
        %v2512 = vlaneseq
        %v2513 = vshrl.u32 %v2512, 7
        %v2514 = vsub.s32 %v2511, %v2513
        %v2515 = vrot.slane %v2499, %v2514
        %v2517 = vunpack.c.l.s4 1966171168
        %v2518 = vunpack.c.0.s8 %v2517
        %v2519 = vlaneseq
        %v2520 = vshrl.u32 %v2519, 7
        %v2521 = vsub.s32 %v2518, %v2520
        %v2522 = vrot.slane %v2500, %v2521
        %v2524 = vunpack.c.l.s4 1966171168
        %v2525 = vunpack.c.0.s8 %v2524
        %v2526 = vlaneseq
        %v2527 = vshrl.u32 %v2526, 7
        %v2528 = vsub.s32 %v2525, %v2527
        %v2529 = vrot.slane %v2501, %v2528
        %v2530 = vcombine.low %v2508, %v2515
        %v2531 = vcombine.low %v2522, %v2529
        %v2533 = vunpack.c.l.s4 1966171168
        %v2534 = vunpack.c.0.s8 %v2533
        %v2535 = vlaneseq
        %v2536 = vshrl.u32 %v2535, 7
        %v2537 = vsub.s32 %v2534, %v2536
        %v2538 = vrot.slane %v2530, %v2537
        %v2540 = vunpack.c.l.s4 1966171168
        %v2541 = vunpack.c.0.s8 %v2540
        %v2542 = vlaneseq
        %v2543 = vshrl.u32 %v2542, 7
        %v2544 = vsub.s32 %v2541, %v2543
        %v2545 = vrot.slane %v2531, %v2544
        %v2546 = vcombine.low %v2538, %v2545
        %v2547 = vcombine.low %v1492, %v1496
        %v2548 = vcombine.low %v1500, %v1504
        %v2549 = vcombine.low %v1508, %v1512
        %v2550 = vcombine.low %v1516, %v1520
        %v2552 = vunpack.c.l.s4 1966171168
        %v2553 = vunpack.c.0.s8 %v2552
        %v2554 = vlaneseq
        %v2555 = vshrl.u32 %v2554, 7
        %v2556 = vsub.s32 %v2553, %v2555
        %v2557 = vrot.slane %v2547, %v2556
        %v2559 = vunpack.c.l.s4 1966171168
        %v2560 = vunpack.c.0.s8 %v2559
        %v2561 = vlaneseq
        %v2562 = vshrl.u32 %v2561, 7
        %v2563 = vsub.s32 %v2560, %v2562
        %v2564 = vrot.slane %v2548, %v2563
        %v2566 = vunpack.c.l.s4 1966171168
        %v2567 = vunpack.c.0.s8 %v2566
        %v2568 = vlaneseq
        %v2569 = vshrl.u32 %v2568, 7
        %v2570 = vsub.s32 %v2567, %v2569
        %v2571 = vrot.slane %v2549, %v2570
        %v2573 = vunpack.c.l.s4 1966171168
        %v2574 = vunpack.c.0.s8 %v2573
        %v2575 = vlaneseq
        %v2576 = vshrl.u32 %v2575, 7
        %v2577 = vsub.s32 %v2574, %v2576
        %v2578 = vrot.slane %v2550, %v2577
        %v2579 = vcombine.low %v2557, %v2564
        %v2580 = vcombine.low %v2571, %v2578
        %v2582 = vunpack.c.l.s4 1966171168
        %v2583 = vunpack.c.0.s8 %v2582
        %v2584 = vlaneseq
        %v2585 = vshrl.u32 %v2584, 7
        %v2586 = vsub.s32 %v2583, %v2585
        %v2587 = vrot.slane %v2579, %v2586
        %v2589 = vunpack.c.l.s4 1966171168
        %v2590 = vunpack.c.0.s8 %v2589
        %v2591 = vlaneseq
        %v2592 = vshrl.u32 %v2591, 7
        %v2593 = vsub.s32 %v2590, %v2592
        %v2594 = vrot.slane %v2580, %v2593
        %v2595 = vcombine.low %v2587, %v2594
        %v2596 = vcombine.low %v1524, %v1528
        %v2597 = vcombine.low %v1532, %v1536
        %v2598 = vcombine.low %v1540, %v1544
        %v2599 = vcombine.low %v1548, %v1552
        %v2601 = vunpack.c.l.s4 1966171168
        %v2602 = vunpack.c.0.s8 %v2601
        %v2603 = vlaneseq
        %v2604 = vshrl.u32 %v2603, 7
        %v2605 = vsub.s32 %v2602, %v2604
        %v2606 = vrot.slane %v2596, %v2605
        %v2608 = vunpack.c.l.s4 1966171168
        %v2609 = vunpack.c.0.s8 %v2608
        %v2610 = vlaneseq
        %v2611 = vshrl.u32 %v2610, 7
        %v2612 = vsub.s32 %v2609, %v2611
        %v2613 = vrot.slane %v2597, %v2612
        %v2615 = vunpack.c.l.s4 1966171168
        %v2616 = vunpack.c.0.s8 %v2615
        %v2617 = vlaneseq
        %v2618 = vshrl.u32 %v2617, 7
        %v2619 = vsub.s32 %v2616, %v2618
        %v2620 = vrot.slane %v2598, %v2619
        %v2622 = vunpack.c.l.s4 1966171168
        %v2623 = vunpack.c.0.s8 %v2622
        %v2624 = vlaneseq
        %v2625 = vshrl.u32 %v2624, 7
        %v2626 = vsub.s32 %v2623, %v2625
        %v2627 = vrot.slane %v2599, %v2626
        %v2628 = vcombine.low %v2606, %v2613
        %v2629 = vcombine.low %v2620, %v2627
        %v2631 = vunpack.c.l.s4 1966171168
        %v2632 = vunpack.c.0.s8 %v2631
        %v2633 = vlaneseq
        %v2634 = vshrl.u32 %v2633, 7
        %v2635 = vsub.s32 %v2632, %v2634
        %v2636 = vrot.slane %v2628, %v2635
        %v2638 = vunpack.c.l.s4 1966171168
        %v2639 = vunpack.c.0.s8 %v2638
        %v2640 = vlaneseq
        %v2641 = vshrl.u32 %v2640, 7
        %v2642 = vsub.s32 %v2639, %v2641
        %v2643 = vrot.slane %v2629, %v2642
        %v2644 = vcombine.low %v2636, %v2643
        %v2645 = vcombine.low %v1556, %v1560
        %v2646 = vcombine.low %v1564, %v1568
        %v2647 = vcombine.low %v1572, %v1576
        %v2648 = vcombine.low %v1580, %v1584
        %v2650 = vunpack.c.l.s4 1966171168
        %v2651 = vunpack.c.0.s8 %v2650
        %v2652 = vlaneseq
        %v2653 = vshrl.u32 %v2652, 7
        %v2654 = vsub.s32 %v2651, %v2653
        %v2655 = vrot.slane %v2645, %v2654
        %v2657 = vunpack.c.l.s4 1966171168
        %v2658 = vunpack.c.0.s8 %v2657
        %v2659 = vlaneseq
        %v2660 = vshrl.u32 %v2659, 7
        %v2661 = vsub.s32 %v2658, %v2660
        %v2662 = vrot.slane %v2646, %v2661
        %v2664 = vunpack.c.l.s4 1966171168
        %v2665 = vunpack.c.0.s8 %v2664
        %v2666 = vlaneseq
        %v2667 = vshrl.u32 %v2666, 7
        %v2668 = vsub.s32 %v2665, %v2667
        %v2669 = vrot.slane %v2647, %v2668
        %v2671 = vunpack.c.l.s4 1966171168
        %v2672 = vunpack.c.0.s8 %v2671
        %v2673 = vlaneseq
        %v2674 = vshrl.u32 %v2673, 7
        %v2675 = vsub.s32 %v2672, %v2674
        %v2676 = vrot.slane %v2648, %v2675
        %v2677 = vcombine.low %v2655, %v2662
        %v2678 = vcombine.low %v2669, %v2676
        %v2680 = vunpack.c.l.s4 1966171168
        %v2681 = vunpack.c.0.s8 %v2680
        %v2682 = vlaneseq
        %v2683 = vshrl.u32 %v2682, 7
        %v2684 = vsub.s32 %v2681, %v2683
        %v2685 = vrot.slane %v2677, %v2684
        %v2687 = vunpack.c.l.s4 1966171168
        %v2688 = vunpack.c.0.s8 %v2687
        %v2689 = vlaneseq
        %v2690 = vshrl.u32 %v2689, 7
        %v2691 = vsub.s32 %v2688, %v2690
        %v2692 = vrot.slane %v2678, %v2691
        %v2693 = vcombine.low %v2685, %v2692
        %v2694 = vcombine.low %v1588, %v1592
        %v2695 = vcombine.low %v1596, %v1600
        %v2696 = vcombine.low %v1604, %v1608
        %v2697 = vcombine.low %v1612, %v1616
        %v2699 = vunpack.c.l.s4 1966171168
        %v2700 = vunpack.c.0.s8 %v2699
        %v2701 = vlaneseq
        %v2702 = vshrl.u32 %v2701, 7
        %v2703 = vsub.s32 %v2700, %v2702
        %v2704 = vrot.slane %v2694, %v2703
        %v2706 = vunpack.c.l.s4 1966171168
        %v2707 = vunpack.c.0.s8 %v2706
        %v2708 = vlaneseq
        %v2709 = vshrl.u32 %v2708, 7
        %v2710 = vsub.s32 %v2707, %v2709
        %v2711 = vrot.slane %v2695, %v2710
        %v2713 = vunpack.c.l.s4 1966171168
        %v2714 = vunpack.c.0.s8 %v2713
        %v2715 = vlaneseq
        %v2716 = vshrl.u32 %v2715, 7
        %v2717 = vsub.s32 %v2714, %v2716
        %v2718 = vrot.slane %v2696, %v2717
        %v2720 = vunpack.c.l.s4 1966171168
        %v2721 = vunpack.c.0.s8 %v2720
        %v2722 = vlaneseq
        %v2723 = vshrl.u32 %v2722, 7
        %v2724 = vsub.s32 %v2721, %v2723
        %v2725 = vrot.slane %v2697, %v2724
        %v2726 = vcombine.low %v2704, %v2711
        %v2727 = vcombine.low %v2718, %v2725
        %v2729 = vunpack.c.l.s4 1966171168
        %v2730 = vunpack.c.0.s8 %v2729
        %v2731 = vlaneseq
        %v2732 = vshrl.u32 %v2731, 7
        %v2733 = vsub.s32 %v2730, %v2732
        %v2734 = vrot.slane %v2726, %v2733
        %v2736 = vunpack.c.l.s4 1966171168
        %v2737 = vunpack.c.0.s8 %v2736
        %v2738 = vlaneseq
        %v2739 = vshrl.u32 %v2738, 7
        %v2740 = vsub.s32 %v2737, %v2739
        %v2741 = vrot.slane %v2727, %v2740
        %v2742 = vcombine.low %v2734, %v2741
        %v2743 = vcombine.low %v1620, %v1624
        %v2744 = vcombine.low %v1628, %v1632
        %v2745 = vcombine.low %v1636, %v1640
        %v2746 = vcombine.low %v1644, %v1648
        %v2748 = vunpack.c.l.s4 1966171168
        %v2749 = vunpack.c.0.s8 %v2748
        %v2750 = vlaneseq
        %v2751 = vshrl.u32 %v2750, 7
        %v2752 = vsub.s32 %v2749, %v2751
        %v2753 = vrot.slane %v2743, %v2752
        %v2755 = vunpack.c.l.s4 1966171168
        %v2756 = vunpack.c.0.s8 %v2755
        %v2757 = vlaneseq
        %v2758 = vshrl.u32 %v2757, 7
        %v2759 = vsub.s32 %v2756, %v2758
        %v2760 = vrot.slane %v2744, %v2759
        %v2762 = vunpack.c.l.s4 1966171168
        %v2763 = vunpack.c.0.s8 %v2762
        %v2764 = vlaneseq
        %v2765 = vshrl.u32 %v2764, 7
        %v2766 = vsub.s32 %v2763, %v2765
        %v2767 = vrot.slane %v2745, %v2766
        %v2769 = vunpack.c.l.s4 1966171168
        %v2770 = vunpack.c.0.s8 %v2769
        %v2771 = vlaneseq
        %v2772 = vshrl.u32 %v2771, 7
        %v2773 = vsub.s32 %v2770, %v2772
        %v2774 = vrot.slane %v2746, %v2773
        %v2775 = vcombine.low %v2753, %v2760
        %v2776 = vcombine.low %v2767, %v2774
        %v2778 = vunpack.c.l.s4 1966171168
        %v2779 = vunpack.c.0.s8 %v2778
        %v2780 = vlaneseq
        %v2781 = vshrl.u32 %v2780, 7
        %v2782 = vsub.s32 %v2779, %v2781
        %v2783 = vrot.slane %v2775, %v2782
        %v2785 = vunpack.c.l.s4 1966171168
        %v2786 = vunpack.c.0.s8 %v2785
        %v2787 = vlaneseq
        %v2788 = vshrl.u32 %v2787, 7
        %v2789 = vsub.s32 %v2786, %v2788
        %v2790 = vrot.slane %v2776, %v2789
        %v2791 = vcombine.low %v2783, %v2790
        %v2792 = vcombine.low %v1652, %v1656
        %v2793 = vcombine.low %v1660, %v1664
        %v2794 = vcombine.low %v1668, %v1672
        %v2795 = vcombine.low %v1676, %v1680
        %v2797 = vunpack.c.l.s4 1966171168
        %v2798 = vunpack.c.0.s8 %v2797
        %v2799 = vlaneseq
        %v2800 = vshrl.u32 %v2799, 7
        %v2801 = vsub.s32 %v2798, %v2800
        %v2802 = vrot.slane %v2792, %v2801
        %v2804 = vunpack.c.l.s4 1966171168
        %v2805 = vunpack.c.0.s8 %v2804
        %v2806 = vlaneseq
        %v2807 = vshrl.u32 %v2806, 7
        %v2808 = vsub.s32 %v2805, %v2807
        %v2809 = vrot.slane %v2793, %v2808
        %v2811 = vunpack.c.l.s4 1966171168
        %v2812 = vunpack.c.0.s8 %v2811
        %v2813 = vlaneseq
        %v2814 = vshrl.u32 %v2813, 7
        %v2815 = vsub.s32 %v2812, %v2814
        %v2816 = vrot.slane %v2794, %v2815
        %v2818 = vunpack.c.l.s4 1966171168
        %v2819 = vunpack.c.0.s8 %v2818
        %v2820 = vlaneseq
        %v2821 = vshrl.u32 %v2820, 7
        %v2822 = vsub.s32 %v2819, %v2821
        %v2823 = vrot.slane %v2795, %v2822
        %v2824 = vcombine.low %v2802, %v2809
        %v2825 = vcombine.low %v2816, %v2823
        %v2827 = vunpack.c.l.s4 1966171168
        %v2828 = vunpack.c.0.s8 %v2827
        %v2829 = vlaneseq
        %v2830 = vshrl.u32 %v2829, 7
        %v2831 = vsub.s32 %v2828, %v2830
        %v2832 = vrot.slane %v2824, %v2831
        %v2834 = vunpack.c.l.s4 1966171168
        %v2835 = vunpack.c.0.s8 %v2834
        %v2836 = vlaneseq
        %v2837 = vshrl.u32 %v2836, 7
        %v2838 = vsub.s32 %v2835, %v2837
        %v2839 = vrot.slane %v2825, %v2838
        %v2840 = vcombine.low %v2832, %v2839
        %v2841 = vcombine.low %v1684, %v1688
        %v2842 = vcombine.low %v1692, %v1696
        %v2843 = vcombine.low %v1700, %v1704
        %v2844 = vcombine.low %v1708, %v1712
        %v2846 = vunpack.c.l.s4 1966171168
        %v2847 = vunpack.c.0.s8 %v2846
        %v2848 = vlaneseq
        %v2849 = vshrl.u32 %v2848, 7
        %v2850 = vsub.s32 %v2847, %v2849
        %v2851 = vrot.slane %v2841, %v2850
        %v2853 = vunpack.c.l.s4 1966171168
        %v2854 = vunpack.c.0.s8 %v2853
        %v2855 = vlaneseq
        %v2856 = vshrl.u32 %v2855, 7
        %v2857 = vsub.s32 %v2854, %v2856
        %v2858 = vrot.slane %v2842, %v2857
        %v2860 = vunpack.c.l.s4 1966171168
        %v2861 = vunpack.c.0.s8 %v2860
        %v2862 = vlaneseq
        %v2863 = vshrl.u32 %v2862, 7
        %v2864 = vsub.s32 %v2861, %v2863
        %v2865 = vrot.slane %v2843, %v2864
        %v2867 = vunpack.c.l.s4 1966171168
        %v2868 = vunpack.c.0.s8 %v2867
        %v2869 = vlaneseq
        %v2870 = vshrl.u32 %v2869, 7
        %v2871 = vsub.s32 %v2868, %v2870
        %v2872 = vrot.slane %v2844, %v2871
        %v2873 = vcombine.low %v2851, %v2858
        %v2874 = vcombine.low %v2865, %v2872
        %v2876 = vunpack.c.l.s4 1966171168
        %v2877 = vunpack.c.0.s8 %v2876
        %v2878 = vlaneseq
        %v2879 = vshrl.u32 %v2878, 7
        %v2880 = vsub.s32 %v2877, %v2879
        %v2881 = vrot.slane %v2873, %v2880
        %v2883 = vunpack.c.l.s4 1966171168
        %v2884 = vunpack.c.0.s8 %v2883
        %v2885 = vlaneseq
        %v2886 = vshrl.u32 %v2885, 7
        %v2887 = vsub.s32 %v2884, %v2886
        %v2888 = vrot.slane %v2874, %v2887
        %v2889 = vcombine.low %v2881, %v2888
        %v2890 = vcombine.low %v1716, %v1720
        %v2891 = vcombine.low %v1724, %v1728
        %v2892 = vcombine.low %v1732, %v1736
        %v2893 = vcombine.low %v1740, %v1744
        %v2895 = vunpack.c.l.s4 1966171168
        %v2896 = vunpack.c.0.s8 %v2895
        %v2897 = vlaneseq
        %v2898 = vshrl.u32 %v2897, 7
        %v2899 = vsub.s32 %v2896, %v2898
        %v2900 = vrot.slane %v2890, %v2899
        %v2902 = vunpack.c.l.s4 1966171168
        %v2903 = vunpack.c.0.s8 %v2902
        %v2904 = vlaneseq
        %v2905 = vshrl.u32 %v2904, 7
        %v2906 = vsub.s32 %v2903, %v2905
        %v2907 = vrot.slane %v2891, %v2906
        %v2909 = vunpack.c.l.s4 1966171168
        %v2910 = vunpack.c.0.s8 %v2909
        %v2911 = vlaneseq
        %v2912 = vshrl.u32 %v2911, 7
        %v2913 = vsub.s32 %v2910, %v2912
        %v2914 = vrot.slane %v2892, %v2913
        %v2916 = vunpack.c.l.s4 1966171168
        %v2917 = vunpack.c.0.s8 %v2916
        %v2918 = vlaneseq
        %v2919 = vshrl.u32 %v2918, 7
        %v2920 = vsub.s32 %v2917, %v2919
        %v2921 = vrot.slane %v2893, %v2920
        %v2922 = vcombine.low %v2900, %v2907
        %v2923 = vcombine.low %v2914, %v2921
        %v2925 = vunpack.c.l.s4 1966171168
        %v2926 = vunpack.c.0.s8 %v2925
        %v2927 = vlaneseq
        %v2928 = vshrl.u32 %v2927, 7
        %v2929 = vsub.s32 %v2926, %v2928
        %v2930 = vrot.slane %v2922, %v2929
        %v2932 = vunpack.c.l.s4 1966171168
        %v2933 = vunpack.c.0.s8 %v2932
        %v2934 = vlaneseq
        %v2935 = vshrl.u32 %v2934, 7
        %v2936 = vsub.s32 %v2933, %v2935
        %v2937 = vrot.slane %v2923, %v2936
        %v2938 = vcombine.low %v2930, %v2937
        %v2939 = vcombine.low %v1748, %v1752
        %v2940 = vcombine.low %v1756, %v1760
        %v2941 = vcombine.low %v1764, %v1768
        %v2942 = vcombine.low %v1772, %v1776
        %v2944 = vunpack.c.l.s4 1966171168
        %v2945 = vunpack.c.0.s8 %v2944
        %v2946 = vlaneseq
        %v2947 = vshrl.u32 %v2946, 7
        %v2948 = vsub.s32 %v2945, %v2947
        %v2949 = vrot.slane %v2939, %v2948
        %v2951 = vunpack.c.l.s4 1966171168
        %v2952 = vunpack.c.0.s8 %v2951
        %v2953 = vlaneseq
        %v2954 = vshrl.u32 %v2953, 7
        %v2955 = vsub.s32 %v2952, %v2954
        %v2956 = vrot.slane %v2940, %v2955
        %v2958 = vunpack.c.l.s4 1966171168
        %v2959 = vunpack.c.0.s8 %v2958
        %v2960 = vlaneseq
        %v2961 = vshrl.u32 %v2960, 7
        %v2962 = vsub.s32 %v2959, %v2961
        %v2963 = vrot.slane %v2941, %v2962
        %v2965 = vunpack.c.l.s4 1966171168
        %v2966 = vunpack.c.0.s8 %v2965
        %v2967 = vlaneseq
        %v2968 = vshrl.u32 %v2967, 7
        %v2969 = vsub.s32 %v2966, %v2968
        %v2970 = vrot.slane %v2942, %v2969
        %v2971 = vcombine.low %v2949, %v2956
        %v2972 = vcombine.low %v2963, %v2970
        %v2974 = vunpack.c.l.s4 1966171168
        %v2975 = vunpack.c.0.s8 %v2974
        %v2976 = vlaneseq
        %v2977 = vshrl.u32 %v2976, 7
        %v2978 = vsub.s32 %v2975, %v2977
        %v2979 = vrot.slane %v2971, %v2978
        %v2981 = vunpack.c.l.s4 1966171168
        %v2982 = vunpack.c.0.s8 %v2981
        %v2983 = vlaneseq
        %v2984 = vshrl.u32 %v2983, 7
        %v2985 = vsub.s32 %v2982, %v2984
        %v2986 = vrot.slane %v2972, %v2985
        %v2987 = vcombine.low %v2979, %v2986
        %v2988 = vcombine.low %v1780, %v1784
        %v2989 = vcombine.low %v1788, %v1792
        %v2990 = vcombine.low %v1796, %v1800
        %v2991 = vcombine.low %v1804, %v1808
        %v2993 = vunpack.c.l.s4 1966171168
        %v2994 = vunpack.c.0.s8 %v2993
        %v2995 = vlaneseq
        %v2996 = vshrl.u32 %v2995, 7
        %v2997 = vsub.s32 %v2994, %v2996
        %v2998 = vrot.slane %v2988, %v2997
        %v3000 = vunpack.c.l.s4 1966171168
        %v3001 = vunpack.c.0.s8 %v3000
        %v3002 = vlaneseq
        %v3003 = vshrl.u32 %v3002, 7
        %v3004 = vsub.s32 %v3001, %v3003
        %v3005 = vrot.slane %v2989, %v3004
        %v3007 = vunpack.c.l.s4 1966171168
        %v3008 = vunpack.c.0.s8 %v3007
        %v3009 = vlaneseq
        %v3010 = vshrl.u32 %v3009, 7
        %v3011 = vsub.s32 %v3008, %v3010
        %v3012 = vrot.slane %v2990, %v3011
        %v3014 = vunpack.c.l.s4 1966171168
        %v3015 = vunpack.c.0.s8 %v3014
        %v3016 = vlaneseq
        %v3017 = vshrl.u32 %v3016, 7
        %v3018 = vsub.s32 %v3015, %v3017
        %v3019 = vrot.slane %v2991, %v3018
        %v3020 = vcombine.low %v2998, %v3005
        %v3021 = vcombine.low %v3012, %v3019
        %v3023 = vunpack.c.l.s4 1966171168
        %v3024 = vunpack.c.0.s8 %v3023
        %v3025 = vlaneseq
        %v3026 = vshrl.u32 %v3025, 7
        %v3027 = vsub.s32 %v3024, %v3026
        %v3028 = vrot.slane %v3020, %v3027
        %v3030 = vunpack.c.l.s4 1966171168
        %v3031 = vunpack.c.0.s8 %v3030
        %v3032 = vlaneseq
        %v3033 = vshrl.u32 %v3032, 7
        %v3034 = vsub.s32 %v3031, %v3033
        %v3035 = vrot.slane %v3021, %v3034
        %v3036 = vcombine.low %v3028, %v3035
        %v3037 = vcombine.low %v1812, %v1816
        %v3038 = vcombine.low %v1820, %v1824
        %v3039 = vcombine.low %v1828, %v1832
        %v3040 = vcombine.low %v1836, %v1840
        %v3042 = vunpack.c.l.s4 1966171168
        %v3043 = vunpack.c.0.s8 %v3042
        %v3044 = vlaneseq
        %v3045 = vshrl.u32 %v3044, 7
        %v3046 = vsub.s32 %v3043, %v3045
        %v3047 = vrot.slane %v3037, %v3046
        %v3049 = vunpack.c.l.s4 1966171168
        %v3050 = vunpack.c.0.s8 %v3049
        %v3051 = vlaneseq
        %v3052 = vshrl.u32 %v3051, 7
        %v3053 = vsub.s32 %v3050, %v3052
        %v3054 = vrot.slane %v3038, %v3053
        %v3056 = vunpack.c.l.s4 1966171168
        %v3057 = vunpack.c.0.s8 %v3056
        %v3058 = vlaneseq
        %v3059 = vshrl.u32 %v3058, 7
        %v3060 = vsub.s32 %v3057, %v3059
        %v3061 = vrot.slane %v3039, %v3060
        %v3063 = vunpack.c.l.s4 1966171168
        %v3064 = vunpack.c.0.s8 %v3063
        %v3065 = vlaneseq
        %v3066 = vshrl.u32 %v3065, 7
        %v3067 = vsub.s32 %v3064, %v3066
        %v3068 = vrot.slane %v3040, %v3067
        %v3069 = vcombine.low %v3047, %v3054
        %v3070 = vcombine.low %v3061, %v3068
        %v3072 = vunpack.c.l.s4 1966171168
        %v3073 = vunpack.c.0.s8 %v3072
        %v3074 = vlaneseq
        %v3075 = vshrl.u32 %v3074, 7
        %v3076 = vsub.s32 %v3073, %v3075
        %v3077 = vrot.slane %v3069, %v3076
        %v3079 = vunpack.c.l.s4 1966171168
        %v3080 = vunpack.c.0.s8 %v3079
        %v3081 = vlaneseq
        %v3082 = vshrl.u32 %v3081, 7
        %v3083 = vsub.s32 %v3080, %v3082
        %v3084 = vrot.slane %v3070, %v3083
        %v3085 = vcombine.low %v3077, %v3084
        %v3086 = vcombine.low %v1844, %v1848
        %v3087 = vcombine.low %v1852, %v1856
        %v3088 = vcombine.low %v1860, %v1864
        %v3089 = vcombine.low %v1868, %v1872
        %v3091 = vunpack.c.l.s4 1966171168
        %v3092 = vunpack.c.0.s8 %v3091
        %v3093 = vlaneseq
        %v3094 = vshrl.u32 %v3093, 7
        %v3095 = vsub.s32 %v3092, %v3094
        %v3096 = vrot.slane %v3086, %v3095
        %v3098 = vunpack.c.l.s4 1966171168
        %v3099 = vunpack.c.0.s8 %v3098
        %v3100 = vlaneseq
        %v3101 = vshrl.u32 %v3100, 7
        %v3102 = vsub.s32 %v3099, %v3101
        %v3103 = vrot.slane %v3087, %v3102
        %v3105 = vunpack.c.l.s4 1966171168
        %v3106 = vunpack.c.0.s8 %v3105
        %v3107 = vlaneseq
        %v3108 = vshrl.u32 %v3107, 7
        %v3109 = vsub.s32 %v3106, %v3108
        %v3110 = vrot.slane %v3088, %v3109
        %v3112 = vunpack.c.l.s4 1966171168
        %v3113 = vunpack.c.0.s8 %v3112
        %v3114 = vlaneseq
        %v3115 = vshrl.u32 %v3114, 7
        %v3116 = vsub.s32 %v3113, %v3115
        %v3117 = vrot.slane %v3089, %v3116
        %v3118 = vcombine.low %v3096, %v3103
        %v3119 = vcombine.low %v3110, %v3117
        %v3121 = vunpack.c.l.s4 1966171168
        %v3122 = vunpack.c.0.s8 %v3121
        %v3123 = vlaneseq
        %v3124 = vshrl.u32 %v3123, 7
        %v3125 = vsub.s32 %v3122, %v3124
        %v3126 = vrot.slane %v3118, %v3125
        %v3128 = vunpack.c.l.s4 1966171168
        %v3129 = vunpack.c.0.s8 %v3128
        %v3130 = vlaneseq
        %v3131 = vshrl.u32 %v3130, 7
        %v3132 = vsub.s32 %v3129, %v3131
        %v3133 = vrot.slane %v3119, %v3132
        %v3134 = vcombine.low %v3126, %v3133
        %v3135 = vcombine.low %v1876, %v1880
        %v3136 = vcombine.low %v1884, %v1888
        %v3137 = vcombine.low %v1892, %v1896
        %v3138 = vcombine.low %v1900, %v1904
        %v3140 = vunpack.c.l.s4 1966171168
        %v3141 = vunpack.c.0.s8 %v3140
        %v3142 = vlaneseq
        %v3143 = vshrl.u32 %v3142, 7
        %v3144 = vsub.s32 %v3141, %v3143
        %v3145 = vrot.slane %v3135, %v3144
        %v3147 = vunpack.c.l.s4 1966171168
        %v3148 = vunpack.c.0.s8 %v3147
        %v3149 = vlaneseq
        %v3150 = vshrl.u32 %v3149, 7
        %v3151 = vsub.s32 %v3148, %v3150
        %v3152 = vrot.slane %v3136, %v3151
        %v3154 = vunpack.c.l.s4 1966171168
        %v3155 = vunpack.c.0.s8 %v3154
        %v3156 = vlaneseq
        %v3157 = vshrl.u32 %v3156, 7
        %v3158 = vsub.s32 %v3155, %v3157
        %v3159 = vrot.slane %v3137, %v3158
        %v3161 = vunpack.c.l.s4 1966171168
        %v3162 = vunpack.c.0.s8 %v3161
        %v3163 = vlaneseq
        %v3164 = vshrl.u32 %v3163, 7
        %v3165 = vsub.s32 %v3162, %v3164
        %v3166 = vrot.slane %v3138, %v3165
        %v3167 = vcombine.low %v3145, %v3152
        %v3168 = vcombine.low %v3159, %v3166
        %v3170 = vunpack.c.l.s4 1966171168
        %v3171 = vunpack.c.0.s8 %v3170
        %v3172 = vlaneseq
        %v3173 = vshrl.u32 %v3172, 7
        %v3174 = vsub.s32 %v3171, %v3173
        %v3175 = vrot.slane %v3167, %v3174
        %v3177 = vunpack.c.l.s4 1966171168
        %v3178 = vunpack.c.0.s8 %v3177
        %v3179 = vlaneseq
        %v3180 = vshrl.u32 %v3179, 7
        %v3181 = vsub.s32 %v3178, %v3180
        %v3182 = vrot.slane %v3168, %v3181
        %v3183 = vcombine.low %v3175, %v3182
        %v3184 = vcombine.low %v1908, %v1912
        %v3185 = vcombine.low %v1916, %v1920
        %v3186 = vcombine.low %v1924, %v1928
        %v3187 = vcombine.low %v1932, %v1936
        %v3189 = vunpack.c.l.s4 1966171168
        %v3190 = vunpack.c.0.s8 %v3189
        %v3191 = vlaneseq
        %v3192 = vshrl.u32 %v3191, 7
        %v3193 = vsub.s32 %v3190, %v3192
        %v3194 = vrot.slane %v3184, %v3193
        %v3196 = vunpack.c.l.s4 1966171168
        %v3197 = vunpack.c.0.s8 %v3196
        %v3198 = vlaneseq
        %v3199 = vshrl.u32 %v3198, 7
        %v3200 = vsub.s32 %v3197, %v3199
        %v3201 = vrot.slane %v3185, %v3200
        %v3203 = vunpack.c.l.s4 1966171168
        %v3204 = vunpack.c.0.s8 %v3203
        %v3205 = vlaneseq
        %v3206 = vshrl.u32 %v3205, 7
        %v3207 = vsub.s32 %v3204, %v3206
        %v3208 = vrot.slane %v3186, %v3207
        %v3210 = vunpack.c.l.s4 1966171168
        %v3211 = vunpack.c.0.s8 %v3210
        %v3212 = vlaneseq
        %v3213 = vshrl.u32 %v3212, 7
        %v3214 = vsub.s32 %v3211, %v3213
        %v3215 = vrot.slane %v3187, %v3214
        %v3216 = vcombine.low %v3194, %v3201
        %v3217 = vcombine.low %v3208, %v3215
        %v3219 = vunpack.c.l.s4 1966171168
        %v3220 = vunpack.c.0.s8 %v3219
        %v3221 = vlaneseq
        %v3222 = vshrl.u32 %v3221, 7
        %v3223 = vsub.s32 %v3220, %v3222
        %v3224 = vrot.slane %v3216, %v3223
        %v3226 = vunpack.c.l.s4 1966171168
        %v3227 = vunpack.c.0.s8 %v3226
        %v3228 = vlaneseq
        %v3229 = vshrl.u32 %v3228, 7
        %v3230 = vsub.s32 %v3227, %v3229
        %v3231 = vrot.slane %v3217, %v3230
        %v3232 = vcombine.low %v3224, %v3231
        %v3233 = vcombine.low %v1940, %v1944
        %v3234 = vcombine.low %v1948, %v1952
        %v3235 = vcombine.low %v1956, %v1960
        %v3236 = vcombine.low %v1964, %v1968
        %v3238 = vunpack.c.l.s4 1966171168
        %v3239 = vunpack.c.0.s8 %v3238
        %v3240 = vlaneseq
        %v3241 = vshrl.u32 %v3240, 7
        %v3242 = vsub.s32 %v3239, %v3241
        %v3243 = vrot.slane %v3233, %v3242
        %v3245 = vunpack.c.l.s4 1966171168
        %v3246 = vunpack.c.0.s8 %v3245
        %v3247 = vlaneseq
        %v3248 = vshrl.u32 %v3247, 7
        %v3249 = vsub.s32 %v3246, %v3248
        %v3250 = vrot.slane %v3234, %v3249
        %v3252 = vunpack.c.l.s4 1966171168
        %v3253 = vunpack.c.0.s8 %v3252
        %v3254 = vlaneseq
        %v3255 = vshrl.u32 %v3254, 7
        %v3256 = vsub.s32 %v3253, %v3255
        %v3257 = vrot.slane %v3235, %v3256
        %v3259 = vunpack.c.l.s4 1966171168
        %v3260 = vunpack.c.0.s8 %v3259
        %v3261 = vlaneseq
        %v3262 = vshrl.u32 %v3261, 7
        %v3263 = vsub.s32 %v3260, %v3262
        %v3264 = vrot.slane %v3236, %v3263
        %v3265 = vcombine.low %v3243, %v3250
        %v3266 = vcombine.low %v3257, %v3264
        %v3268 = vunpack.c.l.s4 1966171168
        %v3269 = vunpack.c.0.s8 %v3268
        %v3270 = vlaneseq
        %v3271 = vshrl.u32 %v3270, 7
        %v3272 = vsub.s32 %v3269, %v3271
        %v3273 = vrot.slane %v3265, %v3272
        %v3275 = vunpack.c.l.s4 1966171168
        %v3276 = vunpack.c.0.s8 %v3275
        %v3277 = vlaneseq
        %v3278 = vshrl.u32 %v3277, 7
        %v3279 = vsub.s32 %v3276, %v3278
        %v3280 = vrot.slane %v3266, %v3279
        %v3281 = vcombine.low %v3273, %v3280
        %v3282 = vcombine.low %v1972, %v1976
        %v3283 = vcombine.low %v1980, %v1984
        %v3284 = vcombine.low %v1988, %v1992
        %v3285 = vcombine.low %v1996, %v2000
        %v3287 = vunpack.c.l.s4 1966171168
        %v3288 = vunpack.c.0.s8 %v3287
        %v3289 = vlaneseq
        %v3290 = vshrl.u32 %v3289, 7
        %v3291 = vsub.s32 %v3288, %v3290
        %v3292 = vrot.slane %v3282, %v3291
        %v3294 = vunpack.c.l.s4 1966171168
        %v3295 = vunpack.c.0.s8 %v3294
        %v3296 = vlaneseq
        %v3297 = vshrl.u32 %v3296, 7
        %v3298 = vsub.s32 %v3295, %v3297
        %v3299 = vrot.slane %v3283, %v3298
        %v3301 = vunpack.c.l.s4 1966171168
        %v3302 = vunpack.c.0.s8 %v3301
        %v3303 = vlaneseq
        %v3304 = vshrl.u32 %v3303, 7
        %v3305 = vsub.s32 %v3302, %v3304
        %v3306 = vrot.slane %v3284, %v3305
        %v3308 = vunpack.c.l.s4 1966171168
        %v3309 = vunpack.c.0.s8 %v3308
        %v3310 = vlaneseq
        %v3311 = vshrl.u32 %v3310, 7
        %v3312 = vsub.s32 %v3309, %v3311
        %v3313 = vrot.slane %v3285, %v3312
        %v3314 = vcombine.low %v3292, %v3299
        %v3315 = vcombine.low %v3306, %v3313
        %v3317 = vunpack.c.l.s4 1966171168
        %v3318 = vunpack.c.0.s8 %v3317
        %v3319 = vlaneseq
        %v3320 = vshrl.u32 %v3319, 7
        %v3321 = vsub.s32 %v3318, %v3320
        %v3322 = vrot.slane %v3314, %v3321
        %v3324 = vunpack.c.l.s4 1966171168
        %v3325 = vunpack.c.0.s8 %v3324
        %v3326 = vlaneseq
        %v3327 = vshrl.u32 %v3326, 7
        %v3328 = vsub.s32 %v3325, %v3327
        %v3329 = vrot.slane %v3315, %v3328
        %v3330 = vcombine.low %v3322, %v3329
        %v3331 = vcombine.low %v2004, %v2008
        %v3332 = vcombine.low %v2012, %v2016
        %v3333 = vcombine.low %v2020, %v2024
        %v3334 = vcombine.low %v2028, %v2032
        %v3336 = vunpack.c.l.s4 1966171168
        %v3337 = vunpack.c.0.s8 %v3336
        %v3338 = vlaneseq
        %v3339 = vshrl.u32 %v3338, 7
        %v3340 = vsub.s32 %v3337, %v3339
        %v3341 = vrot.slane %v3331, %v3340
        %v3343 = vunpack.c.l.s4 1966171168
        %v3344 = vunpack.c.0.s8 %v3343
        %v3345 = vlaneseq
        %v3346 = vshrl.u32 %v3345, 7
        %v3347 = vsub.s32 %v3344, %v3346
        %v3348 = vrot.slane %v3332, %v3347
        %v3350 = vunpack.c.l.s4 1966171168
        %v3351 = vunpack.c.0.s8 %v3350
        %v3352 = vlaneseq
        %v3353 = vshrl.u32 %v3352, 7
        %v3354 = vsub.s32 %v3351, %v3353
        %v3355 = vrot.slane %v3333, %v3354
        %v3357 = vunpack.c.l.s4 1966171168
        %v3358 = vunpack.c.0.s8 %v3357
        %v3359 = vlaneseq
        %v3360 = vshrl.u32 %v3359, 7
        %v3361 = vsub.s32 %v3358, %v3360
        %v3362 = vrot.slane %v3334, %v3361
        %v3363 = vcombine.low %v3341, %v3348
        %v3364 = vcombine.low %v3355, %v3362
        %v3366 = vunpack.c.l.s4 1966171168
        %v3367 = vunpack.c.0.s8 %v3366
        %v3368 = vlaneseq
        %v3369 = vshrl.u32 %v3368, 7
        %v3370 = vsub.s32 %v3367, %v3369
        %v3371 = vrot.slane %v3363, %v3370
        %v3373 = vunpack.c.l.s4 1966171168
        %v3374 = vunpack.c.0.s8 %v3373
        %v3375 = vlaneseq
        %v3376 = vshrl.u32 %v3375, 7
        %v3377 = vsub.s32 %v3374, %v3376
        %v3378 = vrot.slane %v3364, %v3377
        %v3379 = vcombine.low %v3371, %v3378
        %v3380 = vcombine.low %v2036, %v2040
        %v3381 = vcombine.low %v2044, %v2048
        %v3382 = vcombine.low %v2052, %v2056
        %v3383 = vcombine.low %v2060, %v2064
        %v3385 = vunpack.c.l.s4 1966171168
        %v3386 = vunpack.c.0.s8 %v3385
        %v3387 = vlaneseq
        %v3388 = vshrl.u32 %v3387, 7
        %v3389 = vsub.s32 %v3386, %v3388
        %v3390 = vrot.slane %v3380, %v3389
        %v3392 = vunpack.c.l.s4 1966171168
        %v3393 = vunpack.c.0.s8 %v3392
        %v3394 = vlaneseq
        %v3395 = vshrl.u32 %v3394, 7
        %v3396 = vsub.s32 %v3393, %v3395
        %v3397 = vrot.slane %v3381, %v3396
        %v3399 = vunpack.c.l.s4 1966171168
        %v3400 = vunpack.c.0.s8 %v3399
        %v3401 = vlaneseq
        %v3402 = vshrl.u32 %v3401, 7
        %v3403 = vsub.s32 %v3400, %v3402
        %v3404 = vrot.slane %v3382, %v3403
        %v3406 = vunpack.c.l.s4 1966171168
        %v3407 = vunpack.c.0.s8 %v3406
        %v3408 = vlaneseq
        %v3409 = vshrl.u32 %v3408, 7
        %v3410 = vsub.s32 %v3407, %v3409
        %v3411 = vrot.slane %v3383, %v3410
        %v3412 = vcombine.low %v3390, %v3397
        %v3413 = vcombine.low %v3404, %v3411
        %v3415 = vunpack.c.l.s4 1966171168
        %v3416 = vunpack.c.0.s8 %v3415
        %v3417 = vlaneseq
        %v3418 = vshrl.u32 %v3417, 7
        %v3419 = vsub.s32 %v3416, %v3418
        %v3420 = vrot.slane %v3412, %v3419
        %v3422 = vunpack.c.l.s4 1966171168
        %v3423 = vunpack.c.0.s8 %v3422
        %v3424 = vlaneseq
        %v3425 = vshrl.u32 %v3424, 7
        %v3426 = vsub.s32 %v3423, %v3425
        %v3427 = vrot.slane %v3413, %v3426
        %v3428 = vcombine.low %v3420, %v3427
        %v3429 = vcombine.low %v2068, %v2072
        %v3430 = vcombine.low %v2076, %v2080
        %v3431 = vcombine.low %v2084, %v2088
        %v3432 = vcombine.low %v2092, %v2096
        %v3434 = vunpack.c.l.s4 1966171168
        %v3435 = vunpack.c.0.s8 %v3434
        %v3436 = vlaneseq
        %v3437 = vshrl.u32 %v3436, 7
        %v3438 = vsub.s32 %v3435, %v3437
        %v3439 = vrot.slane %v3429, %v3438
        %v3441 = vunpack.c.l.s4 1966171168
        %v3442 = vunpack.c.0.s8 %v3441
        %v3443 = vlaneseq
        %v3444 = vshrl.u32 %v3443, 7
        %v3445 = vsub.s32 %v3442, %v3444
        %v3446 = vrot.slane %v3430, %v3445
        %v3448 = vunpack.c.l.s4 1966171168
        %v3449 = vunpack.c.0.s8 %v3448
        %v3450 = vlaneseq
        %v3451 = vshrl.u32 %v3450, 7
        %v3452 = vsub.s32 %v3449, %v3451
        %v3453 = vrot.slane %v3431, %v3452
        %v3455 = vunpack.c.l.s4 1966171168
        %v3456 = vunpack.c.0.s8 %v3455
        %v3457 = vlaneseq
        %v3458 = vshrl.u32 %v3457, 7
        %v3459 = vsub.s32 %v3456, %v3458
        %v3460 = vrot.slane %v3432, %v3459
        %v3461 = vcombine.low %v3439, %v3446
        %v3462 = vcombine.low %v3453, %v3460
        %v3464 = vunpack.c.l.s4 1966171168
        %v3465 = vunpack.c.0.s8 %v3464
        %v3466 = vlaneseq
        %v3467 = vshrl.u32 %v3466, 7
        %v3468 = vsub.s32 %v3465, %v3467
        %v3469 = vrot.slane %v3461, %v3468
        %v3471 = vunpack.c.l.s4 1966171168
        %v3472 = vunpack.c.0.s8 %v3471
        %v3473 = vlaneseq
        %v3474 = vshrl.u32 %v3473, 7
        %v3475 = vsub.s32 %v3472, %v3474
        %v3476 = vrot.slane %v3462, %v3475
        %v3477 = vcombine.low %v3469, %v3476
        %v3478 = vcombine.low %v2100, %v2104
        %v3479 = vcombine.low %v2108, %v2112
        %v3480 = vcombine.low %v2116, %v2120
        %v3481 = vcombine.low %v2124, %v2128
        %v3483 = vunpack.c.l.s4 1966171168
        %v3484 = vunpack.c.0.s8 %v3483
        %v3485 = vlaneseq
        %v3486 = vshrl.u32 %v3485, 7
        %v3487 = vsub.s32 %v3484, %v3486
        %v3488 = vrot.slane %v3478, %v3487
        %v3490 = vunpack.c.l.s4 1966171168
        %v3491 = vunpack.c.0.s8 %v3490
        %v3492 = vlaneseq
        %v3493 = vshrl.u32 %v3492, 7
        %v3494 = vsub.s32 %v3491, %v3493
        %v3495 = vrot.slane %v3479, %v3494
        %v3497 = vunpack.c.l.s4 1966171168
        %v3498 = vunpack.c.0.s8 %v3497
        %v3499 = vlaneseq
        %v3500 = vshrl.u32 %v3499, 7
        %v3501 = vsub.s32 %v3498, %v3500
        %v3502 = vrot.slane %v3480, %v3501
        %v3504 = vunpack.c.l.s4 1966171168
        %v3505 = vunpack.c.0.s8 %v3504
        %v3506 = vlaneseq
        %v3507 = vshrl.u32 %v3506, 7
        %v3508 = vsub.s32 %v3505, %v3507
        %v3509 = vrot.slane %v3481, %v3508
        %v3510 = vcombine.low %v3488, %v3495
        %v3511 = vcombine.low %v3502, %v3509
        %v3513 = vunpack.c.l.s4 1966171168
        %v3514 = vunpack.c.0.s8 %v3513
        %v3515 = vlaneseq
        %v3516 = vshrl.u32 %v3515, 7
        %v3517 = vsub.s32 %v3514, %v3516
        %v3518 = vrot.slane %v3510, %v3517
        %v3520 = vunpack.c.l.s4 1966171168
        %v3521 = vunpack.c.0.s8 %v3520
        %v3522 = vlaneseq
        %v3523 = vshrl.u32 %v3522, 7
        %v3524 = vsub.s32 %v3521, %v3523
        %v3525 = vrot.slane %v3511, %v3524
        %v3526 = vcombine.low %v3518, %v3525
        %v3527 = vcombine.low %v2132, %v2136
        %v3528 = vcombine.low %v2140, %v2144
        %v3529 = vcombine.low %v2148, %v2152
        %v3530 = vcombine.low %v2156, %v2160
        %v3532 = vunpack.c.l.s4 1966171168
        %v3533 = vunpack.c.0.s8 %v3532
        %v3534 = vlaneseq
        %v3535 = vshrl.u32 %v3534, 7
        %v3536 = vsub.s32 %v3533, %v3535
        %v3537 = vrot.slane %v3527, %v3536
        %v3539 = vunpack.c.l.s4 1966171168
        %v3540 = vunpack.c.0.s8 %v3539
        %v3541 = vlaneseq
        %v3542 = vshrl.u32 %v3541, 7
        %v3543 = vsub.s32 %v3540, %v3542
        %v3544 = vrot.slane %v3528, %v3543
        %v3546 = vunpack.c.l.s4 1966171168
        %v3547 = vunpack.c.0.s8 %v3546
        %v3548 = vlaneseq
        %v3549 = vshrl.u32 %v3548, 7
        %v3550 = vsub.s32 %v3547, %v3549
        %v3551 = vrot.slane %v3529, %v3550
        %v3553 = vunpack.c.l.s4 1966171168
        %v3554 = vunpack.c.0.s8 %v3553
        %v3555 = vlaneseq
        %v3556 = vshrl.u32 %v3555, 7
        %v3557 = vsub.s32 %v3554, %v3556
        %v3558 = vrot.slane %v3530, %v3557
        %v3559 = vcombine.low %v3537, %v3544
        %v3560 = vcombine.low %v3551, %v3558
        %v3562 = vunpack.c.l.s4 1966171168
        %v3563 = vunpack.c.0.s8 %v3562
        %v3564 = vlaneseq
        %v3565 = vshrl.u32 %v3564, 7
        %v3566 = vsub.s32 %v3563, %v3565
        %v3567 = vrot.slane %v3559, %v3566
        %v3569 = vunpack.c.l.s4 1966171168
        %v3570 = vunpack.c.0.s8 %v3569
        %v3571 = vlaneseq
        %v3572 = vshrl.u32 %v3571, 7
        %v3573 = vsub.s32 %v3570, %v3572
        %v3574 = vrot.slane %v3560, %v3573
        %v3575 = vcombine.low %v3567, %v3574
        %v3576 = vcombine.low %v2164, %v2168
        %v3577 = vcombine.low %v2172, %v2176
        %v3578 = vcombine.low %v2180, %v2184
        %v3579 = vcombine.low %v2188, %v2192
        %v3581 = vunpack.c.l.s4 1966171168
        %v3582 = vunpack.c.0.s8 %v3581
        %v3583 = vlaneseq
        %v3584 = vshrl.u32 %v3583, 7
        %v3585 = vsub.s32 %v3582, %v3584
        %v3586 = vrot.slane %v3576, %v3585
        %v3588 = vunpack.c.l.s4 1966171168
        %v3589 = vunpack.c.0.s8 %v3588
        %v3590 = vlaneseq
        %v3591 = vshrl.u32 %v3590, 7
        %v3592 = vsub.s32 %v3589, %v3591
        %v3593 = vrot.slane %v3577, %v3592
        %v3595 = vunpack.c.l.s4 1966171168
        %v3596 = vunpack.c.0.s8 %v3595
        %v3597 = vlaneseq
        %v3598 = vshrl.u32 %v3597, 7
        %v3599 = vsub.s32 %v3596, %v3598
        %v3600 = vrot.slane %v3578, %v3599
        %v3602 = vunpack.c.l.s4 1966171168
        %v3603 = vunpack.c.0.s8 %v3602
        %v3604 = vlaneseq
        %v3605 = vshrl.u32 %v3604, 7
        %v3606 = vsub.s32 %v3603, %v3605
        %v3607 = vrot.slane %v3579, %v3606
        %v3608 = vcombine.low %v3586, %v3593
        %v3609 = vcombine.low %v3600, %v3607
        %v3611 = vunpack.c.l.s4 1966171168
        %v3612 = vunpack.c.0.s8 %v3611
        %v3613 = vlaneseq
        %v3614 = vshrl.u32 %v3613, 7
        %v3615 = vsub.s32 %v3612, %v3614
        %v3616 = vrot.slane %v3608, %v3615
        %v3618 = vunpack.c.l.s4 1966171168
        %v3619 = vunpack.c.0.s8 %v3618
        %v3620 = vlaneseq
        %v3621 = vshrl.u32 %v3620, 7
        %v3622 = vsub.s32 %v3619, %v3621
        %v3623 = vrot.slane %v3609, %v3622
        %v3624 = vcombine.low %v3616, %v3623
        %v3625 = vcombine.low %v2196, %v2200
        %v3626 = vcombine.low %v2204, %v2208
        %v3627 = vcombine.low %v2212, %v2216
        %v3628 = vcombine.low %v2220, %v2224
        %v3630 = vunpack.c.l.s4 1966171168
        %v3631 = vunpack.c.0.s8 %v3630
        %v3632 = vlaneseq
        %v3633 = vshrl.u32 %v3632, 7
        %v3634 = vsub.s32 %v3631, %v3633
        %v3635 = vrot.slane %v3625, %v3634
        %v3637 = vunpack.c.l.s4 1966171168
        %v3638 = vunpack.c.0.s8 %v3637
        %v3639 = vlaneseq
        %v3640 = vshrl.u32 %v3639, 7
        %v3641 = vsub.s32 %v3638, %v3640
        %v3642 = vrot.slane %v3626, %v3641
        %v3644 = vunpack.c.l.s4 1966171168
        %v3645 = vunpack.c.0.s8 %v3644
        %v3646 = vlaneseq
        %v3647 = vshrl.u32 %v3646, 7
        %v3648 = vsub.s32 %v3645, %v3647
        %v3649 = vrot.slane %v3627, %v3648
        %v3651 = vunpack.c.l.s4 1966171168
        %v3652 = vunpack.c.0.s8 %v3651
        %v3653 = vlaneseq
        %v3654 = vshrl.u32 %v3653, 7
        %v3655 = vsub.s32 %v3652, %v3654
        %v3656 = vrot.slane %v3628, %v3655
        %v3657 = vcombine.low %v3635, %v3642
        %v3658 = vcombine.low %v3649, %v3656
        %v3660 = vunpack.c.l.s4 1966171168
        %v3661 = vunpack.c.0.s8 %v3660
        %v3662 = vlaneseq
        %v3663 = vshrl.u32 %v3662, 7
        %v3664 = vsub.s32 %v3661, %v3663
        %v3665 = vrot.slane %v3657, %v3664
        %v3667 = vunpack.c.l.s4 1966171168
        %v3668 = vunpack.c.0.s8 %v3667
        %v3669 = vlaneseq
        %v3670 = vshrl.u32 %v3669, 7
        %v3671 = vsub.s32 %v3668, %v3670
        %v3672 = vrot.slane %v3658, %v3671
        %v3673 = vcombine.low %v3665, %v3672
        %v3674 = vcombine.low %v2228, %v2232
        %v3675 = vcombine.low %v2236, %v2240
        %v3676 = vcombine.low %v2244, %v2248
        %v3677 = vcombine.low %v2252, %v2256
        %v3679 = vunpack.c.l.s4 1966171168
        %v3680 = vunpack.c.0.s8 %v3679
        %v3681 = vlaneseq
        %v3682 = vshrl.u32 %v3681, 7
        %v3683 = vsub.s32 %v3680, %v3682
        %v3684 = vrot.slane %v3674, %v3683
        %v3686 = vunpack.c.l.s4 1966171168
        %v3687 = vunpack.c.0.s8 %v3686
        %v3688 = vlaneseq
        %v3689 = vshrl.u32 %v3688, 7
        %v3690 = vsub.s32 %v3687, %v3689
        %v3691 = vrot.slane %v3675, %v3690
        %v3693 = vunpack.c.l.s4 1966171168
        %v3694 = vunpack.c.0.s8 %v3693
        %v3695 = vlaneseq
        %v3696 = vshrl.u32 %v3695, 7
        %v3697 = vsub.s32 %v3694, %v3696
        %v3698 = vrot.slane %v3676, %v3697
        %v3700 = vunpack.c.l.s4 1966171168
        %v3701 = vunpack.c.0.s8 %v3700
        %v3702 = vlaneseq
        %v3703 = vshrl.u32 %v3702, 7
        %v3704 = vsub.s32 %v3701, %v3703
        %v3705 = vrot.slane %v3677, %v3704
        %v3706 = vcombine.low %v3684, %v3691
        %v3707 = vcombine.low %v3698, %v3705
        %v3709 = vunpack.c.l.s4 1966171168
        %v3710 = vunpack.c.0.s8 %v3709
        %v3711 = vlaneseq
        %v3712 = vshrl.u32 %v3711, 7
        %v3713 = vsub.s32 %v3710, %v3712
        %v3714 = vrot.slane %v3706, %v3713
        %v3716 = vunpack.c.l.s4 1966171168
        %v3717 = vunpack.c.0.s8 %v3716
        %v3718 = vlaneseq
        %v3719 = vshrl.u32 %v3718, 7
        %v3720 = vsub.s32 %v3717, %v3719
        %v3721 = vrot.slane %v3707, %v3720
        %v3722 = vcombine.low %v3714, %v3721
        %v3723 = vcombine.low %v2260, %v2264
        %v3724 = vcombine.low %v2268, %v2272
        %v3725 = vcombine.low %v2276, %v2280
        %v3726 = vcombine.low %v2284, %v2288
        %v3728 = vunpack.c.l.s4 1966171168
        %v3729 = vunpack.c.0.s8 %v3728
        %v3730 = vlaneseq
        %v3731 = vshrl.u32 %v3730, 7
        %v3732 = vsub.s32 %v3729, %v3731
        %v3733 = vrot.slane %v3723, %v3732
        %v3735 = vunpack.c.l.s4 1966171168
        %v3736 = vunpack.c.0.s8 %v3735
        %v3737 = vlaneseq
        %v3738 = vshrl.u32 %v3737, 7
        %v3739 = vsub.s32 %v3736, %v3738
        %v3740 = vrot.slane %v3724, %v3739
        %v3742 = vunpack.c.l.s4 1966171168
        %v3743 = vunpack.c.0.s8 %v3742
        %v3744 = vlaneseq
        %v3745 = vshrl.u32 %v3744, 7
        %v3746 = vsub.s32 %v3743, %v3745
        %v3747 = vrot.slane %v3725, %v3746
        %v3749 = vunpack.c.l.s4 1966171168
        %v3750 = vunpack.c.0.s8 %v3749
        %v3751 = vlaneseq
        %v3752 = vshrl.u32 %v3751, 7
        %v3753 = vsub.s32 %v3750, %v3752
        %v3754 = vrot.slane %v3726, %v3753
        %v3755 = vcombine.low %v3733, %v3740
        %v3756 = vcombine.low %v3747, %v3754
        %v3758 = vunpack.c.l.s4 1966171168
        %v3759 = vunpack.c.0.s8 %v3758
        %v3760 = vlaneseq
        %v3761 = vshrl.u32 %v3760, 7
        %v3762 = vsub.s32 %v3759, %v3761
        %v3763 = vrot.slane %v3755, %v3762
        %v3765 = vunpack.c.l.s4 1966171168
        %v3766 = vunpack.c.0.s8 %v3765
        %v3767 = vlaneseq
        %v3768 = vshrl.u32 %v3767, 7
        %v3769 = vsub.s32 %v3766, %v3768
        %v3770 = vrot.slane %v3756, %v3769
        %v3771 = vcombine.low %v3763, %v3770
        %v3772 = vcombine.low %v2292, %v2296
        %v3773 = vcombine.low %v2300, %v2304
        %v3774 = vcombine.low %v2308, %v2312
        %v3775 = vcombine.low %v2316, %v2320
        %v3777 = vunpack.c.l.s4 1966171168
        %v3778 = vunpack.c.0.s8 %v3777
        %v3779 = vlaneseq
        %v3780 = vshrl.u32 %v3779, 7
        %v3781 = vsub.s32 %v3778, %v3780
        %v3782 = vrot.slane %v3772, %v3781
        %v3784 = vunpack.c.l.s4 1966171168
        %v3785 = vunpack.c.0.s8 %v3784
        %v3786 = vlaneseq
        %v3787 = vshrl.u32 %v3786, 7
        %v3788 = vsub.s32 %v3785, %v3787
        %v3789 = vrot.slane %v3773, %v3788
        %v3791 = vunpack.c.l.s4 1966171168
        %v3792 = vunpack.c.0.s8 %v3791
        %v3793 = vlaneseq
        %v3794 = vshrl.u32 %v3793, 7
        %v3795 = vsub.s32 %v3792, %v3794
        %v3796 = vrot.slane %v3774, %v3795
        %v3798 = vunpack.c.l.s4 1966171168
        %v3799 = vunpack.c.0.s8 %v3798
        %v3800 = vlaneseq
        %v3801 = vshrl.u32 %v3800, 7
        %v3802 = vsub.s32 %v3799, %v3801
        %v3803 = vrot.slane %v3775, %v3802
        %v3804 = vcombine.low %v3782, %v3789
        %v3805 = vcombine.low %v3796, %v3803
        %v3807 = vunpack.c.l.s4 1966171168
        %v3808 = vunpack.c.0.s8 %v3807
        %v3809 = vlaneseq
        %v3810 = vshrl.u32 %v3809, 7
        %v3811 = vsub.s32 %v3808, %v3810
        %v3812 = vrot.slane %v3804, %v3811
        %v3814 = vunpack.c.l.s4 1966171168
        %v3815 = vunpack.c.0.s8 %v3814
        %v3816 = vlaneseq
        %v3817 = vshrl.u32 %v3816, 7
        %v3818 = vsub.s32 %v3815, %v3817
        %v3819 = vrot.slane %v3805, %v3818
        %v3820 = vcombine.low %v3812, %v3819
        %v3821 = vcombine.low %v2324, %v2328
        %v3822 = vcombine.low %v2332, %v2336
        %v3823 = vcombine.low %v2340, %v2344
        %v3824 = vcombine.low %v2348, %v2352
        %v3826 = vunpack.c.l.s4 1966171168
        %v3827 = vunpack.c.0.s8 %v3826
        %v3828 = vlaneseq
        %v3829 = vshrl.u32 %v3828, 7
        %v3830 = vsub.s32 %v3827, %v3829
        %v3831 = vrot.slane %v3821, %v3830
        %v3833 = vunpack.c.l.s4 1966171168
        %v3834 = vunpack.c.0.s8 %v3833
        %v3835 = vlaneseq
        %v3836 = vshrl.u32 %v3835, 7
        %v3837 = vsub.s32 %v3834, %v3836
        %v3838 = vrot.slane %v3822, %v3837
        %v3840 = vunpack.c.l.s4 1966171168
        %v3841 = vunpack.c.0.s8 %v3840
        %v3842 = vlaneseq
        %v3843 = vshrl.u32 %v3842, 7
        %v3844 = vsub.s32 %v3841, %v3843
        %v3845 = vrot.slane %v3823, %v3844
        %v3847 = vunpack.c.l.s4 1966171168
        %v3848 = vunpack.c.0.s8 %v3847
        %v3849 = vlaneseq
        %v3850 = vshrl.u32 %v3849, 7
        %v3851 = vsub.s32 %v3848, %v3850
        %v3852 = vrot.slane %v3824, %v3851
        %v3853 = vcombine.low %v3831, %v3838
        %v3854 = vcombine.low %v3845, %v3852
        %v3856 = vunpack.c.l.s4 1966171168
        %v3857 = vunpack.c.0.s8 %v3856
        %v3858 = vlaneseq
        %v3859 = vshrl.u32 %v3858, 7
        %v3860 = vsub.s32 %v3857, %v3859
        %v3861 = vrot.slane %v3853, %v3860
        %v3863 = vunpack.c.l.s4 1966171168
        %v3864 = vunpack.c.0.s8 %v3863
        %v3865 = vlaneseq
        %v3866 = vshrl.u32 %v3865, 7
        %v3867 = vsub.s32 %v3864, %v3866
        %v3868 = vrot.slane %v3854, %v3867
        %v3869 = vcombine.low %v3861, %v3868
        %v3870 = vcombine.low %v2356, %v2360
        %v3871 = vcombine.low %v2364, %v2368
        %v3872 = vcombine.low %v2372, %v2376
        %v3873 = vcombine.low %v2380, %v2384
        %v3875 = vunpack.c.l.s4 1966171168
        %v3876 = vunpack.c.0.s8 %v3875
        %v3877 = vlaneseq
        %v3878 = vshrl.u32 %v3877, 7
        %v3879 = vsub.s32 %v3876, %v3878
        %v3880 = vrot.slane %v3870, %v3879
        %v3882 = vunpack.c.l.s4 1966171168
        %v3883 = vunpack.c.0.s8 %v3882
        %v3884 = vlaneseq
        %v3885 = vshrl.u32 %v3884, 7
        %v3886 = vsub.s32 %v3883, %v3885
        %v3887 = vrot.slane %v3871, %v3886
        %v3889 = vunpack.c.l.s4 1966171168
        %v3890 = vunpack.c.0.s8 %v3889
        %v3891 = vlaneseq
        %v3892 = vshrl.u32 %v3891, 7
        %v3893 = vsub.s32 %v3890, %v3892
        %v3894 = vrot.slane %v3872, %v3893
        %v3896 = vunpack.c.l.s4 1966171168
        %v3897 = vunpack.c.0.s8 %v3896
        %v3898 = vlaneseq
        %v3899 = vshrl.u32 %v3898, 7
        %v3900 = vsub.s32 %v3897, %v3899
        %v3901 = vrot.slane %v3873, %v3900
        %v3902 = vcombine.low %v3880, %v3887
        %v3903 = vcombine.low %v3894, %v3901
        %v3905 = vunpack.c.l.s4 1966171168
        %v3906 = vunpack.c.0.s8 %v3905
        %v3907 = vlaneseq
        %v3908 = vshrl.u32 %v3907, 7
        %v3909 = vsub.s32 %v3906, %v3908
        %v3910 = vrot.slane %v3902, %v3909
        %v3912 = vunpack.c.l.s4 1966171168
        %v3913 = vunpack.c.0.s8 %v3912
        %v3914 = vlaneseq
        %v3915 = vshrl.u32 %v3914, 7
        %v3916 = vsub.s32 %v3913, %v3915
        %v3917 = vrot.slane %v3903, %v3916
        %v3918 = vcombine.low %v3910, %v3917
        %v3919 = vcombine.low %v2388, %v2392
        %v3920 = vcombine.low %v2396, %v2400
        %v3921 = vcombine.low %v2404, %v2408
        %v3922 = vcombine.low %v2412, %v2416
        %v3924 = vunpack.c.l.s4 1966171168
        %v3925 = vunpack.c.0.s8 %v3924
        %v3926 = vlaneseq
        %v3927 = vshrl.u32 %v3926, 7
        %v3928 = vsub.s32 %v3925, %v3927
        %v3929 = vrot.slane %v3919, %v3928
        %v3931 = vunpack.c.l.s4 1966171168
        %v3932 = vunpack.c.0.s8 %v3931
        %v3933 = vlaneseq
        %v3934 = vshrl.u32 %v3933, 7
        %v3935 = vsub.s32 %v3932, %v3934
        %v3936 = vrot.slane %v3920, %v3935
        %v3938 = vunpack.c.l.s4 1966171168
        %v3939 = vunpack.c.0.s8 %v3938
        %v3940 = vlaneseq
        %v3941 = vshrl.u32 %v3940, 7
        %v3942 = vsub.s32 %v3939, %v3941
        %v3943 = vrot.slane %v3921, %v3942
        %v3945 = vunpack.c.l.s4 1966171168
        %v3946 = vunpack.c.0.s8 %v3945
        %v3947 = vlaneseq
        %v3948 = vshrl.u32 %v3947, 7
        %v3949 = vsub.s32 %v3946, %v3948
        %v3950 = vrot.slane %v3922, %v3949
        %v3951 = vcombine.low %v3929, %v3936
        %v3952 = vcombine.low %v3943, %v3950
        %v3954 = vunpack.c.l.s4 1966171168
        %v3955 = vunpack.c.0.s8 %v3954
        %v3956 = vlaneseq
        %v3957 = vshrl.u32 %v3956, 7
        %v3958 = vsub.s32 %v3955, %v3957
        %v3959 = vrot.slane %v3951, %v3958
        %v3961 = vunpack.c.l.s4 1966171168
        %v3962 = vunpack.c.0.s8 %v3961
        %v3963 = vlaneseq
        %v3964 = vshrl.u32 %v3963, 7
        %v3965 = vsub.s32 %v3962, %v3964
        %v3966 = vrot.slane %v3952, %v3965
        %v3967 = vcombine.low %v3959, %v3966
        %v3968 = vcombine.low %v2420, %v2424
        %v3969 = vcombine.low %v2428, %v2432
        %v3970 = vcombine.low %v2436, %v2440
        %v3971 = vcombine.low %v2444, %v2448
        %v3973 = vunpack.c.l.s4 1966171168
        %v3974 = vunpack.c.0.s8 %v3973
        %v3975 = vlaneseq
        %v3976 = vshrl.u32 %v3975, 7
        %v3977 = vsub.s32 %v3974, %v3976
        %v3978 = vrot.slane %v3968, %v3977
        %v3980 = vunpack.c.l.s4 1966171168
        %v3981 = vunpack.c.0.s8 %v3980
        %v3982 = vlaneseq
        %v3983 = vshrl.u32 %v3982, 7
        %v3984 = vsub.s32 %v3981, %v3983
        %v3985 = vrot.slane %v3969, %v3984
        %v3987 = vunpack.c.l.s4 1966171168
        %v3988 = vunpack.c.0.s8 %v3987
        %v3989 = vlaneseq
        %v3990 = vshrl.u32 %v3989, 7
        %v3991 = vsub.s32 %v3988, %v3990
        %v3992 = vrot.slane %v3970, %v3991
        %v3994 = vunpack.c.l.s4 1966171168
        %v3995 = vunpack.c.0.s8 %v3994
        %v3996 = vlaneseq
        %v3997 = vshrl.u32 %v3996, 7
        %v3998 = vsub.s32 %v3995, %v3997
        %v3999 = vrot.slane %v3971, %v3998
        %v4000 = vcombine.low %v3978, %v3985
        %v4001 = vcombine.low %v3992, %v3999
        %v4003 = vunpack.c.l.s4 1966171168
        %v4004 = vunpack.c.0.s8 %v4003
        %v4005 = vlaneseq
        %v4006 = vshrl.u32 %v4005, 7
        %v4007 = vsub.s32 %v4004, %v4006
        %v4008 = vrot.slane %v4000, %v4007
        %v4010 = vunpack.c.l.s4 1966171168
        %v4011 = vunpack.c.0.s8 %v4010
        %v4012 = vlaneseq
        %v4013 = vshrl.u32 %v4012, 7
        %v4014 = vsub.s32 %v4011, %v4013
        %v4015 = vrot.slane %v4001, %v4014
        %v4016 = vcombine.low %v4008, %v4015
        %4017 = vset.pattern.permute.xlu0 0
        %4018 = vperm.xlu0 %4017, %v2497
        %v4019 = vpop.permute.xlu0 %4018
        %4020 = vset.pattern.permute.xlu0 0
        %4021 = vperm.xlu0 %4020, %v2546
        %v4022 = vpop.permute.xlu0 %4021
        %4023 = vset.pattern.permute.xlu0 0
        %4024 = vperm.xlu0 %4023, %v2595
        %v4025 = vpop.permute.xlu0 %4024
        %4026 = vset.pattern.permute.xlu0 0
        %4027 = vperm.xlu0 %4026, %v2644
        %v4028 = vpop.permute.xlu0 %4027
        %4029 = vset.pattern.permute.xlu0 0
        %4030 = vperm.xlu0 %4029, %v2693
        %v4031 = vpop.permute.xlu0 %4030
        %4032 = vset.pattern.permute.xlu0 0
        %4033 = vperm.xlu0 %4032, %v2742
        %v4034 = vpop.permute.xlu0 %4033
        %4035 = vset.pattern.permute.xlu0 0
        %4036 = vperm.xlu0 %4035, %v2791
        %v4037 = vpop.permute.xlu0 %4036
        %4038 = vset.pattern.permute.xlu0 0
        %4039 = vperm.xlu0 %4038, %v2840
        %v4040 = vpop.permute.xlu0 %4039
        %4041 = vset.pattern.permute.xlu0 0
        %4042 = vperm.xlu0 %4041, %v2889
        %v4043 = vpop.permute.xlu0 %4042
        %4044 = vset.pattern.permute.xlu0 0
        %4045 = vperm.xlu0 %4044, %v2938
        %v4046 = vpop.permute.xlu0 %4045
        %4047 = vset.pattern.permute.xlu0 0
        %4048 = vperm.xlu0 %4047, %v2987
        %v4049 = vpop.permute.xlu0 %4048
        %4050 = vset.pattern.permute.xlu0 0
        %4051 = vperm.xlu0 %4050, %v3036
        %v4052 = vpop.permute.xlu0 %4051
        %4053 = vset.pattern.permute.xlu0 0
        %4054 = vperm.xlu0 %4053, %v3085
        %v4055 = vpop.permute.xlu0 %4054
        %4056 = vset.pattern.permute.xlu0 0
        %4057 = vperm.xlu0 %4056, %v3134
        %v4058 = vpop.permute.xlu0 %4057
        %4059 = vset.pattern.permute.xlu0 0
        %4060 = vperm.xlu0 %4059, %v3183
        %v4061 = vpop.permute.xlu0 %4060
        %4062 = vset.pattern.permute.xlu0 0
        %4063 = vperm.xlu0 %4062, %v3232
        %v4064 = vpop.permute.xlu0 %4063
        %4065 = vset.pattern.permute.xlu0 0
        %4066 = vperm.xlu0 %4065, %v3281
        %v4067 = vpop.permute.xlu0 %4066
        %4068 = vset.pattern.permute.xlu0 0
        %4069 = vperm.xlu0 %4068, %v3330
        %v4070 = vpop.permute.xlu0 %4069
        %4071 = vset.pattern.permute.xlu0 0
        %4072 = vperm.xlu0 %4071, %v3379
        %v4073 = vpop.permute.xlu0 %4072
        %4074 = vset.pattern.permute.xlu0 0
        %4075 = vperm.xlu0 %4074, %v3428
        %v4076 = vpop.permute.xlu0 %4075
        %4077 = vset.pattern.permute.xlu0 0
        %4078 = vperm.xlu0 %4077, %v3477
        %v4079 = vpop.permute.xlu0 %4078
        %4080 = vset.pattern.permute.xlu0 0
        %4081 = vperm.xlu0 %4080, %v3526
        %v4082 = vpop.permute.xlu0 %4081
        %4083 = vset.pattern.permute.xlu0 0
        %4084 = vperm.xlu0 %4083, %v3575
        %v4085 = vpop.permute.xlu0 %4084
        %4086 = vset.pattern.permute.xlu0 0
        %4087 = vperm.xlu0 %4086, %v3624
        %v4088 = vpop.permute.xlu0 %4087
        %4089 = vset.pattern.permute.xlu0 0
        %4090 = vperm.xlu0 %4089, %v3673
        %v4091 = vpop.permute.xlu0 %4090
        %4092 = vset.pattern.permute.xlu0 0
        %4093 = vperm.xlu0 %4092, %v3722
        %v4094 = vpop.permute.xlu0 %4093
        %4095 = vset.pattern.permute.xlu0 0
        %4096 = vperm.xlu0 %4095, %v3771
        %v4097 = vpop.permute.xlu0 %4096
        %4098 = vset.pattern.permute.xlu0 0
        %4099 = vperm.xlu0 %4098, %v3820
        %v4100 = vpop.permute.xlu0 %4099
        %4101 = vset.pattern.permute.xlu0 0
        %4102 = vperm.xlu0 %4101, %v3869
        %v4103 = vpop.permute.xlu0 %4102
        %4104 = vset.pattern.permute.xlu0 0
        %4105 = vperm.xlu0 %4104, %v3918
        %v4106 = vpop.permute.xlu0 %4105
        %4107 = vset.pattern.permute.xlu0 0
        %4108 = vperm.xlu0 %4107, %v3967
        %v4109 = vpop.permute.xlu0 %4108
        %4110 = vset.pattern.permute.xlu0 0
        %4111 = vperm.xlu0 %4110, %v4016
        %v4112 = vpop.permute.xlu0 %4111
        %v4113 = vlaneseq
        %v4114 = vand.u32 %v4113, 127
        %v4115 = vlaneseq
        %v4116 = vshrl.u32 %v4115, 7
        %v4117 = vsub.s32 %v4114, %v4116
        %v4118 = vrot.slane %v4019, %v4117
        %v4119 = vadd.s32 %v4114, 4294967288
        %v4120 = vlaneseq
        %v4121 = vshrl.u32 %v4120, 7
        %v4122 = vsub.s32 %v4119, %v4121
        %v4123 = vrot.slane %v4022, %v4122
        %vm4124 = vcmask 130112
        %v4125 = vsel %vm4124, %v4123, %v4118
        %v4126 = vadd.s32 %v4114, 4294967280
        %v4127 = vlaneseq
        %v4128 = vshrl.u32 %v4127, 7
        %v4129 = vsub.s32 %v4126, %v4128
        %v4130 = vrot.slane %v4025, %v4129
        %vm4131 = vcmask 195712
        %v4132 = vsel %vm4131, %v4130, %v4125
        %v4133 = vadd.s32 %v4114, 4294967272
        %v4134 = vlaneseq
        %v4135 = vshrl.u32 %v4134, 7
        %v4136 = vsub.s32 %v4133, %v4135
        %v4137 = vrot.slane %v4028, %v4136
        %vm4138 = vcmask 261312
        %v4139 = vsel %vm4138, %v4137, %v4132
        %v4140 = vadd.s32 %v4114, 4294967264
        %v4141 = vlaneseq
        %v4142 = vshrl.u32 %v4141, 7
        %v4143 = vsub.s32 %v4140, %v4142
        %v4144 = vrot.slane %v4031, %v4143
        %vm4145 = vcmask 326912
        %v4146 = vsel %vm4145, %v4144, %v4139
        %v4147 = vadd.s32 %v4114, 4294967256
        %v4148 = vlaneseq
        %v4149 = vshrl.u32 %v4148, 7
        %v4150 = vsub.s32 %v4147, %v4149
        %v4151 = vrot.slane %v4034, %v4150
        %vm4152 = vcmask 392512
        %v4153 = vsel %vm4152, %v4151, %v4146
        %v4154 = vadd.s32 %v4114, 4294967248
        %v4155 = vlaneseq
        %v4156 = vshrl.u32 %v4155, 7
        %v4157 = vsub.s32 %v4154, %v4156
        %v4158 = vrot.slane %v4037, %v4157
        %vm4159 = vcmask 458112
        %v4160 = vsel %vm4159, %v4158, %v4153
        %v4161 = vadd.s32 %v4114, 4294967240
        %v4162 = vlaneseq
        %v4163 = vshrl.u32 %v4162, 7
        %v4164 = vsub.s32 %v4161, %v4163
        %v4165 = vrot.slane %v4040, %v4164
        %vm4166 = vcmask 523712
        %v4167 = vsel %vm4166, %v4165, %v4160
        %v4168 = vadd.s32 %v4114, 4294967232
        %v4169 = vlaneseq
        %v4170 = vshrl.u32 %v4169, 7
        %v4171 = vsub.s32 %v4168, %v4170
        %v4172 = vrot.slane %v4043, %v4171
        %vm4173 = vcmask 589312
        %v4174 = vsel %vm4173, %v4172, %v4167
        %v4175 = vadd.s32 %v4114, 4294967224
        %v4176 = vlaneseq
        %v4177 = vshrl.u32 %v4176, 7
        %v4178 = vsub.s32 %v4175, %v4177
        %v4179 = vrot.slane %v4046, %v4178
        %vm4180 = vcmask 654912
        %v4181 = vsel %vm4180, %v4179, %v4174
        %v4182 = vadd.s32 %v4114, 4294967216
        %v4183 = vlaneseq
        %v4184 = vshrl.u32 %v4183, 7
        %v4185 = vsub.s32 %v4182, %v4184
        %v4186 = vrot.slane %v4049, %v4185
        %vm4187 = vcmask 720512
        %v4188 = vsel %vm4187, %v4186, %v4181
        %v4189 = vadd.s32 %v4114, 4294967208
        %v4190 = vlaneseq
        %v4191 = vshrl.u32 %v4190, 7
        %v4192 = vsub.s32 %v4189, %v4191
        %v4193 = vrot.slane %v4052, %v4192
        %vm4194 = vcmask 786112
        %v4195 = vsel %vm4194, %v4193, %v4188
        %v4196 = vadd.s32 %v4114, 4294967200
        %v4197 = vlaneseq
        %v4198 = vshrl.u32 %v4197, 7
        %v4199 = vsub.s32 %v4196, %v4198
        %v4200 = vrot.slane %v4055, %v4199
        %vm4201 = vcmask 851712
        %v4202 = vsel %vm4201, %v4200, %v4195
        %v4203 = vadd.s32 %v4114, 4294967192
        %v4204 = vlaneseq
        %v4205 = vshrl.u32 %v4204, 7
        %v4206 = vsub.s32 %v4203, %v4205
        %v4207 = vrot.slane %v4058, %v4206
        %vm4208 = vcmask 917312
        %v4209 = vsel %vm4208, %v4207, %v4202
        %v4210 = vadd.s32 %v4114, 4294967184
        %v4211 = vlaneseq
        %v4212 = vshrl.u32 %v4211, 7
        %v4213 = vsub.s32 %v4210, %v4212
        %v4214 = vrot.slane %v4061, %v4213
        %vm4215 = vcmask 982912
        %v4216 = vsel %vm4215, %v4214, %v4209
        %v4217 = vadd.s32 %v4114, 4294967176
        %v4218 = vlaneseq
        %v4219 = vshrl.u32 %v4218, 7
        %v4220 = vsub.s32 %v4217, %v4219
        %v4221 = vrot.slane %v4064, %v4220
        %vm4222 = vcmask 1048512
        %v4223 = vsel %vm4222, %v4221, %v4216
        %v4224 = vlaneseq
        %v4225 = vshrl.u32 %v4224, 7
        %v4226 = vsub.s32 %v4114, %v4225
        %v4227 = vrot.slane %v4067, %v4226
        %v4228 = vlaneseq
        %v4229 = vshrl.u32 %v4228, 7
        %v4230 = vsub.s32 %v4119, %v4229
        %v4231 = vrot.slane %v4070, %v4230
        %v4232 = vsel %vm4124, %v4231, %v4227
        %v4233 = vlaneseq
        %v4234 = vshrl.u32 %v4233, 7
        %v4235 = vsub.s32 %v4126, %v4234
        %v4236 = vrot.slane %v4073, %v4235
        %v4237 = vsel %vm4131, %v4236, %v4232
        %v4238 = vlaneseq
        %v4239 = vshrl.u32 %v4238, 7
        %v4240 = vsub.s32 %v4133, %v4239
        %v4241 = vrot.slane %v4076, %v4240
        %v4242 = vsel %vm4138, %v4241, %v4237
        %v4243 = vlaneseq
        %v4244 = vshrl.u32 %v4243, 7
        %v4245 = vsub.s32 %v4140, %v4244
        %v4246 = vrot.slane %v4079, %v4245
        %v4247 = vsel %vm4145, %v4246, %v4242
        %v4248 = vlaneseq
        %v4249 = vshrl.u32 %v4248, 7
        %v4250 = vsub.s32 %v4147, %v4249
        %v4251 = vrot.slane %v4082, %v4250
        %v4252 = vsel %vm4152, %v4251, %v4247
        %v4253 = vlaneseq
        %v4254 = vshrl.u32 %v4253, 7
        %v4255 = vsub.s32 %v4154, %v4254
        %v4256 = vrot.slane %v4085, %v4255
        %v4257 = vsel %vm4159, %v4256, %v4252
        %v4258 = vlaneseq
        %v4259 = vshrl.u32 %v4258, 7
        %v4260 = vsub.s32 %v4161, %v4259
        %v4261 = vrot.slane %v4088, %v4260
        %v4262 = vsel %vm4166, %v4261, %v4257
        %v4263 = vlaneseq
        %v4264 = vshrl.u32 %v4263, 7
        %v4265 = vsub.s32 %v4168, %v4264
        %v4266 = vrot.slane %v4091, %v4265
        %v4267 = vsel %vm4173, %v4266, %v4262
        %v4268 = vlaneseq
        %v4269 = vshrl.u32 %v4268, 7
        %v4270 = vsub.s32 %v4175, %v4269
        %v4271 = vrot.slane %v4094, %v4270
        %v4272 = vsel %vm4180, %v4271, %v4267
        %v4273 = vlaneseq
        %v4274 = vshrl.u32 %v4273, 7
        %v4275 = vsub.s32 %v4182, %v4274
        %v4276 = vrot.slane %v4097, %v4275
        %v4277 = vsel %vm4187, %v4276, %v4272
        %v4278 = vlaneseq
        %v4279 = vshrl.u32 %v4278, 7
        %v4280 = vsub.s32 %v4189, %v4279
        %v4281 = vrot.slane %v4100, %v4280
        %v4282 = vsel %vm4194, %v4281, %v4277
        %v4283 = vlaneseq
        %v4284 = vshrl.u32 %v4283, 7
        %v4285 = vsub.s32 %v4196, %v4284
        %v4286 = vrot.slane %v4103, %v4285
        %v4287 = vsel %vm4201, %v4286, %v4282
        %v4288 = vlaneseq
        %v4289 = vshrl.u32 %v4288, 7
        %v4290 = vsub.s32 %v4203, %v4289
        %v4291 = vrot.slane %v4106, %v4290
        %v4292 = vsel %vm4208, %v4291, %v4287
        %v4293 = vlaneseq
        %v4294 = vshrl.u32 %v4293, 7
        %v4295 = vsub.s32 %v4210, %v4294
        %v4296 = vrot.slane %v4109, %v4295
        %v4297 = vsel %vm4215, %v4296, %v4292
        %v4298 = vlaneseq
        %v4299 = vshrl.u32 %v4298, 7
        %v4300 = vsub.s32 %v4217, %v4299
        %v4301 = vrot.slane %v4112, %v4300
        %v4302 = vsel %vm4222, %v4301, %v4297
        %v4303 = vcombine.low %v4223, %v4302
        %v4305 = vunpack.c.l.s4 1966171168
        %v4306 = vunpack.c.0.s8 %v4305
        %v4307 = vlaneseq
        %v4308 = vshrl.u32 %v4307, 7
        %v4309 = vsub.s32 %v4306, %v4308
        %v4310 = vrot.slane %v4303, %v4309
        %v4312 = vunpack.c.l.s4 1966171168
        %v4313 = vunpack.c.0.s8 %v4312
        %v4314 = vlaneseq
        %v4315 = vshrl.u32 %v4314, 7
        %v4316 = vsub.s32 %v4313, %v4315
        %v4317 = vrot.slane %v4310, %v4316
        %v4319 = vlaneseq
        %vm4320 = vcmp.ge.s32.totalorder %v4319, 0
        %vm4321 = vcmp.lt.s32.totalorder %v4319, 256
        %vm4322 = vmand %vm4320, %vm4321
        %4323 = vst.msk [vmem:[%s300] sm:$0x3] %vm4322, %v4317
        %s4324 = sand.u32 %s183, 1
        %s4325 = scalar_lea.sflag [#allocation5], %s4324
        %s4326 = sand.u32 %s183, 1
        %s4327 = smul.addr %s4326, 2
        %s4328 = scalar_lea.vmem [#allocation6], %s4327
        // Predicated region
        $region53: #{critic_forward.1} parent=47 // pred_check
          %p4329 = pneg %p193
        $region54: #{critic_forward.1} parent=47 // pred_check_branch
          %4331 = sbr.rel (%p4329) target = $region56
        $region55: #{critic_forward.1} parent=47 // pred_region
          %s4332 = smul.u32 2, %s23
          %s4333 = ssub.s32 3, %s4332
          %p4334 = scmp.lt.s32.totalorder %s4333, 2
          %s4335 = scalar_select %p4334, %s4333, 2
          %s4336 = smul.u32 16, %s4335
          %s4338 = ssub.s32 32, %s4336
          %4339 = vsyncadd %s4325, %s4338
          %p4340 = scmp.ne.s32.totalorder 0, %s4336
          %s4341 = smul.addr %s4332, 16
          %s4342 = scalar_lea.hbm %s7, %s4341
          %s4343 = sshll.u32 %s4335, 4
          %s4344 = sshll.u32 %s4328, 4
          %s4345 = int_to_ptr.vmem [resolvable:$true] %s4344
          %4347 = dma.vmem_to_hbm [thread:$0]  (%p4340), %s4345, %s4343, %s4342, %s4325
        $region56: #{critic_forward.1} parent=47 // pred_fallthru
          _
      $region48: #{critic_forward.1} parent=5 // pred_fallthru
        _
      %p4348 = scmp.le.s32.totalorder 2, %s18
      // Predicated region
      $region57: #{critic_forward.1} parent=5 // pred_check
        %p4349 = pneg %p4348
      $region58: #{critic_forward.1} parent=5 // pred_check_branch
        %4351 = sbr.rel (%p4349) target = $region60
      $region59: #{critic_forward.1} parent=5 // pred_region
        %s4352 = ssub.s32 %s18, 2
        // Predicated region
        $region61: #{critic_forward.1} parent=59 // pred_check
          %p4353 = pneg %p199
        $region62: #{critic_forward.1} parent=59 // pred_check_branch
          %4355 = sbr.rel (%p4353) target = $region64
        $region63: #{critic_forward.1} parent=59 // pred_region
          %s4356 = sand.u32 %s184, 1
          %s4357 = scalar_lea.sflag [#allocation5], %s4356
          %s4358 = sand.u32 %s184, 1
          %s4359 = smul.addr %s4358, 2
          %s4360 = scalar_lea.vmem [#allocation6], %s4359
          %4361 = dma.done %s4357, 32
        $region64: #{critic_forward.1} parent=59 // pred_fallthru
          _
      $region60: #{critic_forward.1} parent=5 // pred_fallthru
        _
    $region6: #{critic_forward.1} parent=1 // loop_footer
      %s22 = sadd.s32 1, %s18
    $region7: #{critic_forward.1} parent=1 // loop_footer_branch
      %17 = sbr.rel target = $region3
    $region8: #{critic_forward.1} parent=1 // loop_exit
      _
    %4362 = vsyncpa [#allocation4], 1
    %s4363 = scalar_lea.sflag [#allocation4], 1
    %4364 = vsyncpa %s4363, 1
    %4365 = vsyncpa [#allocation5], 1
    %s4366 = scalar_lea.sflag [#allocation5], 1
    %4367 = vsyncpa %s4366, 1

</llo_original>
